<compile_context>
chip_gen: v5e
topology: v5e:2x2
jax: 0.10.0
libtpu: 0.0.40
codegen_flags: <defaults>
</compile_context>

<pallas_src>
import functools

import jax
import jax.numpy as jnp
from jax import lax
from jax.experimental import pallas as pl
from jax.experimental.pallas import tpu as pltpu

EPS = 1e-5                              # nn.BatchNorm2d default eps
VMEM_LIMIT_BYTES = 48 * 1024 * 1024     # below v7x's 64 MiB physical VMEM


# ---------------------------------------------------------------------------
# Small helpers
# ---------------------------------------------------------------------------
def _cparams():
    return pltpu.CompilerParams(
        dimension_semantics=("parallel",),
        vmem_limit_bytes=VMEM_LIMIT_BYTES)


def _cost(flops, bytes_accessed):
    return pl.CostEstimate(flops=int(flops), transcendentals=0,
                           bytes_accessed=int(bytes_accessed))


def _pick_tile_m(m, max_tile=1024):
    """Largest multiple-of-8 divisor of m that is <= min(max_tile, m//2)."""
    t = min(max_tile, max(8, m // 2))
    t -= t % 8
    while t >= 8:
        if m % t == 0:
            return t
        t -= 8
    return m


def _sum_sumsq(y):
    """(2, C) partial BN statistics of an (M_tile, C) f32 slab."""
    return jnp.concatenate([jnp.sum(y, axis=0, keepdims=True),
                            jnp.sum(y * y, axis=0, keepdims=True)], axis=0)


def _finalize_bn(partials, gamma, beta, count):
    """Reduce per-tile (sum, sumsq) partials -> per-channel scale/shift."""
    s = jnp.sum(partials.astype(jnp.float32), axis=0)        # (2, C)
    mean = s[0] / count
    var = s[1] / count - mean * mean                          # biased (PyTorch)
    inv = lax.rsqrt(var + EPS)
    scale = gamma.reshape(-1) * inv
    shift = beta.reshape(-1) - mean * scale
    return scale.reshape(1, -1), shift.reshape(1, -1)


# ---------------------------------------------------------------------------
# Kernels
# ---------------------------------------------------------------------------
def _conv1_proj_kernel(x_ref, w1_ref, wsc_ref,
                       h1_ref, st1_ref, sc_ref, stsc_ref, *, cdt):
    """1x1 conv1 + fused 1x1 projection shortcut, per M-tile, + BN partials."""
    x = x_ref[...].astype(cdt)
    h1 = jnp.dot(x, w1_ref[...].astype(cdt), preferred_element_type=jnp.float32)
    h1_ref[...] = h1.astype(h1_ref.dtype)
    st1_ref[0] = _sum_sumsq(h1)
    sc = jnp.dot(x, wsc_ref[...].astype(cdt), preferred_element_type=jnp.float32)
    sc_ref[...] = sc.astype(sc_ref.dtype)
    stsc_ref[0] = _sum_sumsq(sc)


def _conv1_kernel(x_ref, w1_ref, h1_ref, st1_ref, *, cdt):
    """1x1 conv1 per M-tile + BN partials (identity-shortcut variant)."""
    x = x_ref[...].astype(cdt)
    h1 = jnp.dot(x, w1_ref[...].astype(cdt), preferred_element_type=jnp.float32)
    h1_ref[...] = h1.astype(h1_ref.dtype)
    st1_ref[0] = _sum_sumsq(h1)


def _conv3x3_kernel(h1_ref, s1_ref, b1_ref, w2_ref, h2_ref, st2_ref, *, cdt):
    """Per-image: BN1-apply + ReLU + 3x3 conv (in-kernel pad, kw-im2col)."""
    _, H, W, Cin = h1_ref.shape
    Cout = w2_ref.shape[-1]
    # Fused BN1-apply + ReLU on the conv2 input (no separate HBM pass).
    a = jnp.maximum(h1_ref[0].astype(jnp.float32) * s1_ref[...] + b1_ref[...], 0.0)
    a = a.astype(cdt)
    # Zero-pad along H in VMEM (leading-axis concat, cheap) -- no jnp.pad in XLA.
    zrow = jnp.zeros((1, W, Cin), cdt)
    ah = jnp.concatenate([zrow, a, zrow], axis=0)             # (H+2, W, Cin)
    # kw taps via XLU rolls + border masks (no W padding materialized).
    widx = lax.broadcasted_iota(jnp.int32, (H + 2, W, Cin), 1)
    zero = jnp.zeros_like(ah)
    a_m1 = jnp.where(widx >= 1, pltpu.roll(ah, 1, axis=1), zero)        # a[.., w-1]
    a_p1 = jnp.where(widx <= W - 2, pltpu.roll(ah, W - 1, axis=1), zero)  # a[.., w+1]
    # kw-im2col: K = 3*Cin -> 3 deep MXU matmuls instead of 9 shallow ones.
    col = jnp.concatenate([a_m1, ah, a_p1], axis=-1)          # (H+2, W, 3*Cin)
    acc = jnp.zeros((H * W, Cout), jnp.float32)
    for kh in range(3):
        acc = acc + jnp.dot(col[kh:kh + H].reshape(H * W, 3 * Cin),
                            w2_ref[kh].astype(cdt),
                            preferred_element_type=jnp.float32)
    h2_ref[0] = acc.reshape(H, W, Cout).astype(h2_ref.dtype)
    st2_ref[0] = _sum_sumsq(acc)


def _conv3_stats_kernel(h2_ref, s2_ref, b2_ref, w3_ref, st3_ref, *, cdt):
    """BN3 statistics of conv3 output (h3 is never written to HBM)."""
    a2 = jnp.maximum(h2_ref[...].astype(jnp.float32) * s2_ref[...] + b2_ref[...], 0.0)
    h3 = jnp.dot(a2.astype(cdt), w3_ref[...].astype(cdt),
                 preferred_element_type=jnp.float32)
    st3_ref[0] = _sum_sumsq(h3)


def _conv3_final_kernel(h2_ref, s2_ref, b2_ref, w3e_ref, b3e_ref,
                        res_ref, ssc_ref, bsc_ref, o_ref, *, cdt):
    """BN2-apply+ReLU + conv3 (bn3 folded into w3) + shortcut BN + add + ReLU."""
    a2 = jnp.maximum(h2_ref[...].astype(jnp.float32) * s2_ref[...] + b2_ref[...], 0.0)
    h3 = jnp.dot(a2.astype(cdt), w3e_ref[...].astype(cdt),
                 preferred_element_type=jnp.float32) + b3e_ref[...]
    res = res_ref[...].astype(jnp.float32) * ssc_ref[...] + bsc_ref[...]
    o_ref[...] = jnp.maximum(h3 + res, 0.0).astype(o_ref.dtype)


# ---------------------------------------------------------------------------
# pallas_call wrappers
# ---------------------------------------------------------------------------
def _call_conv1(x2d, w1, wsc, tile_m, cdt, store_dt):
    M, Cin = x2d.shape
    P = w1.shape[1]
    nM = M // tile_m
    sb = jnp.dtype(store_dt).itemsize
    x_spec = pl.BlockSpec((tile_m, Cin), lambda i: (i, 0))
    w1_spec = pl.BlockSpec((Cin, P), lambda i: (0, 0))
    h1_spec = pl.BlockSpec((tile_m, P), lambda i: (i, 0))
    st1_spec = pl.BlockSpec((1, 2, P), lambda i: (i, 0, 0))
    if wsc is None:
        return pl.pallas_call(
            functools.partial(_conv1_kernel, cdt=cdt),
            grid=(nM,),
            in_specs=[x_spec, w1_spec],
            out_specs=(h1_spec, st1_spec),
            out_shape=(jax.ShapeDtypeStruct((M, P), store_dt),
                       jax.ShapeDtypeStruct((nM, 2, P), jnp.float32)),
            compiler_params=_cparams(),
            cost_estimate=_cost(2 * M * Cin * P,
                                4 * M * Cin + 4 * Cin * P + sb * M * P),
        )(x2d, w1)
    C3 = wsc.shape[1]
    wsc_spec = pl.BlockSpec((Cin, C3), lambda i: (0, 0))
    sc_spec = pl.BlockSpec((tile_m, C3), lambda i: (i, 0))
    stsc_spec = pl.BlockSpec((1, 2, C3), lambda i: (i, 0, 0))
    return pl.pallas_call(
        functools.partial(_conv1_proj_kernel, cdt=cdt),
        grid=(nM,),
        in_specs=[x_spec, w1_spec, wsc_spec],
        out_specs=(h1_spec, st1_spec, sc_spec, stsc_spec),
        out_shape=(jax.ShapeDtypeStruct((M, P), store_dt),
                   jax.ShapeDtypeStruct((nM, 2, P), jnp.float32),
                   jax.ShapeDtypeStruct((M, C3), store_dt),
                   jax.ShapeDtypeStruct((nM, 2, C3), jnp.float32)),
        compiler_params=_cparams(),
        cost_estimate=_cost(2 * M * Cin * (P + C3),
                            4 * M * Cin + 4 * Cin * (P + C3) + sb * M * (P + C3)),
    )(x2d, w1, wsc)


def _call_conv2(h1_nhwc, s1, b1, w2col, cdt, store_dt):
    N, H, W, Cin = h1_nhwc.shape
    Cout = w2col.shape[-1]
    sb = jnp.dtype(store_dt).itemsize
    M = N * H * W
    return pl.pallas_call(
        functools.partial(_conv3x3_kernel, cdt=cdt),
        grid=(N,),
        in_specs=[pl.BlockSpec((1, H, W, Cin), lambda n: (n, 0, 0, 0)),
                  pl.BlockSpec((1, Cin), lambda n: (0, 0)),
                  pl.BlockSpec((1, Cin), lambda n: (0, 0)),
                  pl.BlockSpec((3, 3 * Cin, Cout), lambda n: (0, 0, 0))],
        out_specs=(pl.BlockSpec((1, H, W, Cout), lambda n: (n, 0, 0, 0)),
                   pl.BlockSpec((1, 2, Cout), lambda n: (n, 0, 0))),
        out_shape=(jax.ShapeDtypeStruct((N, H, W, Cout), store_dt),
                   jax.ShapeDtypeStruct((N, 2, Cout), jnp.float32)),
        compiler_params=_cparams(),
        cost_estimate=_cost(2 * M * 9 * Cin * Cout,
                            sb * M * (Cin + Cout) + 36 * Cin * Cout),
    )(h1_nhwc, s1, b1, w2col)


def _call_conv3_stats(h2_2d, s2, b2, w3, tile_m, cdt):
    M, P = h2_2d.shape
    C3 = w3.shape[1]
    nM = M // tile_m
    hb = jnp.dtype(h2_2d.dtype).itemsize
    return pl.pallas_call(
        functools.partial(_conv3_stats_kernel, cdt=cdt),
        grid=(nM,),
        in_specs=[pl.BlockSpec((tile_m, P), lambda i: (i, 0)),
                  pl.BlockSpec((1, P), lambda i: (0, 0)),
                  pl.BlockSpec((1, P), lambda i: (0, 0)),
                  pl.BlockSpec((P, C3), lambda i: (0, 0))],
        out_specs=pl.BlockSpec((1, 2, C3), lambda i: (i, 0, 0)),
        out_shape=jax.ShapeDtypeStruct((nM, 2, C3), jnp.float32),
        compiler_params=_cparams(),
        cost_estimate=_cost(2 * M * P * C3, hb * M * P + 4 * P * C3),
    )(h2_2d, s2, b2, w3)


def _call_conv3_final(h2_2d, s2, b2, w3_eff, b3_eff, res2d, ssc, bsc,
                      tile_m, out_dt, cdt):
    M, P = h2_2d.shape
    C3 = w3_eff.shape[1]
    nM = M // tile_m
    hb = jnp.dtype(h2_2d.dtype).itemsize
    rb = jnp.dtype(res2d.dtype).itemsize
    return pl.pallas_call(
        functools.partial(_conv3_final_kernel, cdt=cdt),
        grid=(nM,),
        in_specs=[pl.BlockSpec((tile_m, P), lambda i: (i, 0)),
                  pl.BlockSpec((1, P), lambda i: (0, 0)),
                  pl.BlockSpec((1, P), lambda i: (0, 0)),
                  pl.BlockSpec((P, C3), lambda i: (0, 0)),
                  pl.BlockSpec((1, C3), lambda i: (0, 0)),
                  pl.BlockSpec((tile_m, C3), lambda i: (i, 0)),
                  pl.BlockSpec((1, C3), lambda i: (0, 0)),
                  pl.BlockSpec((1, C3), lambda i: (0, 0))],
        out_specs=pl.BlockSpec((tile_m, C3), lambda i: (i, 0)),
        out_shape=jax.ShapeDtypeStruct((M, C3), out_dt),
        compiler_params=_cparams(),
        cost_estimate=_cost(2 * M * P * C3,
                            hb * M * P + rb * M * C3 + 4 * M * C3 + 4 * P * C3),
    )(h2_2d, s2, b2, w3_eff, b3_eff, res2d, ssc, bsc)


# ---------------------------------------------------------------------------
# Bottleneck forward
# ---------------------------------------------------------------------------
def bottleneck_forward(x_nchw, params, stride=1, compute_dtype=jnp.bfloat16):
    """Bottleneck forward (training-mode BatchNorm), NCHW in / NCHW out."""
    # TODO(synk): stride > 1 (strided 3x3 conv + strided 1x1 shortcut) not implemented.
    assert stride == 1, "only stride=1 is implemented"

    x = jnp.transpose(x_nchw, (0, 2, 3, 1))      # single NCHW -> NHWC layout pass
    N, H, W, Cin = x.shape
    P = params["w1"].shape[1]
    C3 = params["w3"].shape[1]
    M = N * H * W
    x2d = x.reshape(M, Cin)
    tile_m = _pick_tile_m(M)
    cdt = compute_dtype          # MXU operand dtype
    store_dt = compute_dtype     # intermediate HBM storage dtype

    # Stage 1: conv1 (+ fused projection-shortcut conv) + BN partial stats.
    if "wsc" in params:
        h1_raw, st1, sc_raw, stsc = _call_conv1(
            x2d, params["w1"], params["wsc"], tile_m, cdt, store_dt)
        ssc, bsc = _finalize_bn(stsc, params["gsc"], params["bsc"], M)
        res2d = sc_raw
    else:
        h1_raw, st1 = _call_conv1(x2d, params["w1"], None, tile_m, cdt, store_dt)
        ssc = jnp.ones((1, C3), jnp.float32)
        bsc = jnp.zeros((1, C3), jnp.float32)
        res2d = x2d
    s1, b1 = _finalize_bn(st1, params["g1"], params["b1"], M)

    # Stage 2: fused BN1-apply + ReLU + 3x3 conv (in-kernel pad, kw-im2col).
    w2col = params["w2"].reshape(3, 3 * P, P)
    h2_raw, st2 = _call_conv2(h1_raw.reshape(N, H, W, P), s1, b1, w2col,
                              cdt, store_dt)
    s2, b2 = _finalize_bn(st2, params["g2"], params["b2"], M)
    h2_2d = h2_raw.reshape(M, P)

    # Stage 3a: BN3 statistics of conv3 output (h3 never round-trips HBM).
    st3 = _call_conv3_stats(h2_2d, s2, b2, params["w3"], tile_m, cdt)
    s3, b3 = _finalize_bn(st3, params["g3"], params["b3"], M)
    w3_eff = params["w3"] * s3   # fold bn3 scale into the conv3 weights

    # Stage 3b: conv3 + BN3 + shortcut-BN + residual add + ReLU, fully fused.
    out2d = _call_conv3_final(h2_2d, s2, b2, w3_eff, b3, res2d, ssc, bsc,
                              tile_m, x_nchw.dtype, cdt)
    out = out2d.reshape(N, H, W, C3)
    return jnp.transpose(out, (0, 3, 1, 2))      # NHWC -> NCHW


# ---------------------------------------------------------------------------
# Deterministic parameter init (shapes from Bottleneck.__init__)
# ---------------------------------------------------------------------------
def init_params(key, in_planes, planes, stride=1, expansion=4):
    out_planes = expansion * planes
    k1, k2, k3, k4 = jax.random.split(key, 4)
    p = {
        # conv weights stored channels-last: (Cin, Cout) / (kh, kw, Cin, Cout)
        "w1": 0.1 * jax.random.normal(k1, (in_planes, planes), jnp.float32),
        "g1": jnp.ones((1, planes), jnp.float32),
        "b1": jnp.zeros((1, planes), jnp.float32),
        "w2": 0.1 * jax.random.normal(k2, (3, 3, planes, planes), jnp.float32),
        "g2": jnp.ones((1, planes), jnp.float32),
        "b2": jnp.zeros((1, planes), jnp.float32),
        "w3": 0.1 * jax.random.normal(k3, (planes, out_planes), jnp.float32),
        "g3": jnp.ones((1, out_planes), jnp.float32),
        "b3": jnp.zeros((1, out_planes), jnp.float32),
    }
    if stride != 1 or in_planes != out_planes:
        p["wsc"] = 0.1 * jax.random.normal(k4, (in_planes, out_planes),
                                           jnp.float32)
        p["gsc"] = jnp.ones((1, out_planes), jnp.float32)
        p["bsc"] = jnp.zeros((1, out_planes), jnp.float32)
    return p


# ---------------------------------------------------------------------------
# Pure-JAX reference (correctness check only)
# ---------------------------------------------------------------------------
def _ref_conv(x_nhwc, w_hwio, padding):
    return lax.conv_general_dilated(
        x_nhwc, w_hwio, window_strides=(1, 1),
        padding=[(padding, padding), (padding, padding)],
        dimension_numbers=("NHWC", "HWIO", "NHWC"))


def _ref_bn(x_nhwc, gamma, beta):
    mu = jnp.mean(x_nhwc, axis=(0, 1, 2), keepdims=True)
    var = jnp.mean((x_nhwc - mu) ** 2, axis=(0, 1, 2), keepdims=True)
    g = gamma.reshape(1, 1, 1, -1)
    b = beta.reshape(1, 1, 1, -1)
    return (x_nhwc - mu) * lax.rsqrt(var + EPS) * g + b


def reference_forward(x_nchw, params):
    x = jnp.transpose(x_nchw, (0, 2, 3, 1))
    w1 = params["w1"].reshape(1, 1, *params["w1"].shape)
    w3 = params["w3"].reshape(1, 1, *params["w3"].shape)
    h = jax.nn.relu(_ref_bn(_ref_conv(x, w1, 0), params["g1"], params["b1"]))
    h = jax.nn.relu(_ref_bn(_ref_conv(h, params["w2"], 1),
                            params["g2"], params["b2"]))
    h = _ref_bn(_ref_conv(h, w3, 0), params["g3"], params["b3"])
    if "wsc" in params:
        wsc = params["wsc"].reshape(1, 1, *params["wsc"].shape)
        sc = _ref_bn(_ref_conv(x, wsc, 0), params["gsc"], params["bsc"])
    else:
        sc = x
    out = jax.nn.relu(h + sc)
    return jnp.transpose(out, (0, 3, 1, 2))


# ---------------------------------------------------------------------------
if __name__ == "__main__":
    key = jax.random.PRNGKey(0)
    kx, kp = jax.random.split(key)

    fwd = jax.jit(bottleneck_forward, static_argnames=("stride", "compute_dtype"))

    # Case 1: projection shortcut -- Bottleneck(in_planes=8, planes=4) on (2, 8, 16, 16)
    N, Cin, H, W = 2, 8, 16, 16
    planes = 4
    x = jax.random.normal(kx, (N, Cin, H, W), jnp.float32)
    params = init_params(kp, Cin, planes, stride=1)
    ref = jax.block_until_ready(reference_forward(x, params))

    # float32 MXU path: tight correctness check.
    out_f32 = jax.block_until_ready(fwd(x, params, compute_dtype=jnp.float32))
    assert out_f32.shape == (N, 4 * planes, H, W), out_f32.shape
    err = float(jnp.max(jnp.abs(out_f32 - ref)))
    assert err < 1e-3, f"f32 path mismatch vs reference: max abs err {err}"

    # bf16 MXU path (default, performance): loose check.
    out_bf16 = jax.block_until_ready(fwd(x, params, compute_dtype=jnp.bfloat16))
    err_b = float(jnp.max(jnp.abs(out_bf16 - ref)))
    assert err_b < 0.15, f"bf16 path mismatch vs reference: max abs err {err_b}"

    # Case 2: identity shortcut -- Bottleneck(in_planes=16, planes=4) on (2, 16, 16, 16)
    x2 = jax.random.normal(jax.random.PRNGKey(1), (N, 16, H, W), jnp.float32)
    params2 = init_params(jax.random.PRNGKey(2), 16, planes, stride=1)
    ref2 = jax.block_until_ready(reference_forward(x2, params2))
    out2 = jax.block_until_ready(fwd(x2, params2, compute_dtype=jnp.float32))
    err2 = float(jnp.max(jnp.abs(out2 - ref2)))
    assert err2 < 1e-3, f"identity-shortcut mismatch vs reference: max abs err {err2}"

    print("KERNEL_OK")
</pallas_src>

<mosaic_0001>
module attributes {stable_mosaic.version = 11 : i64} {
  func.func @_conv1_proj_kernel(%arg0: i32, %arg1: memref<256x8xf32, #tpu.memory_space<vmem>>, %arg2: memref<8x4xf32, #tpu.memory_space<vmem>>, %arg3: memref<8x16xf32, #tpu.memory_space<vmem>>, %arg4: memref<256x4xf32, #tpu.memory_space<vmem>>, %arg5: memref<1x2x4xf32, #tpu.memory_space<vmem>>, %arg6: memref<256x16xf32, #tpu.memory_space<vmem>>, %arg7: memref<1x2x16xf32, #tpu.memory_space<vmem>>) attributes {dimension_semantics = [#tpu.dimension_semantics<parallel>], iteration_bounds = array<i64: 2>, scalar_prefetch = 0 : i64, scratch_operands = 0 : i64, tpu.core_type = #tpu.core_type<tc>, window_params = [{transform_indices = @transform_0, window_bounds = array<i64: 256, 8>}, {pipeline_mode = #tpu.pipeline_mode<synchronous>, transform_indices = @transform_1, window_bounds = array<i64: 8, 4>}, {pipeline_mode = #tpu.pipeline_mode<synchronous>, transform_indices = @transform_2, window_bounds = array<i64: 8, 16>}, {transform_indices = @transform_3, window_bounds = array<i64: 256, 4>}, {transform_indices = @transform_4, window_bounds = array<i64: 1, 2, 4>}, {transform_indices = @transform_5, window_bounds = array<i64: 256, 16>}, {transform_indices = @transform_6, window_bounds = array<i64: 1, 2, 16>}]} {
    %c0 = arith.constant 0 : index
    %c0_0 = arith.constant 0 : index
    %0 = vector.load %arg1[%c0, %c0_0] : memref<256x8xf32, #tpu.memory_space<vmem>>, vector<256x8xf32>
    %c0_1 = arith.constant 0 : index
    %c0_2 = arith.constant 0 : index
    %1 = vector.load %arg2[%c0_1, %c0_2] : memref<8x4xf32, #tpu.memory_space<vmem>>, vector<8x4xf32>
    %cst = arith.constant dense<0.000000e+00> : vector<256x4xf32>
    %2 = tpu.matmul %0, %1, %cst {dimension_numbers = #tpu.dot_dimension_numbers<[1], [0], [0], [1], [0, 0, 1, 1], [], []>} : vector<256x8xf32>, vector<8x4xf32>, vector<256x4xf32> -> vector<256x4xf32>
    %c0_3 = arith.constant 0 : index
    %c0_4 = arith.constant 0 : index
    %3 = vector.load %arg4[%c0_3, %c0_4] : memref<256x4xf32, #tpu.memory_space<vmem>>, vector<256x4xf32>
    tpu.vector_store %arg4[%c0_3, %c0_4], %2 {strides = array<i32>} : memref<256x4xf32, #tpu.memory_space<vmem>>, vector<256x4xf32>,
    %cst_5 = arith.constant dense<0.000000e+00> : vector<4xf32>
    %4 = vector.multi_reduction <add>, %2, %cst_5 [0] : vector<256x4xf32> to vector<4xf32>
    %5 = vector.shape_cast %4 : vector<4xf32> to vector<1x4xf32>
    %6 = arith.mulf %2, %2 : vector<256x4xf32>
    %cst_6 = arith.constant dense<0.000000e+00> : vector<4xf32>
    %7 = vector.multi_reduction <add>, %6, %cst_6 [0] : vector<256x4xf32> to vector<4xf32>
    %8 = vector.shape_cast %7 : vector<4xf32> to vector<1x4xf32>
    %9 = tpu.concatenate %5, %8 in 0 : vector<1x4xf32>, vector<1x4xf32> -> vector<2x4xf32>
    %c0_7 = arith.constant 0 : index
    %c0_8 = arith.constant 0 : index
    %c0_9 = arith.constant 0 : index
    %10 = vector.load %arg5[%c0_7, %c0_8, %c0_9] : memref<1x2x4xf32, #tpu.memory_space<vmem>>, vector<1x2x4xf32>
    %11 = vector.shape_cast %10 : vector<1x2x4xf32> to vector<2x4xf32>
    %12 = vector.shape_cast %9 : vector<2x4xf32> to vector<1x2x4xf32>
    tpu.vector_store %arg5[%c0_7, %c0_8, %c0_9], %12 {strides = array<i32>} : memref<1x2x4xf32, #tpu.memory_space<vmem>>, vector<1x2x4xf32>,
    %c0_10 = arith.constant 0 : index
    %c0_11 = arith.constant 0 : index
    %13 = vector.load %arg3[%c0_10, %c0_11] : memref<8x16xf32, #tpu.memory_space<vmem>>, vector<8x16xf32>
    %cst_12 = arith.constant dense<0.000000e+00> : vector<256x16xf32>
    %14 = tpu.matmul %0, %13, %cst_12 {dimension_numbers = #tpu.dot_dimension_numbers<[1], [0], [0], [1], [0, 0, 1, 1], [], []>} : vector<256x8xf32>, vector<8x16xf32>, vector<256x16xf32> -> vector<256x16xf32>
    %c0_13 = arith.constant 0 : index
    %c0_14 = arith.constant 0 : index
    %15 = vector.load %arg6[%c0_13, %c0_14] : memref<256x16xf32, #tpu.memory_space<vmem>>, vector<256x16xf32>
    tpu.vector_store %arg6[%c0_13, %c0_14], %14 {strides = array<i32>} : memref<256x16xf32, #tpu.memory_space<vmem>>, vector<256x16xf32>,
    %cst_15 = arith.constant dense<0.000000e+00> : vector<16xf32>
    %16 = vector.multi_reduction <add>, %14, %cst_15 [0] : vector<256x16xf32> to vector<16xf32>
    %17 = vector.shape_cast %16 : vector<16xf32> to vector<1x16xf32>
    %18 = arith.mulf %14, %14 : vector<256x16xf32>
    %cst_16 = arith.constant dense<0.000000e+00> : vector<16xf32>
    %19 = vector.multi_reduction <add>, %18, %cst_16 [0] : vector<256x16xf32> to vector<16xf32>
    %20 = vector.shape_cast %19 : vector<16xf32> to vector<1x16xf32>
    %21 = tpu.concatenate %17, %20 in 0 : vector<1x16xf32>, vector<1x16xf32> -> vector<2x16xf32>
    %c0_17 = arith.constant 0 : index
    %c0_18 = arith.constant 0 : index
    %c0_19 = arith.constant 0 : index
    %22 = vector.load %arg7[%c0_17, %c0_18, %c0_19] : memref<1x2x16xf32, #tpu.memory_space<vmem>>, vector<1x2x16xf32>
    %23 = vector.shape_cast %22 : vector<1x2x16xf32> to vector<2x16xf32>
    %24 = vector.shape_cast %21 : vector<2x16xf32> to vector<1x2x16xf32>
    tpu.vector_store %arg7[%c0_17, %c0_18, %c0_19], %24 {strides = array<i32>} : memref<1x2x16xf32, #tpu.memory_space<vmem>>, vector<1x2x16xf32>,
    return
  }
  func.func @transform_0(%arg0: i32) -> (i32, i32) {
    %c0_i32 = arith.constant 0 : i32
    %c0_i32_0 = arith.constant 0 : i32
    return %arg0, %c0_i32 : i32, i32
  }
  func.func @transform_1(%arg0: i32) -> (i32, i32) {
    %c0_i32 = arith.constant 0 : i32
    %c0_i32_0 = arith.constant 0 : i32
    %c0_i32_1 = arith.constant 0 : i32
    return %c0_i32, %c0_i32_0 : i32, i32
  }
  func.func @transform_2(%arg0: i32) -> (i32, i32) {
    %c0_i32 = arith.constant 0 : i32
    %c0_i32_0 = arith.constant 0 : i32
    %c0_i32_1 = arith.constant 0 : i32
    return %c0_i32, %c0_i32_0 : i32, i32
  }
  func.func @transform_3(%arg0: i32) -> (i32, i32) {
    %c0_i32 = arith.constant 0 : i32
    %c0_i32_0 = arith.constant 0 : i32
    return %arg0, %c0_i32 : i32, i32
  }
  func.func @transform_4(%arg0: i32) -> (i32, i32, i32) {
    %c0_i32 = arith.constant 0 : i32
    %c0_i32_0 = arith.constant 0 : i32
    %c0_i32_1 = arith.constant 0 : i32
    return %arg0, %c0_i32, %c0_i32_0 : i32, i32, i32
  }
  func.func @transform_5(%arg0: i32) -> (i32, i32) {
    %c0_i32 = arith.constant 0 : i32
    %c0_i32_0 = arith.constant 0 : i32
    return %arg0, %c0_i32 : i32, i32
  }
  func.func @transform_6(%arg0: i32) -> (i32, i32, i32) {
    %c0_i32 = arith.constant 0 : i32
    %c0_i32_0 = arith.constant 0 : i32
    %c0_i32_1 = arith.constant 0 : i32
    return %arg0, %c0_i32, %c0_i32_0 : i32, i32, i32
  }
}

module attributes {stable_mosaic.version = 11 : i64} {
  func.func @_conv3x3_kernel(%arg0: i32, %arg1: memref<1x16x16x4xf32, #tpu.memory_space<vmem>>, %arg2: memref<1x4xf32, #tpu.memory_space<vmem>>, %arg3: memref<1x4xf32, #tpu.memory_space<vmem>>, %arg4: memref<3x12x4xf32, #tpu.memory_space<vmem>>, %arg5: memref<1x16x16x4xf32, #tpu.memory_space<vmem>>, %arg6: memref<1x2x4xf32, #tpu.memory_space<vmem>>) attributes {dimension_semantics = [#tpu.dimension_semantics<parallel>], iteration_bounds = array<i64: 2>, scalar_prefetch = 0 : i64, scratch_operands = 0 : i64, tpu.core_type = #tpu.core_type<tc>, window_params = [{transform_indices = @transform_0, window_bounds = array<i64: 1, 16, 16, 4>}, {pipeline_mode = #tpu.pipeline_mode<synchronous>, transform_indices = @transform_1, window_bounds = array<i64: 1, 4>}, {pipeline_mode = #tpu.pipeline_mode<synchronous>, transform_indices = @transform_2, window_bounds = array<i64: 1, 4>}, {pipeline_mode = #tpu.pipeline_mode<synchronous>, transform_indices = @transform_3, window_bounds = array<i64: 3, 12, 4>}, {transform_indices = @transform_4, window_bounds = array<i64: 1, 16, 16, 4>}, {transform_indices = @transform_5, window_bounds = array<i64: 1, 2, 4>}]} {
    %c0 = arith.constant 0 : index
    %c0_0 = arith.constant 0 : index
    %c0_1 = arith.constant 0 : index
    %c0_2 = arith.constant 0 : index
    %0 = vector.load %arg1[%c0, %c0_0, %c0_1, %c0_2] : memref<1x16x16x4xf32, #tpu.memory_space<vmem>>, vector<1x16x16x4xf32>
    %1 = vector.shape_cast %0 : vector<1x16x16x4xf32> to vector<16x16x4xf32>
    %c0_3 = arith.constant 0 : index
    %c0_4 = arith.constant 0 : index
    %2 = vector.load %arg2[%c0_3, %c0_4] : memref<1x4xf32, #tpu.memory_space<vmem>>, vector<1x4xf32>
    %3 = vector.shape_cast %2 : vector<1x4xf32> to vector<1x1x4xf32>
    %4 = vector.broadcast %3 : vector<1x1x4xf32> to vector<16x16x4xf32>
    %5 = arith.mulf %1, %4 : vector<16x16x4xf32>
    %c0_5 = arith.constant 0 : index
    %c0_6 = arith.constant 0 : index
    %6 = vector.load %arg3[%c0_5, %c0_6] : memref<1x4xf32, #tpu.memory_space<vmem>>, vector<1x4xf32>
    %7 = vector.shape_cast %6 : vector<1x4xf32> to vector<1x1x4xf32>
    %8 = vector.broadcast %7 : vector<1x1x4xf32> to vector<16x16x4xf32>
    %9 = arith.addf %5, %8 : vector<16x16x4xf32>
    %cst = arith.constant 0.000000e+00 : f32
    %10 = vector.broadcast %cst : f32 to vector<16x16x4xf32>
    %11 = arith.maximumf %9, %10 : vector<16x16x4xf32>
    %cst_7 = arith.constant 0.000000e+00 : f32
    %12 = vector.broadcast %cst_7 : f32 to vector<1x16x4xf32>
    %13 = tpu.concatenate %12, %11, %12 in 0 : vector<1x16x4xf32>, vector<16x16x4xf32>, vector<1x16x4xf32> -> vector<18x16x4xf32>
    %14 = tpu.iota {dimensions = array<i32: 1>} : vector<18x16x4xi32>
    %cst_8 = arith.constant 0.000000e+00 : f32
    %15 = vector.broadcast %cst_8 : f32 to vector<18x16x4xf32>
    %c1_i32 = arith.constant 1 : i32
    %16 = vector.broadcast %c1_i32 : i32 to vector<18x16x4xi32>
    %17 = arith.cmpi sge, %14, %16 : vector<18x16x4xi32>
    %c1_i32_9 = arith.constant 1 : i32
    %18 = tpu.dynamic_rotate %13 by %c1_i32_9 dim 1 : vector<18x16x4xf32>, i32 -> vector<18x16x4xf32>
    %19 = arith.select %17, %18, %15 : vector<18x16x4xi1>, vector<18x16x4xf32>
    %c14_i32 = arith.constant 14 : i32
    %20 = vector.broadcast %c14_i32 : i32 to vector<18x16x4xi32>
    %21 = arith.cmpi sle, %14, %20 : vector<18x16x4xi32>
    %c15_i32 = arith.constant 15 : i32
    %22 = tpu.dynamic_rotate %13 by %c15_i32 dim 1 : vector<18x16x4xf32>, i32 -> vector<18x16x4xf32>
    %23 = arith.select %21, %22, %15 : vector<18x16x4xi1>, vector<18x16x4xf32>
    %24 = tpu.concatenate %19, %13, %23 in 2 : vector<18x16x4xf32>, vector<18x16x4xf32>, vector<18x16x4xf32> -> vector<18x16x12xf32>
    %cst_10 = arith.constant 0.000000e+00 : f32
    %25 = vector.broadcast %cst_10 : f32 to vector<256x4xf32>
    %26 = vector.extract_strided_slice %24 {offsets = [0, 0, 0], sizes = [16, 16, 12], strides = [1, 1, 1]} : vector<18x16x12xf32> to vector<16x16x12xf32>
    %27 = vector.shape_cast %26 : vector<16x16x12xf32> to vector<256x12xf32>
    %c0_11 = arith.constant 0 : index
    %c0_12 = arith.constant 0 : index
    %c0_13 = arith.constant 0 : index
    %28 = vector.load %arg4[%c0_11, %c0_12, %c0_13] : memref<3x12x4xf32, #tpu.memory_space<vmem>>, vector<1x12x4xf32>
    %29 = vector.shape_cast %28 : vector<1x12x4xf32> to vector<12x4xf32>
    %cst_14 = arith.constant dense<0.000000e+00> : vector<256x4xf32>
    %30 = tpu.matmul %27, %29, %cst_14 {dimension_numbers = #tpu.dot_dimension_numbers<[1], [0], [0], [1], [0, 0, 1, 1], [], []>} : vector<256x12xf32>, vector<12x4xf32>, vector<256x4xf32> -> vector<256x4xf32>
    %31 = arith.addf %25, %30 : vector<256x4xf32>
    %32 = vector.extract_strided_slice %24 {offsets = [1, 0, 0], sizes = [16, 16, 12], strides = [1, 1, 1]} : vector<18x16x12xf32> to vector<16x16x12xf32>
    %33 = vector.shape_cast %32 : vector<16x16x12xf32> to vector<256x12xf32>
    %c1 = arith.constant 1 : index
    %c0_15 = arith.constant 0 : index
    %c0_16 = arith.constant 0 : index
    %34 = vector.load %arg4[%c1, %c0_15, %c0_16] : memref<3x12x4xf32, #tpu.memory_space<vmem>>, vector<1x12x4xf32>
    %35 = vector.shape_cast %34 : vector<1x12x4xf32> to vector<12x4xf32>
    %cst_17 = arith.constant dense<0.000000e+00> : vector<256x4xf32>
    %36 = tpu.matmul %33, %35, %cst_17 {dimension_numbers = #tpu.dot_dimension_numbers<[1], [0], [0], [1], [0, 0, 1, 1], [], []>} : vector<256x12xf32>, vector<12x4xf32>, vector<256x4xf32> -> vector<256x4xf32>
    %37 = arith.addf %31, %36 : vector<256x4xf32>
    %38 = vector.extract_strided_slice %24 {offsets = [2, 0, 0], sizes = [16, 16, 12], strides = [1, 1, 1]} : vector<18x16x12xf32> to vector<16x16x12xf32>
    %39 = vector.shape_cast %38 : vector<16x16x12xf32> to vector<256x12xf32>
    %c2 = arith.constant 2 : index
    %c0_18 = arith.constant 0 : index
    %c0_19 = arith.constant 0 : index
    %40 = vector.load %arg4[%c2, %c0_18, %c0_19] : memref<3x12x4xf32, #tpu.memory_space<vmem>>, vector<1x12x4xf32>
    %41 = vector.shape_cast %40 : vector<1x12x4xf32> to vector<12x4xf32>
    %cst_20 = arith.constant dense<0.000000e+00> : vector<256x4xf32>
    %42 = tpu.matmul %39, %41, %cst_20 {dimension_numbers = #tpu.dot_dimension_numbers<[1], [0], [0], [1], [0, 0, 1, 1], [], []>} : vector<256x12xf32>, vector<12x4xf32>, vector<256x4xf32> -> vector<256x4xf32>
    %43 = arith.addf %37, %42 : vector<256x4xf32>
    %44 = vector.shape_cast %43 : vector<256x4xf32> to vector<16x16x4xf32>
    %c0_21 = arith.constant 0 : index
    %c0_22 = arith.constant 0 : index
    %c0_23 = arith.constant 0 : index
    %c0_24 = arith.constant 0 : index
    %45 = vector.load %arg5[%c0_21, %c0_22, %c0_23, %c0_24] : memref<1x16x16x4xf32, #tpu.memory_space<vmem>>, vector<1x16x16x4xf32>
    %46 = vector.shape_cast %45 : vector<1x16x16x4xf32> to vector<16x16x4xf32>
    %47 = vector.shape_cast %44 : vector<16x16x4xf32> to vector<1x16x16x4xf32>
    tpu.vector_store %arg5[%c0_21, %c0_22, %c0_23, %c0_24], %47 {strides = array<i32>} : memref<1x16x16x4xf32, #tpu.memory_space<vmem>>, vector<1x16x16x4xf32>,
    %cst_25 = arith.constant dense<0.000000e+00> : vector<4xf32>
    %48 = vector.multi_reduction <add>, %43, %cst_25 [0] : vector<256x4xf32> to vector<4xf32>
    %49 = vector.shape_cast %48 : vector<4xf32> to vector<1x4xf32>
    %50 = arith.mulf %43, %43 : vector<256x4xf32>
    %cst_26 = arith.constant dense<0.000000e+00> : vector<4xf32>
    %51 = vector.multi_reduction <add>, %50, %cst_26 [0] : vector<256x4xf32> to vector<4xf32>
    %52 = vector.shape_cast %51 : vector<4xf32> to vector<1x4xf32>
    %53 = tpu.concatenate %49, %52 in 0 : vector<1x4xf32>, vector<1x4xf32> -> vector<2x4xf32>
    %c0_27 = arith.constant 0 : index
    %c0_28 = arith.constant 0 : index
    %c0_29 = arith.constant 0 : index
    %54 = vector.load %arg6[%c0_27, %c0_28, %c0_29] : memref<1x2x4xf32, #tpu.memory_space<vmem>>, vector<1x2x4xf32>
    %55 = vector.shape_cast %54 : vector<1x2x4xf32> to vector<2x4xf32>
    %56 = vector.shape_cast %53 : vector<2x4xf32> to vector<1x2x4xf32>
    tpu.vector_store %arg6[%c0_27, %c0_28, %c0_29], %56 {strides = array<i32>} : memref<1x2x4xf32, #tpu.memory_space<vmem>>, vector<1x2x4xf32>,
    return
  }
  func.func @transform_0(%arg0: i32) -> (i32, i32, i32, i32) {
    %c0_i32 = arith.constant 0 : i32
    %c0_i32_0 = arith.constant 0 : i32
    %c0_i32_1 = arith.constant 0 : i32
    %c0_i32_2 = arith.constant 0 : i32
    return %arg0, %c0_i32, %c0_i32_0, %c0_i32_1 : i32, i32, i32, i32
  }
  func.func @transform_1(%arg0: i32) -> (i32, i32) {
    %c0_i32 = arith.constant 0 : i32
    %c0_i32_0 = arith.constant 0 : i32
    %c0_i32_1 = arith.constant 0 : i32
    return %c0_i32, %c0_i32_0 : i32, i32
  }
  func.func @transform_2(%arg0: i32) -> (i32, i32) {
    %c0_i32 = arith.constant 0 : i32
    %c0_i32_0 = arith.constant 0 : i32
    %c0_i32_1 = arith.constant 0 : i32
    return %c0_i32, %c0_i32_0 : i32, i32
  }
  func.func @transform_3(%arg0: i32) -> (i32, i32, i32) {
    %c0_i32 = arith.constant 0 : i32
    %c0_i32_0 = arith.constant 0 : i32
    %c0_i32_1 = arith.constant 0 : i32
    %c0_i32_2 = arith.constant 0 : i32
    return %c0_i32, %c0_i32_0, %c0_i32_1 : i32, i32, i32
  }
  func.func @transform_4(%arg0: i32) -> (i32, i32, i32, i32) {
    %c0_i32 = arith.constant 0 : i32
    %c0_i32_0 = arith.constant 0 : i32
    %c0_i32_1 = arith.constant 0 : i32
    %c0_i32_2 = arith.constant 0 : i32
    return %arg0, %c0_i32, %c0_i32_0, %c0_i32_1 : i32, i32, i32, i32
  }
  func.func @transform_5(%arg0: i32) -> (i32, i32, i32) {
    %c0_i32 = arith.constant 0 : i32
    %c0_i32_0 = arith.constant 0 : i32
    %c0_i32_1 = arith.constant 0 : i32
    return %arg0, %c0_i32, %c0_i32_0 : i32, i32, i32
  }
}

module attributes {stable_mosaic.version = 11 : i64} {
  func.func @_conv3_stats_kernel(%arg0: i32, %arg1: memref<256x4xf32, #tpu.memory_space<vmem>>, %arg2: memref<1x4xf32, #tpu.memory_space<vmem>>, %arg3: memref<1x4xf32, #tpu.memory_space<vmem>>, %arg4: memref<4x16xf32, #tpu.memory_space<vmem>>, %arg5: memref<1x2x16xf32, #tpu.memory_space<vmem>>) attributes {dimension_semantics = [#tpu.dimension_semantics<parallel>], iteration_bounds = array<i64: 2>, scalar_prefetch = 0 : i64, scratch_operands = 0 : i64, tpu.core_type = #tpu.core_type<tc>, window_params = [{transform_indices = @transform_0, window_bounds = array<i64: 256, 4>}, {pipeline_mode = #tpu.pipeline_mode<synchronous>, transform_indices = @transform_1, window_bounds = array<i64: 1, 4>}, {pipeline_mode = #tpu.pipeline_mode<synchronous>, transform_indices = @transform_2, window_bounds = array<i64: 1, 4>}, {pipeline_mode = #tpu.pipeline_mode<synchronous>, transform_indices = @transform_3, window_bounds = array<i64: 4, 16>}, {transform_indices = @transform_4, window_bounds = array<i64: 1, 2, 16>}]} {
    %c0 = arith.constant 0 : index
    %c0_0 = arith.constant 0 : index
    %0 = vector.load %arg1[%c0, %c0_0] : memref<256x4xf32, #tpu.memory_space<vmem>>, vector<256x4xf32>
    %c0_1 = arith.constant 0 : index
    %c0_2 = arith.constant 0 : index
    %1 = vector.load %arg2[%c0_1, %c0_2] : memref<1x4xf32, #tpu.memory_space<vmem>>, vector<1x4xf32>
    %2 = vector.broadcast %1 : vector<1x4xf32> to vector<256x4xf32>
    %3 = arith.mulf %0, %2 : vector<256x4xf32>
    %c0_3 = arith.constant 0 : index
    %c0_4 = arith.constant 0 : index
    %4 = vector.load %arg3[%c0_3, %c0_4] : memref<1x4xf32, #tpu.memory_space<vmem>>, vector<1x4xf32>
    %5 = vector.broadcast %4 : vector<1x4xf32> to vector<256x4xf32>
    %6 = arith.addf %3, %5 : vector<256x4xf32>
    %cst = arith.constant 0.000000e+00 : f32
    %7 = vector.broadcast %cst : f32 to vector<256x4xf32>
    %8 = arith.maximumf %6, %7 : vector<256x4xf32>
    %c0_5 = arith.constant 0 : index
    %c0_6 = arith.constant 0 : index
    %9 = vector.load %arg4[%c0_5, %c0_6] : memref<4x16xf32, #tpu.memory_space<vmem>>, vector<4x16xf32>
    %cst_7 = arith.constant dense<0.000000e+00> : vector<256x16xf32>
    %10 = tpu.matmul %8, %9, %cst_7 {dimension_numbers = #tpu.dot_dimension_numbers<[1], [0], [0], [1], [0, 0, 1, 1], [], []>} : vector<256x4xf32>, vector<4x16xf32>, vector<256x16xf32> -> vector<256x16xf32>
    %cst_8 = arith.constant dense<0.000000e+00> : vector<16xf32>
    %11 = vector.multi_reduction <add>, %10, %cst_8 [0] : vector<256x16xf32> to vector<16xf32>
    %12 = vector.shape_cast %11 : vector<16xf32> to vector<1x16xf32>
    %13 = arith.mulf %10, %10 : vector<256x16xf32>
    %cst_9 = arith.constant dense<0.000000e+00> : vector<16xf32>
    %14 = vector.multi_reduction <add>, %13, %cst_9 [0] : vector<256x16xf32> to vector<16xf32>
    %15 = vector.shape_cast %14 : vector<16xf32> to vector<1x16xf32>
    %16 = tpu.concatenate %12, %15 in 0 : vector<1x16xf32>, vector<1x16xf32> -> vector<2x16xf32>
    %c0_10 = arith.constant 0 : index
    %c0_11 = arith.constant 0 : index
    %c0_12 = arith.constant 0 : index
    %17 = vector.load %arg5[%c0_10, %c0_11, %c0_12] : memref<1x2x16xf32, #tpu.memory_space<vmem>>, vector<1x2x16xf32>
    %18 = vector.shape_cast %17 : vector<1x2x16xf32> to vector<2x16xf32>
    %19 = vector.shape_cast %16 : vector<2x16xf32> to vector<1x2x16xf32>
    tpu.vector_store %arg5[%c0_10, %c0_11, %c0_12], %19 {strides = array<i32>} : memref<1x2x16xf32, #tpu.memory_space<vmem>>, vector<1x2x16xf32>,
    return
  }
  func.func @transform_0(%arg0: i32) -> (i32, i32) {
    %c0_i32 = arith.constant 0 : i32
    %c0_i32_0 = arith.constant 0 : i32
    return %arg0, %c0_i32 : i32, i32
  }
  func.func @transform_1(%arg0: i32) -> (i32, i32) {
    %c0_i32 = arith.constant 0 : i32
    %c0_i32_0 = arith.constant 0 : i32
    %c0_i32_1 = arith.constant 0 : i32
    return %c0_i32, %c0_i32_0 : i32, i32
  }
  func.func @transform_2(%arg0: i32) -> (i32, i32) {
    %c0_i32 = arith.constant 0 : i32
    %c0_i32_0 = arith.constant 0 : i32
    %c0_i32_1 = arith.constant 0 : i32
    return %c0_i32, %c0_i32_0 : i32, i32
  }
  func.func @transform_3(%arg0: i32) -> (i32, i32) {
    %c0_i32 = arith.constant 0 : i32
    %c0_i32_0 = arith.constant 0 : i32
    %c0_i32_1 = arith.constant 0 : i32
    return %c0_i32, %c0_i32_0 : i32, i32
  }
  func.func @transform_4(%arg0: i32) -> (i32, i32, i32) {
    %c0_i32 = arith.constant 0 : i32
    %c0_i32_0 = arith.constant 0 : i32
    %c0_i32_1 = arith.constant 0 : i32
    return %arg0, %c0_i32, %c0_i32_0 : i32, i32, i32
  }
}

module attributes {stable_mosaic.version = 11 : i64} {
  func.func @_conv3_final_kernel(%arg0: i32, %arg1: memref<256x4xf32, #tpu.memory_space<vmem>>, %arg2: memref<1x4xf32, #tpu.memory_space<vmem>>, %arg3: memref<1x4xf32, #tpu.memory_space<vmem>>, %arg4: memref<4x16xf32, #tpu.memory_space<vmem>>, %arg5: memref<1x16xf32, #tpu.memory_space<vmem>>, %arg6: memref<256x16xf32, #tpu.memory_space<vmem>>, %arg7: memref<1x16xf32, #tpu.memory_space<vmem>>, %arg8: memref<1x16xf32, #tpu.memory_space<vmem>>, %arg9: memref<256x16xf32, #tpu.memory_space<vmem>>) attributes {dimension_semantics = [#tpu.dimension_semantics<parallel>], iteration_bounds = array<i64: 2>, scalar_prefetch = 0 : i64, scratch_operands = 0 : i64, tpu.core_type = #tpu.core_type<tc>, window_params = [{transform_indices = @transform_0, window_bounds = array<i64: 256, 4>}, {pipeline_mode = #tpu.pipeline_mode<synchronous>, transform_indices = @transform_1, window_bounds = array<i64: 1, 4>}, {pipeline_mode = #tpu.pipeline_mode<synchronous>, transform_indices = @transform_2, window_bounds = array<i64: 1, 4>}, {pipeline_mode = #tpu.pipeline_mode<synchronous>, transform_indices = @transform_3, window_bounds = array<i64: 4, 16>}, {pipeline_mode = #tpu.pipeline_mode<synchronous>, transform_indices = @transform_4, window_bounds = array<i64: 1, 16>}, {transform_indices = @transform_5, window_bounds = array<i64: 256, 16>}, {pipeline_mode = #tpu.pipeline_mode<synchronous>, transform_indices = @transform_6, window_bounds = array<i64: 1, 16>}, {pipeline_mode = #tpu.pipeline_mode<synchronous>, transform_indices = @transform_7, window_bounds = array<i64: 1, 16>}, {transform_indices = @transform_8, window_bounds = array<i64: 256, 16>}]} {
    %c0 = arith.constant 0 : index
    %c0_0 = arith.constant 0 : index
    %0 = vector.load %arg1[%c0, %c0_0] : memref<256x4xf32, #tpu.memory_space<vmem>>, vector<256x4xf32>
    %c0_1 = arith.constant 0 : index
    %c0_2 = arith.constant 0 : index
    %1 = vector.load %arg2[%c0_1, %c0_2] : memref<1x4xf32, #tpu.memory_space<vmem>>, vector<1x4xf32>
    %2 = vector.broadcast %1 : vector<1x4xf32> to vector<256x4xf32>
    %3 = arith.mulf %0, %2 : vector<256x4xf32>
    %c0_3 = arith.constant 0 : index
    %c0_4 = arith.constant 0 : index
    %4 = vector.load %arg3[%c0_3, %c0_4] : memref<1x4xf32, #tpu.memory_space<vmem>>, vector<1x4xf32>
    %5 = vector.broadcast %4 : vector<1x4xf32> to vector<256x4xf32>
    %6 = arith.addf %3, %5 : vector<256x4xf32>
    %cst = arith.constant 0.000000e+00 : f32
    %7 = vector.broadcast %cst : f32 to vector<256x4xf32>
    %8 = arith.maximumf %6, %7 : vector<256x4xf32>
    %c0_5 = arith.constant 0 : index
    %c0_6 = arith.constant 0 : index
    %9 = vector.load %arg4[%c0_5, %c0_6] : memref<4x16xf32, #tpu.memory_space<vmem>>, vector<4x16xf32>
    %cst_7 = arith.constant dense<0.000000e+00> : vector<256x16xf32>
    %10 = tpu.matmul %8, %9, %cst_7 {dimension_numbers = #tpu.dot_dimension_numbers<[1], [0], [0], [1], [0, 0, 1, 1], [], []>} : vector<256x4xf32>, vector<4x16xf32>, vector<256x16xf32> -> vector<256x16xf32>
    %c0_8 = arith.constant 0 : index
    %c0_9 = arith.constant 0 : index
    %11 = vector.load %arg5[%c0_8, %c0_9] : memref<1x16xf32, #tpu.memory_space<vmem>>, vector<1x16xf32>
    %12 = vector.broadcast %11 : vector<1x16xf32> to vector<256x16xf32>
    %13 = arith.addf %10, %12 : vector<256x16xf32>
    %c0_10 = arith.constant 0 : index
    %c0_11 = arith.constant 0 : index
    %14 = vector.load %arg6[%c0_10, %c0_11] : memref<256x16xf32, #tpu.memory_space<vmem>>, vector<256x16xf32>
    %c0_12 = arith.constant 0 : index
    %c0_13 = arith.constant 0 : index
    %15 = vector.load %arg7[%c0_12, %c0_13] : memref<1x16xf32, #tpu.memory_space<vmem>>, vector<1x16xf32>
    %16 = vector.broadcast %15 : vector<1x16xf32> to vector<256x16xf32>
    %17 = arith.mulf %14, %16 : vector<256x16xf32>
    %c0_14 = arith.constant 0 : index
    %c0_15 = arith.constant 0 : index
    %18 = vector.load %arg8[%c0_14, %c0_15] : memref<1x16xf32, #tpu.memory_space<vmem>>, vector<1x16xf32>
    %19 = vector.broadcast %18 : vector<1x16xf32> to vector<256x16xf32>
    %20 = arith.addf %17, %19 : vector<256x16xf32>
    %21 = arith.addf %13, %20 : vector<256x16xf32>
    %cst_16 = arith.constant 0.000000e+00 : f32
    %22 = vector.broadcast %cst_16 : f32 to vector<256x16xf32>
    %23 = arith.maximumf %21, %22 : vector<256x16xf32>
    %c0_17 = arith.constant 0 : index
    %c0_18 = arith.constant 0 : index
    %24 = vector.load %arg9[%c0_17, %c0_18] : memref<256x16xf32, #tpu.memory_space<vmem>>, vector<256x16xf32>
    tpu.vector_store %arg9[%c0_17, %c0_18], %23 {strides = array<i32>} : memref<256x16xf32, #tpu.memory_space<vmem>>, vector<256x16xf32>,
    return
  }
  func.func @transform_0(%arg0: i32) -> (i32, i32) {
    %c0_i32 = arith.constant 0 : i32
    %c0_i32_0 = arith.constant 0 : i32
    return %arg0, %c0_i32 : i32, i32
  }
  func.func @transform_1(%arg0: i32) -> (i32, i32) {
    %c0_i32 = arith.constant 0 : i32
    %c0_i32_0 = arith.constant 0 : i32
    %c0_i32_1 = arith.constant 0 : i32
    return %c0_i32, %c0_i32_0 : i32, i32
  }
  func.func @transform_2(%arg0: i32) -> (i32, i32) {
    %c0_i32 = arith.constant 0 : i32
    %c0_i32_0 = arith.constant 0 : i32
    %c0_i32_1 = arith.constant 0 : i32
    return %c0_i32, %c0_i32_0 : i32, i32
  }
  func.func @transform_3(%arg0: i32) -> (i32, i32) {
    %c0_i32 = arith.constant 0 : i32
    %c0_i32_0 = arith.constant 0 : i32
    %c0_i32_1 = arith.constant 0 : i32
    return %c0_i32, %c0_i32_0 : i32, i32
  }
  func.func @transform_4(%arg0: i32) -> (i32, i32) {
    %c0_i32 = arith.constant 0 : i32
    %c0_i32_0 = arith.constant 0 : i32
    %c0_i32_1 = arith.constant 0 : i32
    return %c0_i32, %c0_i32_0 : i32, i32
  }
  func.func @transform_5(%arg0: i32) -> (i32, i32) {
    %c0_i32 = arith.constant 0 : i32
    %c0_i32_0 = arith.constant 0 : i32
    return %arg0, %c0_i32 : i32, i32
  }
  func.func @transform_6(%arg0: i32) -> (i32, i32) {
    %c0_i32 = arith.constant 0 : i32
    %c0_i32_0 = arith.constant 0 : i32
    %c0_i32_1 = arith.constant 0 : i32
    return %c0_i32, %c0_i32_0 : i32, i32
  }
  func.func @transform_7(%arg0: i32) -> (i32, i32) {
    %c0_i32 = arith.constant 0 : i32
    %c0_i32_0 = arith.constant 0 : i32
    %c0_i32_1 = arith.constant 0 : i32
    return %c0_i32, %c0_i32_0 : i32, i32
  }
  func.func @transform_8(%arg0: i32) -> (i32, i32) {
    %c0_i32 = arith.constant 0 : i32
    %c0_i32_0 = arith.constant 0 : i32
    return %arg0, %c0_i32 : i32, i32
  }
}

</mosaic_0001>

<llo_original>
// kernel: bottleneck_forward.6
$region0: #{bottleneck_forward.6}
  #allocation0 [shape = 'u32[]', space=smem, size = 0x4, offset = 0x4, fixed_abs, tag = 'smem constant byte address 0x4 - core index']
  #allocation1 [shape = 'u32[72,128]{1,0:T(1,128)}', space=vmem, size = 0x9000, scoped, tag = 'internal scratch']
  %s0 = inlined_call_operand.vmem [shape: f32[512,4], index: 0, kind: input, shape index: {}]
  %s1 = inlined_call_operand.vmem [shape: f32[1,4], index: 1, kind: input, shape index: {}]
  %s2 = inlined_call_operand.vmem [shape: f32[1,4], index: 2, kind: input, shape index: {}]
  %s3 = inlined_call_operand.vmem [shape: f32[4,16], index: 3, kind: input, shape index: {}]
  %s4 = inlined_call_operand.vmem [shape: f32[2,2,16], index: 4, kind: output, shape index: {}]
  %s5 = sld [smem:[#allocation0]]
  $region49: #{bottleneck_forward.6} parent=0
    _
  %s7 = ssub.s32 1, %s5
  %s8 = scalar_select 0, %s7, %s5
  loop: start=0, step=1, limit=4
  $region2: #{bottleneck_forward.6} parent=0 // loop_pre_header
    _
  $region3: #{bottleneck_forward.6} parent=0 // loop_header
    %s10 = sphi 0, %s14
    %p11 = scmp.ge.s32.totalorder %s10, 4
    %s20 = sphi 0, %s22
    %s23 = sphi 0, %s20
    %s24 = sphi 0, %s23
    %s40 = sphi 0, %s24
    %s44 = sphi 0, %s44
    %s46 = sphi 0, %s44
    %s47 = sphi 0, %s46
    %s61 = sphi 0, %s47
    %s65 = sphi 0, %s65
    %s67 = sphi 0, %s65
    %s68 = sphi 0, %s67
    %s82 = sphi 0, %s68
    %s86 = sphi 0, %s86
    %s88 = sphi 0, %s86
    %s89 = sphi 0, %s88
    %s103 = sphi 0, %s89
    %s109 = sphi 0, %s111
    %s112 = sphi 0, %s109
    %s113 = sphi 0, %s112
    %s129 = sphi 0, %s113
  $region4: #{bottleneck_forward.6} parent=0 // loop_header_branch
    %13 = sbr.rel (%p11) target = $region8
  $region5: #{bottleneck_forward.6} parent=0 // loop_body
    %s15 = ssub.s32 %s10, 1
    %s16 = ssub.s32 %s10, 2
    %s17 = sadd.s32 %s10, 1
    %s18 = ssub.s32 %s10, %s17
    %p19 = scmp.eq.s32.totalorder %s18, 0
    %s21 = sadd.s32 %s20, 1
    %s22 = scalar_select %p19, %s20, %s21
    %p25 = pneg %p19
    %p26 = scmp.eq.s32.totalorder %s10, 1
    %p27 = por %p25, %p26
    %p28 = scmp.ne.s32.totalorder %s20, %s23
    %p29 = scmp.eq.s32.totalorder %s10, 0
    %p30 = por %p28, %p29
    %p31 = scmp.ne.s32.totalorder %s20, %s23
    %p32 = scmp.eq.s32.totalorder %s15, 1
    %p33 = por %p31, %p32
    %p34 = scmp.ne.s32.totalorder %s23, %s24
    %p35 = scmp.eq.s32.totalorder %s15, 0
    %p36 = por %p34, %p35
    %p37 = scmp.ne.s32.totalorder %s23, %s24
    %p38 = scmp.eq.s32.totalorder %s16, 1
    %p39 = por %p37, %p38
    %p41 = scmp.ne.s32.totalorder %s24, %s40
    %p42 = scmp.eq.s32.totalorder %s16, 0
    %p43 = por %p41, %p42
    %s45 = sadd.s32 %s44, 1
    %p48 = scmp.eq.s32.totalorder %s10, 1
    %p49 = scmp.ne.s32.totalorder %s44, %s46
    %p50 = scmp.eq.s32.totalorder %s10, 0
    %p51 = por %p49, %p50
    %p52 = scmp.ne.s32.totalorder %s44, %s46
    %p53 = scmp.eq.s32.totalorder %s15, 1
    %p54 = por %p52, %p53
    %p55 = scmp.ne.s32.totalorder %s46, %s47
    %p56 = scmp.eq.s32.totalorder %s15, 0
    %p57 = por %p55, %p56
    %p58 = scmp.ne.s32.totalorder %s46, %s47
    %p59 = scmp.eq.s32.totalorder %s16, 1
    %p60 = por %p58, %p59
    %p62 = scmp.ne.s32.totalorder %s47, %s61
    %p63 = scmp.eq.s32.totalorder %s16, 0
    %p64 = por %p62, %p63
    %s66 = sadd.s32 %s65, 1
    %p69 = scmp.eq.s32.totalorder %s10, 1
    %p70 = scmp.ne.s32.totalorder %s65, %s67
    %p71 = scmp.eq.s32.totalorder %s10, 0
    %p72 = por %p70, %p71
    %p73 = scmp.ne.s32.totalorder %s65, %s67
    %p74 = scmp.eq.s32.totalorder %s15, 1
    %p75 = por %p73, %p74
    %p76 = scmp.ne.s32.totalorder %s67, %s68
    %p77 = scmp.eq.s32.totalorder %s15, 0
    %p78 = por %p76, %p77
    %p79 = scmp.ne.s32.totalorder %s67, %s68
    %p80 = scmp.eq.s32.totalorder %s16, 1
    %p81 = por %p79, %p80
    %p83 = scmp.ne.s32.totalorder %s68, %s82
    %p84 = scmp.eq.s32.totalorder %s16, 0
    %p85 = por %p83, %p84
    %s87 = sadd.s32 %s86, 1
    %p90 = scmp.eq.s32.totalorder %s10, 1
    %p91 = scmp.ne.s32.totalorder %s86, %s88
    %p92 = scmp.eq.s32.totalorder %s10, 0
    %p93 = por %p91, %p92
    %p94 = scmp.ne.s32.totalorder %s86, %s88
    %p95 = scmp.eq.s32.totalorder %s15, 1
    %p96 = por %p94, %p95
    %p97 = scmp.ne.s32.totalorder %s88, %s89
    %p98 = scmp.eq.s32.totalorder %s15, 0
    %p99 = por %p97, %p98
    %p100 = scmp.ne.s32.totalorder %s88, %s89
    %p101 = scmp.eq.s32.totalorder %s16, 1
    %p102 = por %p100, %p101
    %p104 = scmp.ne.s32.totalorder %s89, %s103
    %p105 = scmp.eq.s32.totalorder %s16, 0
    %p106 = por %p104, %p105
    %s107 = ssub.s32 %s10, %s17
    %p108 = scmp.eq.s32.totalorder %s107, 0
    %s110 = sadd.s32 %s109, 1
    %s111 = scalar_select %p108, %s109, %s110
    %p114 = pneg %p108
    %p115 = scmp.eq.s32.totalorder %s10, 1
    %p116 = por %p114, %p115
    %p117 = scmp.ne.s32.totalorder %s109, %s112
    %p118 = scmp.eq.s32.totalorder %s10, 0
    %p119 = por %p117, %p118
    %p120 = scmp.ne.s32.totalorder %s109, %s112
    %p121 = scmp.eq.s32.totalorder %s15, 1
    %p122 = por %p120, %p121
    %p123 = scmp.ne.s32.totalorder %s112, %s113
    %p124 = scmp.eq.s32.totalorder %s15, 0
    %p125 = por %p123, %p124
    %p126 = scmp.ne.s32.totalorder %s112, %s113
    %p127 = scmp.eq.s32.totalorder %s16, 1
    %p128 = por %p126, %p127
    %p130 = scmp.ne.s32.totalorder %s113, %s129
    %p131 = scmp.eq.s32.totalorder %s16, 0
    %p132 = por %p130, %p131
    %p133 = scmp.le.s32.totalorder 1, %s10
    %p134 = scmp.lt.s32.totalorder %s10, 3
    %p135 = pnand %p133, %p134
    %p136 = pneg %p135
    // Predicated region
    $region9: #{bottleneck_forward.6} parent=5 // pred_check
      _
    $region10: #{bottleneck_forward.6} parent=5 // pred_check_branch
      %138 = sbr.rel (%p135) target = $region12
    $region11: #{bottleneck_forward.6} parent=5 // pred_region
      %s139 = ssub.s32 %s10, 1
      // Predicated region
      $region13: #{bottleneck_forward.6} parent=11 // pred_check
        %p140 = pneg %p57
      $region14: #{bottleneck_forward.6} parent=11 // pred_check_branch
        %142 = sbr.rel (%p140) target = $region16
      $region15: #{bottleneck_forward.6} parent=11 // pred_region
        _
      $region16: #{bottleneck_forward.6} parent=11 // pred_fallthru
        _
      // Predicated region
      $region17: #{bottleneck_forward.6} parent=11 // pred_check
        %p143 = pneg %p78
      $region18: #{bottleneck_forward.6} parent=11 // pred_check_branch
        %145 = sbr.rel (%p143) target = $region20
      $region19: #{bottleneck_forward.6} parent=11 // pred_region
        _
      $region20: #{bottleneck_forward.6} parent=11 // pred_fallthru
        _
      // Predicated region
      $region21: #{bottleneck_forward.6} parent=11 // pred_check
        %p146 = pneg %p99
      $region22: #{bottleneck_forward.6} parent=11 // pred_check_branch
        %148 = sbr.rel (%p146) target = $region24
      $region23: #{bottleneck_forward.6} parent=11 // pred_region
        _
      $region24: #{bottleneck_forward.6} parent=11 // pred_fallthru
        _
    $region12: #{bottleneck_forward.6} parent=5 // pred_fallthru
      _
    %p149 = scmp.lt.s32.totalorder %s10, 2
    // Predicated region
    $region25: #{bottleneck_forward.6} parent=5 // pred_check
      %p150 = pneg %p149
    $region26: #{bottleneck_forward.6} parent=5 // pred_check_branch
      %152 = sbr.rel (%p150) target = $region28
    $region27: #{bottleneck_forward.6} parent=5 // pred_region
      // Predicated region
      $region29: #{bottleneck_forward.6} parent=27 // pred_check
        %p153 = pneg %p30
      $region30: #{bottleneck_forward.6} parent=27 // pred_check_branch
        %155 = sbr.rel (%p153) target = $region32
      $region31: #{bottleneck_forward.6} parent=27 // pred_region
        %s156 = smul.u32 32, %s10
        %p157 = scmp.lt.s32.totalorder %s156, 63
        %s158 = scalar_select %p157, %s156, 63
        %s159 = smul.addr %s158, 8
        %s160 = scalar_lea.vmem %s0, %s159
        %s161 = smul.u32 32, %s10
      $region32: #{bottleneck_forward.6} parent=27 // pred_fallthru
        _
    $region28: #{bottleneck_forward.6} parent=5 // pred_fallthru
      _
    %p162 = scmp.le.s32.totalorder 1, %s10
    %p163 = scmp.lt.s32.totalorder %s10, 3
    %p164 = pnand %p162, %p163
    %p165 = pneg %p164
    // Predicated region
    $region33: #{bottleneck_forward.6} parent=5 // pred_check
      _
    $region34: #{bottleneck_forward.6} parent=5 // pred_check_branch
      %167 = sbr.rel (%p164) target = $region36
    $region35: #{bottleneck_forward.6} parent=5 // pred_region
      %s168 = ssub.s32 %s10, 1
      %s169 = smul.u32 32, %s15
      %p170 = scmp.lt.s32.totalorder %s169, 63
      %s171 = scalar_select %p170, %s169, 63
      %s172 = smul.addr %s171, 8
      %s173 = scalar_lea.vmem %s0, %s172
      %p174 = pneg %p36
      %p175 = pneg %p33
      %p176 = pneg %p57
      %p177 = pneg %p54
      %p178 = pneg %p78
      %p179 = pneg %p75
      %p180 = pneg %p99
      %p181 = pneg %p96
      %p182 = pneg %p125
      %p183 = pneg %p122
      %p184 = scmp.lt.s32.totalorder %s15, 1
      %s185 = scalar_select %p184, %s15, 1
      %s186 = smul.addr %s185, 2
      %s187 = scalar_lea.vmem %s4, %s186
      %s188 = smul.u32 32, %s15
      %p189 = scmp.lt.s32.totalorder %s188, 63
      %s190 = scalar_select %p189, %s188, 63
      %s191 = smul.addr %s190, 8
      %s192 = scalar_lea.vmem %s0, %s191
      %s193 = smul.u32 32, %s15
      %p194 = scmp.lt.s32.totalorder %s15, 1
      %s195 = scalar_select %p194, %s15, 1
      %s196 = smul.addr %s195, 2
      %s197 = scalar_lea.vmem %s4, %s196
      %v198 = vld [vmem:[%s192] sm:$0xff]
      %v199 = vld [vmem:[%s192 + $0x8] sm:$0xff]
      %v200 = vld [vmem:[%s192 + $0x10] sm:$0xff]
      %v201 = vld [vmem:[%s192 + $0x18] sm:$0xff]
      %v202 = vld [vmem:[%s192 + $0x20] sm:$0xff]
      %v203 = vld [vmem:[%s192 + $0x28] sm:$0xff]
      %v204 = vld [vmem:[%s192 + $0x30] sm:$0xff]
      %v205 = vld [vmem:[%s192 + $0x38] sm:$0xff]
      %v206 = vld [vmem:[%s192 + $0x40] sm:$0xff]
      %v207 = vld [vmem:[%s192 + $0x48] sm:$0xff]
      %v208 = vld [vmem:[%s192 + $0x50] sm:$0xff]
      %v209 = vld [vmem:[%s192 + $0x58] sm:$0xff]
      %v210 = vld [vmem:[%s192 + $0x60] sm:$0xff]
      %v211 = vld [vmem:[%s192 + $0x68] sm:$0xff]
      %v212 = vld [vmem:[%s192 + $0x70] sm:$0xff]
      %v213 = vld [vmem:[%s192 + $0x78] sm:$0xff]
      %v214 = vld [vmem:[%s192 + $0x80] sm:$0xff]
      %v215 = vld [vmem:[%s192 + $0x88] sm:$0xff]
      %v216 = vld [vmem:[%s192 + $0x90] sm:$0xff]
      %v217 = vld [vmem:[%s192 + $0x98] sm:$0xff]
      %v218 = vld [vmem:[%s192 + $0xa0] sm:$0xff]
      %v219 = vld [vmem:[%s192 + $0xa8] sm:$0xff]
      %v220 = vld [vmem:[%s192 + $0xb0] sm:$0xff]
      %v221 = vld [vmem:[%s192 + $0xb8] sm:$0xff]
      %v222 = vld [vmem:[%s192 + $0xc0] sm:$0xff]
      %v223 = vld [vmem:[%s192 + $0xc8] sm:$0xff]
      %v224 = vld [vmem:[%s192 + $0xd0] sm:$0xff]
      %v225 = vld [vmem:[%s192 + $0xd8] sm:$0xff]
      %v226 = vld [vmem:[%s192 + $0xe0] sm:$0xff]
      %v227 = vld [vmem:[%s192 + $0xe8] sm:$0xff]
      %v228 = vld [vmem:[%s192 + $0xf0] sm:$0xff]
      %v229 = vld [vmem:[%s192 + $0xf8] sm:$0xff]
      %v230 = vld [vmem:[%s1] sm:$0x1]
      %v232 = vperm.slane %v230, 0
      %v234 = vmul.f32 %v198, %v232
      %v235 = vmul.f32 %v199, %v232
      %v236 = vmul.f32 %v200, %v232
      %v237 = vmul.f32 %v201, %v232
      %v238 = vmul.f32 %v202, %v232
      %v239 = vmul.f32 %v203, %v232
      %v240 = vmul.f32 %v204, %v232
      %v241 = vmul.f32 %v205, %v232
      %v242 = vmul.f32 %v206, %v232
      %v243 = vmul.f32 %v207, %v232
      %v244 = vmul.f32 %v208, %v232
      %v245 = vmul.f32 %v209, %v232
      %v246 = vmul.f32 %v210, %v232
      %v247 = vmul.f32 %v211, %v232
      %v248 = vmul.f32 %v212, %v232
      %v249 = vmul.f32 %v213, %v232
      %v250 = vmul.f32 %v214, %v232
      %v251 = vmul.f32 %v215, %v232
      %v252 = vmul.f32 %v216, %v232
      %v253 = vmul.f32 %v217, %v232
      %v254 = vmul.f32 %v218, %v232
      %v255 = vmul.f32 %v219, %v232
      %v256 = vmul.f32 %v220, %v232
      %v257 = vmul.f32 %v221, %v232
      %v258 = vmul.f32 %v222, %v232
      %v259 = vmul.f32 %v223, %v232
      %v260 = vmul.f32 %v224, %v232
      %v261 = vmul.f32 %v225, %v232
      %v262 = vmul.f32 %v226, %v232
      %v263 = vmul.f32 %v227, %v232
      %v264 = vmul.f32 %v228, %v232
      %v265 = vmul.f32 %v229, %v232
      %v266 = vld [vmem:[%s2] sm:$0x1]
      %v268 = vperm.slane %v266, 0
      %v270 = vadd.f32 %v234, %v268
      %v271 = vadd.f32 %v235, %v268
      %v272 = vadd.f32 %v236, %v268
      %v273 = vadd.f32 %v237, %v268
      %v274 = vadd.f32 %v238, %v268
      %v275 = vadd.f32 %v239, %v268
      %v276 = vadd.f32 %v240, %v268
      %v277 = vadd.f32 %v241, %v268
      %v278 = vadd.f32 %v242, %v268
      %v279 = vadd.f32 %v243, %v268
      %v280 = vadd.f32 %v244, %v268
      %v281 = vadd.f32 %v245, %v268
      %v282 = vadd.f32 %v246, %v268
      %v283 = vadd.f32 %v247, %v268
      %v284 = vadd.f32 %v248, %v268
      %v285 = vadd.f32 %v249, %v268
      %v286 = vadd.f32 %v250, %v268
      %v287 = vadd.f32 %v251, %v268
      %v288 = vadd.f32 %v252, %v268
      %v289 = vadd.f32 %v253, %v268
      %v290 = vadd.f32 %v254, %v268
      %v291 = vadd.f32 %v255, %v268
      %v292 = vadd.f32 %v256, %v268
      %v293 = vadd.f32 %v257, %v268
      %v294 = vadd.f32 %v258, %v268
      %v295 = vadd.f32 %v259, %v268
      %v296 = vadd.f32 %v260, %v268
      %v297 = vadd.f32 %v261, %v268
      %v298 = vadd.f32 %v262, %v268
      %v299 = vadd.f32 %v263, %v268
      %v300 = vadd.f32 %v264, %v268
      %v301 = vadd.f32 %v265, %v268
      %v302 = vmax.f32 %v270, 0.0
      %v303 = vmax.f32 %v271, 0.0
      %v304 = vmax.f32 %v272, 0.0
      %v305 = vmax.f32 %v273, 0.0
      %v306 = vmax.f32 %v274, 0.0
      %v307 = vmax.f32 %v275, 0.0
      %v308 = vmax.f32 %v276, 0.0
      %v309 = vmax.f32 %v277, 0.0
      %v310 = vmax.f32 %v278, 0.0
      %v311 = vmax.f32 %v279, 0.0
      %v312 = vmax.f32 %v280, 0.0
      %v313 = vmax.f32 %v281, 0.0
      %v314 = vmax.f32 %v282, 0.0
      %v315 = vmax.f32 %v283, 0.0
      %v316 = vmax.f32 %v284, 0.0
      %v317 = vmax.f32 %v285, 0.0
      %v318 = vmax.f32 %v286, 0.0
      %v319 = vmax.f32 %v287, 0.0
      %v320 = vmax.f32 %v288, 0.0
      %v321 = vmax.f32 %v289, 0.0
      %v322 = vmax.f32 %v290, 0.0
      %v323 = vmax.f32 %v291, 0.0
      %v324 = vmax.f32 %v292, 0.0
      %v325 = vmax.f32 %v293, 0.0
      %v326 = vmax.f32 %v294, 0.0
      %v327 = vmax.f32 %v295, 0.0
      %v328 = vmax.f32 %v296, 0.0
      %v329 = vmax.f32 %v297, 0.0
      %v330 = vmax.f32 %v298, 0.0
      %v331 = vmax.f32 %v299, 0.0
      %v332 = vmax.f32 %v300, 0.0
      %v333 = vmax.f32 %v301, 0.0
      %v334 = vld [vmem:[%s3] sm:$0xf]
      %vm335 = vcmask 31744
      %v337 = vsel %vm335, %v302, 0
      %v340 = vsel %vm335, %v303, 0
      %v343 = vsel %vm335, %v304, 0
      %v346 = vsel %vm335, %v305, 0
      %v349 = vsel %vm335, %v306, 0
      %v352 = vsel %vm335, %v307, 0
      %v355 = vsel %vm335, %v308, 0
      %v358 = vsel %vm335, %v309, 0
      %v361 = vsel %vm335, %v310, 0
      %v364 = vsel %vm335, %v311, 0
      %v367 = vsel %vm335, %v312, 0
      %v370 = vsel %vm335, %v313, 0
      %v373 = vsel %vm335, %v314, 0
      %v376 = vsel %vm335, %v315, 0
      %v379 = vsel %vm335, %v316, 0
      %v382 = vsel %vm335, %v317, 0
      %v385 = vsel %vm335, %v318, 0
      %v388 = vsel %vm335, %v319, 0
      %v391 = vsel %vm335, %v320, 0
      %v394 = vsel %vm335, %v321, 0
      %v397 = vsel %vm335, %v322, 0
      %v400 = vsel %vm335, %v323, 0
      %v403 = vsel %vm335, %v324, 0
      %v406 = vsel %vm335, %v325, 0
      %v409 = vsel %vm335, %v326, 0
      %v412 = vsel %vm335, %v327, 0
      %v415 = vsel %vm335, %v328, 0
      %v418 = vsel %vm335, %v329, 0
      %v421 = vsel %vm335, %v330, 0
      %v424 = vsel %vm335, %v331, 0
      %v427 = vsel %vm335, %v332, 0
      %v430 = vsel %vm335, %v333, 0
      %vm432 = vcmask 1043456
      %v434 = vsel %vm432, %v334, 0
      %436 = vmatpush.msra.mxu0 0.0
      %437 = vmatpush.msra.mxu0 0.0
      %438 = vmatpush.msra.mxu0 0.0
      %439 = vmatpush.msra.mxu0 0.0
      %440 = vmatpush.msra.mxu0 0.0
      %441 = vmatpush.msra.mxu0 0.0
      %442 = vmatpush.msra.mxu0 0.0
      %443 = vmatpush.msra.mxu0 0.0
      %444 = vmatpush.msra.mxu0 0.0
      %445 = vmatpush.msra.mxu0 0.0
      %446 = vmatpush.msra.mxu0 0.0
      %447 = vmatpush.msra.mxu0 0.0
      %448 = vmatpush.msra.mxu0 0.0
      %449 = vmatpush.msra.mxu0 0.0
      %450 = vmatpush.msra.mxu0 0.0
      %451 = vmatpush.msra.mxu0 %v434
      %452 = vmatmul.f32.gmra.mxu0 %v337
      %v453 = vpop.f32.mrf.mxu0
      %v454 = vadd.f32 0.0, %v453
      %455 = vmatmul.f32.gmra.mxu0 %v340
      %v456 = vpop.f32.mrf.mxu0
      %v457 = vadd.f32 0.0, %v456
      %458 = vmatmul.f32.gmra.mxu0 %v343
      %v459 = vpop.f32.mrf.mxu0
      %v460 = vadd.f32 0.0, %v459
      %461 = vmatmul.f32.gmra.mxu0 %v346
      %v462 = vpop.f32.mrf.mxu0
      %v463 = vadd.f32 0.0, %v462
      %464 = vmatmul.f32.gmra.mxu0 %v349
      %v465 = vpop.f32.mrf.mxu0
      %v466 = vadd.f32 0.0, %v465
      %467 = vmatmul.f32.gmra.mxu0 %v352
      %v468 = vpop.f32.mrf.mxu0
      %v469 = vadd.f32 0.0, %v468
      %470 = vmatmul.f32.gmra.mxu0 %v355
      %v471 = vpop.f32.mrf.mxu0
      %v472 = vadd.f32 0.0, %v471
      %473 = vmatmul.f32.gmra.mxu0 %v358
      %v474 = vpop.f32.mrf.mxu0
      %v475 = vadd.f32 0.0, %v474
      %476 = vmatmul.f32.gmra.mxu0 %v361
      %v477 = vpop.f32.mrf.mxu0
      %v478 = vadd.f32 0.0, %v477
      %479 = vmatmul.f32.gmra.mxu0 %v364
      %v480 = vpop.f32.mrf.mxu0
      %v481 = vadd.f32 0.0, %v480
      %482 = vmatmul.f32.gmra.mxu0 %v367
      %v483 = vpop.f32.mrf.mxu0
      %v484 = vadd.f32 0.0, %v483
      %485 = vmatmul.f32.gmra.mxu0 %v370
      %v486 = vpop.f32.mrf.mxu0
      %v487 = vadd.f32 0.0, %v486
      %488 = vmatmul.f32.gmra.mxu0 %v373
      %v489 = vpop.f32.mrf.mxu0
      %v490 = vadd.f32 0.0, %v489
      %491 = vmatmul.f32.gmra.mxu0 %v376
      %v492 = vpop.f32.mrf.mxu0
      %v493 = vadd.f32 0.0, %v492
      %494 = vmatmul.f32.gmra.mxu0 %v379
      %v495 = vpop.f32.mrf.mxu0
      %v496 = vadd.f32 0.0, %v495
      %497 = vmatmul.f32.gmra.mxu0 %v382
      %v498 = vpop.f32.mrf.mxu0
      %v499 = vadd.f32 0.0, %v498
      %500 = vmatmul.f32.gmra.mxu0 %v385
      %v501 = vpop.f32.mrf.mxu0
      %v502 = vadd.f32 0.0, %v501
      %503 = vmatmul.f32.gmra.mxu0 %v388
      %v504 = vpop.f32.mrf.mxu0
      %v505 = vadd.f32 0.0, %v504
      %506 = vmatmul.f32.gmra.mxu0 %v391
      %v507 = vpop.f32.mrf.mxu0
      %v508 = vadd.f32 0.0, %v507
      %509 = vmatmul.f32.gmra.mxu0 %v394
      %v510 = vpop.f32.mrf.mxu0
      %v511 = vadd.f32 0.0, %v510
      %512 = vmatmul.f32.gmra.mxu0 %v397
      %v513 = vpop.f32.mrf.mxu0
      %v514 = vadd.f32 0.0, %v513
      %515 = vmatmul.f32.gmra.mxu0 %v400
      %v516 = vpop.f32.mrf.mxu0
      %v517 = vadd.f32 0.0, %v516
      %518 = vmatmul.f32.gmra.mxu0 %v403
      %v519 = vpop.f32.mrf.mxu0
      %v520 = vadd.f32 0.0, %v519
      %521 = vmatmul.f32.gmra.mxu0 %v406
      %v522 = vpop.f32.mrf.mxu0
      %v523 = vadd.f32 0.0, %v522
      %524 = vmatmul.f32.gmra.mxu0 %v409
      %v525 = vpop.f32.mrf.mxu0
      %v526 = vadd.f32 0.0, %v525
      %527 = vmatmul.f32.gmra.mxu0 %v412
      %v528 = vpop.f32.mrf.mxu0
      %v529 = vadd.f32 0.0, %v528
      %530 = vmatmul.f32.gmra.mxu0 %v415
      %v531 = vpop.f32.mrf.mxu0
      %v532 = vadd.f32 0.0, %v531
      %533 = vmatmul.f32.gmra.mxu0 %v418
      %v534 = vpop.f32.mrf.mxu0
      %v535 = vadd.f32 0.0, %v534
      %536 = vmatmul.f32.gmra.mxu0 %v421
      %v537 = vpop.f32.mrf.mxu0
      %v538 = vadd.f32 0.0, %v537
      %539 = vmatmul.f32.gmra.mxu0 %v424
      %v540 = vpop.f32.mrf.mxu0
      %v541 = vadd.f32 0.0, %v540
      %542 = vmatmul.f32.gmra.mxu0 %v427
      %v543 = vpop.f32.mrf.mxu0
      %v544 = vadd.f32 0.0, %v543
      %545 = vmatmul.f32.gmra.mxu0 %v430
      %v546 = vpop.f32.mrf.mxu0
      %v547 = vadd.f32 0.0, %v546
      %548 = vdwg.mxu0
      %vm549 = vcmask 130048
      %v550 = vsel %vm549, %v454, 0.0
      %v551 = vsel %vm549, %v457, 0.0
      %v552 = vadd.f32 %v550, %v551
      %v553 = vsel %vm549, %v460, 0.0
      %v554 = vadd.f32 %v552, %v553
      %v555 = vsel %vm549, %v463, 0.0
      %v556 = vadd.f32 %v554, %v555
      %v557 = vsel %vm549, %v466, 0.0
      %v558 = vadd.f32 %v556, %v557
      %v559 = vsel %vm549, %v469, 0.0
      %v560 = vadd.f32 %v558, %v559
      %v561 = vsel %vm549, %v472, 0.0
      %v562 = vadd.f32 %v560, %v561
      %v563 = vsel %vm549, %v475, 0.0
      %v564 = vadd.f32 %v562, %v563
      %v565 = vsel %vm549, %v478, 0.0
      %v566 = vadd.f32 %v564, %v565
      %v567 = vsel %vm549, %v481, 0.0
      %v568 = vadd.f32 %v566, %v567
      %v569 = vsel %vm549, %v484, 0.0
      %v570 = vadd.f32 %v568, %v569
      %v571 = vsel %vm549, %v487, 0.0
      %v572 = vadd.f32 %v570, %v571
      %v573 = vsel %vm549, %v490, 0.0
      %v574 = vadd.f32 %v572, %v573
      %v575 = vsel %vm549, %v493, 0.0
      %v576 = vadd.f32 %v574, %v575
      %v577 = vsel %vm549, %v496, 0.0
      %v578 = vadd.f32 %v576, %v577
      %v579 = vsel %vm549, %v499, 0.0
      %v580 = vadd.f32 %v578, %v579
      %v581 = vsel %vm549, %v502, 0.0
      %v582 = vadd.f32 %v580, %v581
      %v583 = vsel %vm549, %v505, 0.0
      %v584 = vadd.f32 %v582, %v583
      %v585 = vsel %vm549, %v508, 0.0
      %v586 = vadd.f32 %v584, %v585
      %v587 = vsel %vm549, %v511, 0.0
      %v588 = vadd.f32 %v586, %v587
      %v589 = vsel %vm549, %v514, 0.0
      %v590 = vadd.f32 %v588, %v589
      %v591 = vsel %vm549, %v517, 0.0
      %v592 = vadd.f32 %v590, %v591
      %v593 = vsel %vm549, %v520, 0.0
      %v594 = vadd.f32 %v592, %v593
      %v595 = vsel %vm549, %v523, 0.0
      %v596 = vadd.f32 %v594, %v595
      %v597 = vsel %vm549, %v526, 0.0
      %v598 = vadd.f32 %v596, %v597
      %v599 = vsel %vm549, %v529, 0.0
      %v600 = vadd.f32 %v598, %v599
      %v601 = vsel %vm549, %v532, 0.0
      %v602 = vadd.f32 %v600, %v601
      %v603 = vsel %vm549, %v535, 0.0
      %v604 = vadd.f32 %v602, %v603
      %v605 = vsel %vm549, %v538, 0.0
      %v606 = vadd.f32 %v604, %v605
      %v607 = vsel %vm549, %v541, 0.0
      %v608 = vadd.f32 %v606, %v607
      %v609 = vsel %vm549, %v544, 0.0
      %v610 = vadd.f32 %v608, %v609
      %v611 = vsel %vm549, %v547, 0.0
      %v612 = vadd.f32 %v610, %v611
      %v613 = vrot.slane %v612, 4
      %v614 = vadd.f32 %v612, %v613
      %v615 = vrot.slane %v614, 2
      %v616 = vadd.f32 %v614, %v615
      %v617 = vrot.slane %v616, 1
      %v618 = vadd.f32 %v616, %v617
      %v619 = vmul.f32 %v454, %v454
      %v620 = vmul.f32 %v457, %v457
      %v621 = vmul.f32 %v460, %v460
      %v622 = vmul.f32 %v463, %v463
      %v623 = vmul.f32 %v466, %v466
      %v624 = vmul.f32 %v469, %v469
      %v625 = vmul.f32 %v472, %v472
      %v626 = vmul.f32 %v475, %v475
      %v627 = vmul.f32 %v478, %v478
      %v628 = vmul.f32 %v481, %v481
      %v629 = vmul.f32 %v484, %v484
      %v630 = vmul.f32 %v487, %v487
      %v631 = vmul.f32 %v490, %v490
      %v632 = vmul.f32 %v493, %v493
      %v633 = vmul.f32 %v496, %v496
      %v634 = vmul.f32 %v499, %v499
      %v635 = vmul.f32 %v502, %v502
      %v636 = vmul.f32 %v505, %v505
      %v637 = vmul.f32 %v508, %v508
      %v638 = vmul.f32 %v511, %v511
      %v639 = vmul.f32 %v514, %v514
      %v640 = vmul.f32 %v517, %v517
      %v641 = vmul.f32 %v520, %v520
      %v642 = vmul.f32 %v523, %v523
      %v643 = vmul.f32 %v526, %v526
      %v644 = vmul.f32 %v529, %v529
      %v645 = vmul.f32 %v532, %v532
      %v646 = vmul.f32 %v535, %v535
      %v647 = vmul.f32 %v538, %v538
      %v648 = vmul.f32 %v541, %v541
      %v649 = vmul.f32 %v544, %v544
      %v650 = vmul.f32 %v547, %v547
      %v651 = vsel %vm549, %v619, 0.0
      %v652 = vsel %vm549, %v620, 0.0
      %v653 = vadd.f32 %v651, %v652
      %v654 = vsel %vm549, %v621, 0.0
      %v655 = vadd.f32 %v653, %v654
      %v656 = vsel %vm549, %v622, 0.0
      %v657 = vadd.f32 %v655, %v656
      %v658 = vsel %vm549, %v623, 0.0
      %v659 = vadd.f32 %v657, %v658
      %v660 = vsel %vm549, %v624, 0.0
      %v661 = vadd.f32 %v659, %v660
      %v662 = vsel %vm549, %v625, 0.0
      %v663 = vadd.f32 %v661, %v662
      %v664 = vsel %vm549, %v626, 0.0
      %v665 = vadd.f32 %v663, %v664
      %v666 = vsel %vm549, %v627, 0.0
      %v667 = vadd.f32 %v665, %v666
      %v668 = vsel %vm549, %v628, 0.0
      %v669 = vadd.f32 %v667, %v668
      %v670 = vsel %vm549, %v629, 0.0
      %v671 = vadd.f32 %v669, %v670
      %v672 = vsel %vm549, %v630, 0.0
      %v673 = vadd.f32 %v671, %v672
      %v674 = vsel %vm549, %v631, 0.0
      %v675 = vadd.f32 %v673, %v674
      %v676 = vsel %vm549, %v632, 0.0
      %v677 = vadd.f32 %v675, %v676
      %v678 = vsel %vm549, %v633, 0.0
      %v679 = vadd.f32 %v677, %v678
      %v680 = vsel %vm549, %v634, 0.0
      %v681 = vadd.f32 %v679, %v680
      %v682 = vsel %vm549, %v635, 0.0
      %v683 = vadd.f32 %v681, %v682
      %v684 = vsel %vm549, %v636, 0.0
      %v685 = vadd.f32 %v683, %v684
      %v686 = vsel %vm549, %v637, 0.0
      %v687 = vadd.f32 %v685, %v686
      %v688 = vsel %vm549, %v638, 0.0
      %v689 = vadd.f32 %v687, %v688
      %v690 = vsel %vm549, %v639, 0.0
      %v691 = vadd.f32 %v689, %v690
      %v692 = vsel %vm549, %v640, 0.0
      %v693 = vadd.f32 %v691, %v692
      %v694 = vsel %vm549, %v641, 0.0
      %v695 = vadd.f32 %v693, %v694
      %v696 = vsel %vm549, %v642, 0.0
      %v697 = vadd.f32 %v695, %v696
      %v698 = vsel %vm549, %v643, 0.0
      %v699 = vadd.f32 %v697, %v698
      %v700 = vsel %vm549, %v644, 0.0
      %v701 = vadd.f32 %v699, %v700
      %v702 = vsel %vm549, %v645, 0.0
      %v703 = vadd.f32 %v701, %v702
      %v704 = vsel %vm549, %v646, 0.0
      %v705 = vadd.f32 %v703, %v704
      %v706 = vsel %vm549, %v647, 0.0
      %v707 = vadd.f32 %v705, %v706
      %v708 = vsel %vm549, %v648, 0.0
      %v709 = vadd.f32 %v707, %v708
      %v710 = vsel %vm549, %v649, 0.0
      %v711 = vadd.f32 %v709, %v710
      %v712 = vsel %vm549, %v650, 0.0
      %v713 = vadd.f32 %v711, %v712
      %v714 = vrot.slane %v713, 4
      %v715 = vadd.f32 %v713, %v714
      %v716 = vrot.slane %v715, 2
      %v717 = vadd.f32 %v715, %v716
      %v718 = vrot.slane %v717, 1
      %v719 = vadd.f32 %v717, %v718
      %vm720 = vcmask 1040384
      %v721 = vsel %vm720, %v618, %v719
      %vm722 = vcmask 123904
      %723 = vst.msk [vmem:[%s197] sm:$0x3] %vm722, %v721
      %p724 = scmp.lt.s32.totalorder %s15, 1
      %s725 = scalar_select %p724, %s15, 1
      %s726 = smul.addr %s725, 2
      %s727 = scalar_lea.vmem %s4, %s726
      // Predicated region
      $region37: #{bottleneck_forward.6} parent=35 // pred_check
        %p728 = pneg %p122
      $region38: #{bottleneck_forward.6} parent=35 // pred_check_branch
        %730 = sbr.rel (%p728) target = $region40
      $region39: #{bottleneck_forward.6} parent=35 // pred_region
        _
      $region40: #{bottleneck_forward.6} parent=35 // pred_fallthru
        _
    $region36: #{bottleneck_forward.6} parent=5 // pred_fallthru
      _
    %p731 = scmp.le.s32.totalorder 2, %s10
    // Predicated region
    $region41: #{bottleneck_forward.6} parent=5 // pred_check
      %p732 = pneg %p731
    $region42: #{bottleneck_forward.6} parent=5 // pred_check_branch
      %734 = sbr.rel (%p732) target = $region44
    $region43: #{bottleneck_forward.6} parent=5 // pred_region
      %s735 = ssub.s32 %s10, 2
      // Predicated region
      $region45: #{bottleneck_forward.6} parent=43 // pred_check
        %p736 = pneg %p128
      $region46: #{bottleneck_forward.6} parent=43 // pred_check_branch
        %738 = sbr.rel (%p736) target = $region48
      $region47: #{bottleneck_forward.6} parent=43 // pred_region
        %p739 = scmp.lt.s32.totalorder %s16, 1
        %s740 = scalar_select %p739, %s16, 1
        %s741 = smul.addr %s740, 2
        %s742 = scalar_lea.vmem %s4, %s741
      $region48: #{bottleneck_forward.6} parent=43 // pred_fallthru
        _
    $region44: #{bottleneck_forward.6} parent=5 // pred_fallthru
      _
  $region6: #{bottleneck_forward.6} parent=0 // loop_footer
    %s14 = sadd.s32 1, %s10
  $region7: #{bottleneck_forward.6} parent=0 // loop_footer_branch
    %9 = sbr.rel target = $region3
  $region8: #{bottleneck_forward.6} parent=0 // loop_exit
    _

// kernel: bottleneck_forward.4
$region0: #{bottleneck_forward.4}
  #allocation0 [shape = 'u32[]', space=smem, size = 0x4, offset = 0x4, fixed_abs, tag = 'smem constant byte address 0x4 - core index']
  #allocation1 [shape = 'u32[72,128]{1,0:T(1,128)}', space=vmem, size = 0x9000, scoped, tag = 'internal scratch']
  %s0 = inlined_call_operand.vmem [shape: f32[512,8], index: 0, kind: input, shape index: {}]
  %s1 = inlined_call_operand.vmem [shape: f32[8,4], index: 1, kind: input, shape index: {}]
  %s2 = inlined_call_operand.vmem [shape: f32[8,16], index: 2, kind: input, shape index: {}]
  %s3 = inlined_call_operand.vmem [shape: f32[512,4], index: 3, kind: output, shape index: {0}]
  %s4 = inlined_call_operand.vmem [shape: f32[2,2,4], index: 4, kind: output, shape index: {1}]
  %s5 = inlined_call_operand.vmem [shape: f32[512,16], index: 5, kind: output, shape index: {2}]
  %s6 = inlined_call_operand.vmem [shape: f32[2,2,16], index: 6, kind: output, shape index: {3}]
  %7 = xla_tuple %s3, %s4, %s5, %s6
  %s8 = sld [smem:[#allocation0]]
  $region69: #{bottleneck_forward.4} parent=0
    _
  %s10 = ssub.s32 1, %s8
  %s11 = scalar_select 0, %s10, %s8
  loop: start=0, step=1, limit=4
  $region2: #{bottleneck_forward.4} parent=0 // loop_pre_header
    _
  $region3: #{bottleneck_forward.4} parent=0 // loop_header
    %s13 = sphi 0, %s17
    %p14 = scmp.ge.s32.totalorder %s13, 4
    %s23 = sphi 0, %s25
    %s26 = sphi 0, %s23
    %s27 = sphi 0, %s26
    %s43 = sphi 0, %s27
    %s47 = sphi 0, %s47
    %s49 = sphi 0, %s47
    %s50 = sphi 0, %s49
    %s64 = sphi 0, %s50
    %s68 = sphi 0, %s68
    %s70 = sphi 0, %s68
    %s71 = sphi 0, %s70
    %s85 = sphi 0, %s71
    %s91 = sphi 0, %s93
    %s94 = sphi 0, %s91
    %s95 = sphi 0, %s94
    %s111 = sphi 0, %s95
    %s117 = sphi 0, %s119
    %s120 = sphi 0, %s117
    %s121 = sphi 0, %s120
    %s137 = sphi 0, %s121
    %s143 = sphi 0, %s145
    %s146 = sphi 0, %s143
    %s147 = sphi 0, %s146
    %s163 = sphi 0, %s147
    %s169 = sphi 0, %s171
    %s172 = sphi 0, %s169
    %s173 = sphi 0, %s172
    %s189 = sphi 0, %s173
  $region4: #{bottleneck_forward.4} parent=0 // loop_header_branch
    %16 = sbr.rel (%p14) target = $region8
  $region5: #{bottleneck_forward.4} parent=0 // loop_body
    %s18 = ssub.s32 %s13, 1
    %s19 = ssub.s32 %s13, 2
    %s20 = sadd.s32 %s13, 1
    %s21 = ssub.s32 %s13, %s20
    %p22 = scmp.eq.s32.totalorder %s21, 0
    %s24 = sadd.s32 %s23, 1
    %s25 = scalar_select %p22, %s23, %s24
    %p28 = pneg %p22
    %p29 = scmp.eq.s32.totalorder %s13, 1
    %p30 = por %p28, %p29
    %p31 = scmp.ne.s32.totalorder %s23, %s26
    %p32 = scmp.eq.s32.totalorder %s13, 0
    %p33 = por %p31, %p32
    %p34 = scmp.ne.s32.totalorder %s23, %s26
    %p35 = scmp.eq.s32.totalorder %s18, 1
    %p36 = por %p34, %p35
    %p37 = scmp.ne.s32.totalorder %s26, %s27
    %p38 = scmp.eq.s32.totalorder %s18, 0
    %p39 = por %p37, %p38
    %p40 = scmp.ne.s32.totalorder %s26, %s27
    %p41 = scmp.eq.s32.totalorder %s19, 1
    %p42 = por %p40, %p41
    %p44 = scmp.ne.s32.totalorder %s27, %s43
    %p45 = scmp.eq.s32.totalorder %s19, 0
    %p46 = por %p44, %p45
    %s48 = sadd.s32 %s47, 1
    %p51 = scmp.eq.s32.totalorder %s13, 1
    %p52 = scmp.ne.s32.totalorder %s47, %s49
    %p53 = scmp.eq.s32.totalorder %s13, 0
    %p54 = por %p52, %p53
    %p55 = scmp.ne.s32.totalorder %s47, %s49
    %p56 = scmp.eq.s32.totalorder %s18, 1
    %p57 = por %p55, %p56
    %p58 = scmp.ne.s32.totalorder %s49, %s50
    %p59 = scmp.eq.s32.totalorder %s18, 0
    %p60 = por %p58, %p59
    %p61 = scmp.ne.s32.totalorder %s49, %s50
    %p62 = scmp.eq.s32.totalorder %s19, 1
    %p63 = por %p61, %p62
    %p65 = scmp.ne.s32.totalorder %s50, %s64
    %p66 = scmp.eq.s32.totalorder %s19, 0
    %p67 = por %p65, %p66
    %s69 = sadd.s32 %s68, 1
    %p72 = scmp.eq.s32.totalorder %s13, 1
    %p73 = scmp.ne.s32.totalorder %s68, %s70
    %p74 = scmp.eq.s32.totalorder %s13, 0
    %p75 = por %p73, %p74
    %p76 = scmp.ne.s32.totalorder %s68, %s70
    %p77 = scmp.eq.s32.totalorder %s18, 1
    %p78 = por %p76, %p77
    %p79 = scmp.ne.s32.totalorder %s70, %s71
    %p80 = scmp.eq.s32.totalorder %s18, 0
    %p81 = por %p79, %p80
    %p82 = scmp.ne.s32.totalorder %s70, %s71
    %p83 = scmp.eq.s32.totalorder %s19, 1
    %p84 = por %p82, %p83
    %p86 = scmp.ne.s32.totalorder %s71, %s85
    %p87 = scmp.eq.s32.totalorder %s19, 0
    %p88 = por %p86, %p87
    %s89 = ssub.s32 %s13, %s20
    %p90 = scmp.eq.s32.totalorder %s89, 0
    %s92 = sadd.s32 %s91, 1
    %s93 = scalar_select %p90, %s91, %s92
    %p96 = pneg %p90
    %p97 = scmp.eq.s32.totalorder %s13, 1
    %p98 = por %p96, %p97
    %p99 = scmp.ne.s32.totalorder %s91, %s94
    %p100 = scmp.eq.s32.totalorder %s13, 0
    %p101 = por %p99, %p100
    %p102 = scmp.ne.s32.totalorder %s91, %s94
    %p103 = scmp.eq.s32.totalorder %s18, 1
    %p104 = por %p102, %p103
    %p105 = scmp.ne.s32.totalorder %s94, %s95
    %p106 = scmp.eq.s32.totalorder %s18, 0
    %p107 = por %p105, %p106
    %p108 = scmp.ne.s32.totalorder %s94, %s95
    %p109 = scmp.eq.s32.totalorder %s19, 1
    %p110 = por %p108, %p109
    %p112 = scmp.ne.s32.totalorder %s95, %s111
    %p113 = scmp.eq.s32.totalorder %s19, 0
    %p114 = por %p112, %p113
    %s115 = ssub.s32 %s13, %s20
    %p116 = scmp.eq.s32.totalorder %s115, 0
    %s118 = sadd.s32 %s117, 1
    %s119 = scalar_select %p116, %s117, %s118
    %p122 = pneg %p116
    %p123 = scmp.eq.s32.totalorder %s13, 1
    %p124 = por %p122, %p123
    %p125 = scmp.ne.s32.totalorder %s117, %s120
    %p126 = scmp.eq.s32.totalorder %s13, 0
    %p127 = por %p125, %p126
    %p128 = scmp.ne.s32.totalorder %s117, %s120
    %p129 = scmp.eq.s32.totalorder %s18, 1
    %p130 = por %p128, %p129
    %p131 = scmp.ne.s32.totalorder %s120, %s121
    %p132 = scmp.eq.s32.totalorder %s18, 0
    %p133 = por %p131, %p132
    %p134 = scmp.ne.s32.totalorder %s120, %s121
    %p135 = scmp.eq.s32.totalorder %s19, 1
    %p136 = por %p134, %p135
    %p138 = scmp.ne.s32.totalorder %s121, %s137
    %p139 = scmp.eq.s32.totalorder %s19, 0
    %p140 = por %p138, %p139
    %s141 = ssub.s32 %s13, %s20
    %p142 = scmp.eq.s32.totalorder %s141, 0
    %s144 = sadd.s32 %s143, 1
    %s145 = scalar_select %p142, %s143, %s144
    %p148 = pneg %p142
    %p149 = scmp.eq.s32.totalorder %s13, 1
    %p150 = por %p148, %p149
    %p151 = scmp.ne.s32.totalorder %s143, %s146
    %p152 = scmp.eq.s32.totalorder %s13, 0
    %p153 = por %p151, %p152
    %p154 = scmp.ne.s32.totalorder %s143, %s146
    %p155 = scmp.eq.s32.totalorder %s18, 1
    %p156 = por %p154, %p155
    %p157 = scmp.ne.s32.totalorder %s146, %s147
    %p158 = scmp.eq.s32.totalorder %s18, 0
    %p159 = por %p157, %p158
    %p160 = scmp.ne.s32.totalorder %s146, %s147
    %p161 = scmp.eq.s32.totalorder %s19, 1
    %p162 = por %p160, %p161
    %p164 = scmp.ne.s32.totalorder %s147, %s163
    %p165 = scmp.eq.s32.totalorder %s19, 0
    %p166 = por %p164, %p165
    %s167 = ssub.s32 %s13, %s20
    %p168 = scmp.eq.s32.totalorder %s167, 0
    %s170 = sadd.s32 %s169, 1
    %s171 = scalar_select %p168, %s169, %s170
    %p174 = pneg %p168
    %p175 = scmp.eq.s32.totalorder %s13, 1
    %p176 = por %p174, %p175
    %p177 = scmp.ne.s32.totalorder %s169, %s172
    %p178 = scmp.eq.s32.totalorder %s13, 0
    %p179 = por %p177, %p178
    %p180 = scmp.ne.s32.totalorder %s169, %s172
    %p181 = scmp.eq.s32.totalorder %s18, 1
    %p182 = por %p180, %p181
    %p183 = scmp.ne.s32.totalorder %s172, %s173
    %p184 = scmp.eq.s32.totalorder %s18, 0
    %p185 = por %p183, %p184
    %p186 = scmp.ne.s32.totalorder %s172, %s173
    %p187 = scmp.eq.s32.totalorder %s19, 1
    %p188 = por %p186, %p187
    %p190 = scmp.ne.s32.totalorder %s173, %s189
    %p191 = scmp.eq.s32.totalorder %s19, 0
    %p192 = por %p190, %p191
    %p193 = scmp.le.s32.totalorder 1, %s13
    %p194 = scmp.lt.s32.totalorder %s13, 3
    %p195 = pnand %p193, %p194
    %p196 = pneg %p195
    // Predicated region
    $region9: #{bottleneck_forward.4} parent=5 // pred_check
      _
    $region10: #{bottleneck_forward.4} parent=5 // pred_check_branch
      %198 = sbr.rel (%p195) target = $region12
    $region11: #{bottleneck_forward.4} parent=5 // pred_region
      %s199 = ssub.s32 %s13, 1
      // Predicated region
      $region13: #{bottleneck_forward.4} parent=11 // pred_check
        %p200 = pneg %p60
      $region14: #{bottleneck_forward.4} parent=11 // pred_check_branch
        %202 = sbr.rel (%p200) target = $region16
      $region15: #{bottleneck_forward.4} parent=11 // pred_region
        _
      $region16: #{bottleneck_forward.4} parent=11 // pred_fallthru
        _
      // Predicated region
      $region17: #{bottleneck_forward.4} parent=11 // pred_check
        %p203 = pneg %p81
      $region18: #{bottleneck_forward.4} parent=11 // pred_check_branch
        %205 = sbr.rel (%p203) target = $region20
      $region19: #{bottleneck_forward.4} parent=11 // pred_region
        _
      $region20: #{bottleneck_forward.4} parent=11 // pred_fallthru
        _
    $region12: #{bottleneck_forward.4} parent=5 // pred_fallthru
      _
    %p206 = scmp.lt.s32.totalorder %s13, 2
    // Predicated region
    $region21: #{bottleneck_forward.4} parent=5 // pred_check
      %p207 = pneg %p206
    $region22: #{bottleneck_forward.4} parent=5 // pred_check_branch
      %209 = sbr.rel (%p207) target = $region24
    $region23: #{bottleneck_forward.4} parent=5 // pred_region
      // Predicated region
      $region25: #{bottleneck_forward.4} parent=23 // pred_check
        %p210 = pneg %p33
      $region26: #{bottleneck_forward.4} parent=23 // pred_check_branch
        %212 = sbr.rel (%p210) target = $region28
      $region27: #{bottleneck_forward.4} parent=23 // pred_region
        %s213 = smul.u32 32, %s13
        %p214 = scmp.lt.s32.totalorder %s213, 63
        %s215 = scalar_select %p214, %s213, 63
        %s216 = smul.addr %s215, 8
        %s217 = scalar_lea.vmem %s0, %s216
        %s218 = smul.u32 32, %s13
      $region28: #{bottleneck_forward.4} parent=23 // pred_fallthru
        _
    $region24: #{bottleneck_forward.4} parent=5 // pred_fallthru
      _
    %p219 = scmp.le.s32.totalorder 1, %s13
    %p220 = scmp.lt.s32.totalorder %s13, 3
    %p221 = pnand %p219, %p220
    %p222 = pneg %p221
    // Predicated region
    $region29: #{bottleneck_forward.4} parent=5 // pred_check
      _
    $region30: #{bottleneck_forward.4} parent=5 // pred_check_branch
      %224 = sbr.rel (%p221) target = $region32
    $region31: #{bottleneck_forward.4} parent=5 // pred_region
      %s225 = ssub.s32 %s13, 1
      %s226 = smul.u32 32, %s18
      %p227 = scmp.lt.s32.totalorder %s226, 63
      %s228 = scalar_select %p227, %s226, 63
      %s229 = smul.addr %s228, 8
      %s230 = scalar_lea.vmem %s0, %s229
      %p231 = pneg %p39
      %p232 = pneg %p36
      %p233 = pneg %p60
      %p234 = pneg %p57
      %p235 = pneg %p81
      %p236 = pneg %p78
      %p237 = pneg %p107
      %p238 = pneg %p104
      %s239 = smul.u32 32, %s18
      %p240 = scmp.lt.s32.totalorder %s239, 63
      %s241 = scalar_select %p240, %s239, 63
      %s242 = smul.addr %s241, 8
      %s243 = scalar_lea.vmem %s3, %s242
      %p244 = pneg %p133
      %p245 = pneg %p130
      %p246 = scmp.lt.s32.totalorder %s18, 1
      %s247 = scalar_select %p246, %s18, 1
      %s248 = smul.addr %s247, 2
      %s249 = scalar_lea.vmem %s4, %s248
      %p250 = pneg %p159
      %p251 = pneg %p156
      %s252 = smul.u32 32, %s18
      %p253 = scmp.lt.s32.totalorder %s252, 63
      %s254 = scalar_select %p253, %s252, 63
      %s255 = smul.addr %s254, 8
      %s256 = scalar_lea.vmem %s5, %s255
      %p257 = pneg %p185
      %p258 = pneg %p182
      %p259 = scmp.lt.s32.totalorder %s18, 1
      %s260 = scalar_select %p259, %s18, 1
      %s261 = smul.addr %s260, 2
      %s262 = scalar_lea.vmem %s6, %s261
      %s263 = smul.u32 32, %s18
      %p264 = scmp.lt.s32.totalorder %s263, 63
      %s265 = scalar_select %p264, %s263, 63
      %s266 = smul.addr %s265, 8
      %s267 = scalar_lea.vmem %s0, %s266
      %s268 = smul.u32 32, %s18
      %s269 = smul.u32 32, %s18
      %p270 = scmp.lt.s32.totalorder %s269, 63
      %s271 = scalar_select %p270, %s269, 63
      %s272 = smul.addr %s271, 8
      %s273 = scalar_lea.vmem %s3, %s272
      %s274 = smul.u32 32, %s18
      %p275 = scmp.lt.s32.totalorder %s18, 1
      %s276 = scalar_select %p275, %s18, 1
      %s277 = smul.addr %s276, 2
      %s278 = scalar_lea.vmem %s4, %s277
      %s279 = smul.u32 32, %s18
      %p280 = scmp.lt.s32.totalorder %s279, 63
      %s281 = scalar_select %p280, %s279, 63
      %s282 = smul.addr %s281, 8
      %s283 = scalar_lea.vmem %s5, %s282
      %s284 = smul.u32 32, %s18
      %p285 = scmp.lt.s32.totalorder %s18, 1
      %s286 = scalar_select %p285, %s18, 1
      %s287 = smul.addr %s286, 2
      %s288 = scalar_lea.vmem %s6, %s287
      %v289 = vld [vmem:[%s267] sm:$0xff]
      %v290 = vld [vmem:[%s267 + $0x8] sm:$0xff]
      %v291 = vld [vmem:[%s267 + $0x10] sm:$0xff]
      %v292 = vld [vmem:[%s267 + $0x18] sm:$0xff]
      %v293 = vld [vmem:[%s267 + $0x20] sm:$0xff]
      %v294 = vld [vmem:[%s267 + $0x28] sm:$0xff]
      %v295 = vld [vmem:[%s267 + $0x30] sm:$0xff]
      %v296 = vld [vmem:[%s267 + $0x38] sm:$0xff]
      %v297 = vld [vmem:[%s267 + $0x40] sm:$0xff]
      %v298 = vld [vmem:[%s267 + $0x48] sm:$0xff]
      %v299 = vld [vmem:[%s267 + $0x50] sm:$0xff]
      %v300 = vld [vmem:[%s267 + $0x58] sm:$0xff]
      %v301 = vld [vmem:[%s267 + $0x60] sm:$0xff]
      %v302 = vld [vmem:[%s267 + $0x68] sm:$0xff]
      %v303 = vld [vmem:[%s267 + $0x70] sm:$0xff]
      %v304 = vld [vmem:[%s267 + $0x78] sm:$0xff]
      %v305 = vld [vmem:[%s267 + $0x80] sm:$0xff]
      %v306 = vld [vmem:[%s267 + $0x88] sm:$0xff]
      %v307 = vld [vmem:[%s267 + $0x90] sm:$0xff]
      %v308 = vld [vmem:[%s267 + $0x98] sm:$0xff]
      %v309 = vld [vmem:[%s267 + $0xa0] sm:$0xff]
      %v310 = vld [vmem:[%s267 + $0xa8] sm:$0xff]
      %v311 = vld [vmem:[%s267 + $0xb0] sm:$0xff]
      %v312 = vld [vmem:[%s267 + $0xb8] sm:$0xff]
      %v313 = vld [vmem:[%s267 + $0xc0] sm:$0xff]
      %v314 = vld [vmem:[%s267 + $0xc8] sm:$0xff]
      %v315 = vld [vmem:[%s267 + $0xd0] sm:$0xff]
      %v316 = vld [vmem:[%s267 + $0xd8] sm:$0xff]
      %v317 = vld [vmem:[%s267 + $0xe0] sm:$0xff]
      %v318 = vld [vmem:[%s267 + $0xe8] sm:$0xff]
      %v319 = vld [vmem:[%s267 + $0xf0] sm:$0xff]
      %v320 = vld [vmem:[%s267 + $0xf8] sm:$0xff]
      %v321 = vld [vmem:[%s1] sm:$0xff]
      %vm322 = vcmask 64512
      %v324 = vsel %vm322, %v289, 0
      %v327 = vsel %vm322, %v290, 0
      %v330 = vsel %vm322, %v291, 0
      %v333 = vsel %vm322, %v292, 0
      %v336 = vsel %vm322, %v293, 0
      %v339 = vsel %vm322, %v294, 0
      %v342 = vsel %vm322, %v295, 0
      %v345 = vsel %vm322, %v296, 0
      %v348 = vsel %vm322, %v297, 0
      %v351 = vsel %vm322, %v298, 0
      %v354 = vsel %vm322, %v299, 0
      %v357 = vsel %vm322, %v300, 0
      %v360 = vsel %vm322, %v301, 0
      %v363 = vsel %vm322, %v302, 0
      %v366 = vsel %vm322, %v303, 0
      %v369 = vsel %vm322, %v304, 0
      %v372 = vsel %vm322, %v305, 0
      %v375 = vsel %vm322, %v306, 0
      %v378 = vsel %vm322, %v307, 0
      %v381 = vsel %vm322, %v308, 0
      %v384 = vsel %vm322, %v309, 0
      %v387 = vsel %vm322, %v310, 0
      %v390 = vsel %vm322, %v311, 0
      %v393 = vsel %vm322, %v312, 0
      %v396 = vsel %vm322, %v313, 0
      %v399 = vsel %vm322, %v314, 0
      %v402 = vsel %vm322, %v315, 0
      %v405 = vsel %vm322, %v316, 0
      %v408 = vsel %vm322, %v317, 0
      %v411 = vsel %vm322, %v318, 0
      %v414 = vsel %vm322, %v319, 0
      %v417 = vsel %vm322, %v320, 0
      %419 = vmatpush.msra.mxu0 0.0
      %420 = vmatpush.msra.mxu0 0.0
      %421 = vmatpush.msra.mxu0 0.0
      %422 = vmatpush.msra.mxu0 0.0
      %423 = vmatpush.msra.mxu0 0.0
      %424 = vmatpush.msra.mxu0 0.0
      %425 = vmatpush.msra.mxu0 0.0
      %426 = vmatpush.msra.mxu0 0.0
      %427 = vmatpush.msra.mxu0 0.0
      %428 = vmatpush.msra.mxu0 0.0
      %429 = vmatpush.msra.mxu0 0.0
      %430 = vmatpush.msra.mxu0 0.0
      %431 = vmatpush.msra.mxu0 0.0
      %432 = vmatpush.msra.mxu0 0.0
      %433 = vmatpush.msra.mxu0 0.0
      %434 = vmatpush.msra.mxu0 %v321
      %435 = vmatmul.f32.gmra.mxu0 %v324
      %v436 = vpop.f32.mrf.mxu0
      %v437 = vadd.f32 0.0, %v436
      %438 = vmatmul.f32.gmra.mxu0 %v327
      %v439 = vpop.f32.mrf.mxu0
      %v440 = vadd.f32 0.0, %v439
      %441 = vmatmul.f32.gmra.mxu0 %v330
      %v442 = vpop.f32.mrf.mxu0
      %v443 = vadd.f32 0.0, %v442
      %444 = vmatmul.f32.gmra.mxu0 %v333
      %v445 = vpop.f32.mrf.mxu0
      %v446 = vadd.f32 0.0, %v445
      %447 = vmatmul.f32.gmra.mxu0 %v336
      %v448 = vpop.f32.mrf.mxu0
      %v449 = vadd.f32 0.0, %v448
      %450 = vmatmul.f32.gmra.mxu0 %v339
      %v451 = vpop.f32.mrf.mxu0
      %v452 = vadd.f32 0.0, %v451
      %453 = vmatmul.f32.gmra.mxu0 %v342
      %v454 = vpop.f32.mrf.mxu0
      %v455 = vadd.f32 0.0, %v454
      %456 = vmatmul.f32.gmra.mxu0 %v345
      %v457 = vpop.f32.mrf.mxu0
      %v458 = vadd.f32 0.0, %v457
      %459 = vmatmul.f32.gmra.mxu0 %v348
      %v460 = vpop.f32.mrf.mxu0
      %v461 = vadd.f32 0.0, %v460
      %462 = vmatmul.f32.gmra.mxu0 %v351
      %v463 = vpop.f32.mrf.mxu0
      %v464 = vadd.f32 0.0, %v463
      %465 = vmatmul.f32.gmra.mxu0 %v354
      %v466 = vpop.f32.mrf.mxu0
      %v467 = vadd.f32 0.0, %v466
      %468 = vmatmul.f32.gmra.mxu0 %v357
      %v469 = vpop.f32.mrf.mxu0
      %v470 = vadd.f32 0.0, %v469
      %471 = vmatmul.f32.gmra.mxu0 %v360
      %v472 = vpop.f32.mrf.mxu0
      %v473 = vadd.f32 0.0, %v472
      %474 = vmatmul.f32.gmra.mxu0 %v363
      %v475 = vpop.f32.mrf.mxu0
      %v476 = vadd.f32 0.0, %v475
      %477 = vmatmul.f32.gmra.mxu0 %v366
      %v478 = vpop.f32.mrf.mxu0
      %v479 = vadd.f32 0.0, %v478
      %480 = vmatmul.f32.gmra.mxu0 %v369
      %v481 = vpop.f32.mrf.mxu0
      %v482 = vadd.f32 0.0, %v481
      %483 = vmatmul.f32.gmra.mxu0 %v372
      %v484 = vpop.f32.mrf.mxu0
      %v485 = vadd.f32 0.0, %v484
      %486 = vmatmul.f32.gmra.mxu0 %v375
      %v487 = vpop.f32.mrf.mxu0
      %v488 = vadd.f32 0.0, %v487
      %489 = vmatmul.f32.gmra.mxu0 %v378
      %v490 = vpop.f32.mrf.mxu0
      %v491 = vadd.f32 0.0, %v490
      %492 = vmatmul.f32.gmra.mxu0 %v381
      %v493 = vpop.f32.mrf.mxu0
      %v494 = vadd.f32 0.0, %v493
      %495 = vmatmul.f32.gmra.mxu0 %v384
      %v496 = vpop.f32.mrf.mxu0
      %v497 = vadd.f32 0.0, %v496
      %498 = vmatmul.f32.gmra.mxu0 %v387
      %v499 = vpop.f32.mrf.mxu0
      %v500 = vadd.f32 0.0, %v499
      %501 = vmatmul.f32.gmra.mxu0 %v390
      %v502 = vpop.f32.mrf.mxu0
      %v503 = vadd.f32 0.0, %v502
      %504 = vmatmul.f32.gmra.mxu0 %v393
      %v505 = vpop.f32.mrf.mxu0
      %v506 = vadd.f32 0.0, %v505
      %507 = vmatmul.f32.gmra.mxu0 %v396
      %v508 = vpop.f32.mrf.mxu0
      %v509 = vadd.f32 0.0, %v508
      %510 = vmatmul.f32.gmra.mxu0 %v399
      %v511 = vpop.f32.mrf.mxu0
      %v512 = vadd.f32 0.0, %v511
      %513 = vmatmul.f32.gmra.mxu0 %v402
      %v514 = vpop.f32.mrf.mxu0
      %v515 = vadd.f32 0.0, %v514
      %516 = vmatmul.f32.gmra.mxu0 %v405
      %v517 = vpop.f32.mrf.mxu0
      %v518 = vadd.f32 0.0, %v517
      %519 = vmatmul.f32.gmra.mxu0 %v408
      %v520 = vpop.f32.mrf.mxu0
      %v521 = vadd.f32 0.0, %v520
      %522 = vmatmul.f32.gmra.mxu0 %v411
      %v523 = vpop.f32.mrf.mxu0
      %v524 = vadd.f32 0.0, %v523
      %525 = vmatmul.f32.gmra.mxu0 %v414
      %v526 = vpop.f32.mrf.mxu0
      %v527 = vadd.f32 0.0, %v526
      %528 = vmatmul.f32.gmra.mxu0 %v417
      %v529 = vpop.f32.mrf.mxu0
      %v530 = vadd.f32 0.0, %v529
      %531 = vdwg.mxu0
      %vm532 = vcmask 31744
      %533 = vst.msk [vmem:[%s273] sm:$0xff] %vm532, %v437
      %534 = vst.msk [vmem:[%s273 + $0x8] sm:$0xff] %vm532, %v440
      %535 = vst.msk [vmem:[%s273 + $0x10] sm:$0xff] %vm532, %v443
      %536 = vst.msk [vmem:[%s273 + $0x18] sm:$0xff] %vm532, %v446
      %537 = vst.msk [vmem:[%s273 + $0x20] sm:$0xff] %vm532, %v449
      %538 = vst.msk [vmem:[%s273 + $0x28] sm:$0xff] %vm532, %v452
      %539 = vst.msk [vmem:[%s273 + $0x30] sm:$0xff] %vm532, %v455
      %540 = vst.msk [vmem:[%s273 + $0x38] sm:$0xff] %vm532, %v458
      %541 = vst.msk [vmem:[%s273 + $0x40] sm:$0xff] %vm532, %v461
      %542 = vst.msk [vmem:[%s273 + $0x48] sm:$0xff] %vm532, %v464
      %543 = vst.msk [vmem:[%s273 + $0x50] sm:$0xff] %vm532, %v467
      %544 = vst.msk [vmem:[%s273 + $0x58] sm:$0xff] %vm532, %v470
      %545 = vst.msk [vmem:[%s273 + $0x60] sm:$0xff] %vm532, %v473
      %546 = vst.msk [vmem:[%s273 + $0x68] sm:$0xff] %vm532, %v476
      %547 = vst.msk [vmem:[%s273 + $0x70] sm:$0xff] %vm532, %v479
      %548 = vst.msk [vmem:[%s273 + $0x78] sm:$0xff] %vm532, %v482
      %549 = vst.msk [vmem:[%s273 + $0x80] sm:$0xff] %vm532, %v485
      %550 = vst.msk [vmem:[%s273 + $0x88] sm:$0xff] %vm532, %v488
      %551 = vst.msk [vmem:[%s273 + $0x90] sm:$0xff] %vm532, %v491
      %552 = vst.msk [vmem:[%s273 + $0x98] sm:$0xff] %vm532, %v494
      %553 = vst.msk [vmem:[%s273 + $0xa0] sm:$0xff] %vm532, %v497
      %554 = vst.msk [vmem:[%s273 + $0xa8] sm:$0xff] %vm532, %v500
      %555 = vst.msk [vmem:[%s273 + $0xb0] sm:$0xff] %vm532, %v503
      %556 = vst.msk [vmem:[%s273 + $0xb8] sm:$0xff] %vm532, %v506
      %557 = vst.msk [vmem:[%s273 + $0xc0] sm:$0xff] %vm532, %v509
      %558 = vst.msk [vmem:[%s273 + $0xc8] sm:$0xff] %vm532, %v512
      %559 = vst.msk [vmem:[%s273 + $0xd0] sm:$0xff] %vm532, %v515
      %560 = vst.msk [vmem:[%s273 + $0xd8] sm:$0xff] %vm532, %v518
      %561 = vst.msk [vmem:[%s273 + $0xe0] sm:$0xff] %vm532, %v521
      %562 = vst.msk [vmem:[%s273 + $0xe8] sm:$0xff] %vm532, %v524
      %563 = vst.msk [vmem:[%s273 + $0xf0] sm:$0xff] %vm532, %v527
      %564 = vst.msk [vmem:[%s273 + $0xf8] sm:$0xff] %vm532, %v530
      %v565 = vsel %vm532, %v437, 0.0
      %v566 = vsel %vm532, %v440, 0.0
      %v567 = vadd.f32 %v565, %v566
      %v568 = vsel %vm532, %v443, 0.0
      %v569 = vadd.f32 %v567, %v568
      %v570 = vsel %vm532, %v446, 0.0
      %v571 = vadd.f32 %v569, %v570
      %v572 = vsel %vm532, %v449, 0.0
      %v573 = vadd.f32 %v571, %v572
      %v574 = vsel %vm532, %v452, 0.0
      %v575 = vadd.f32 %v573, %v574
      %v576 = vsel %vm532, %v455, 0.0
      %v577 = vadd.f32 %v575, %v576
      %v578 = vsel %vm532, %v458, 0.0
      %v579 = vadd.f32 %v577, %v578
      %v580 = vsel %vm532, %v461, 0.0
      %v581 = vadd.f32 %v579, %v580
      %v582 = vsel %vm532, %v464, 0.0
      %v583 = vadd.f32 %v581, %v582
      %v584 = vsel %vm532, %v467, 0.0
      %v585 = vadd.f32 %v583, %v584
      %v586 = vsel %vm532, %v470, 0.0
      %v587 = vadd.f32 %v585, %v586
      %v588 = vsel %vm532, %v473, 0.0
      %v589 = vadd.f32 %v587, %v588
      %v590 = vsel %vm532, %v476, 0.0
      %v591 = vadd.f32 %v589, %v590
      %v592 = vsel %vm532, %v479, 0.0
      %v593 = vadd.f32 %v591, %v592
      %v594 = vsel %vm532, %v482, 0.0
      %v595 = vadd.f32 %v593, %v594
      %v596 = vsel %vm532, %v485, 0.0
      %v597 = vadd.f32 %v595, %v596
      %v598 = vsel %vm532, %v488, 0.0
      %v599 = vadd.f32 %v597, %v598
      %v600 = vsel %vm532, %v491, 0.0
      %v601 = vadd.f32 %v599, %v600
      %v602 = vsel %vm532, %v494, 0.0
      %v603 = vadd.f32 %v601, %v602
      %v604 = vsel %vm532, %v497, 0.0
      %v605 = vadd.f32 %v603, %v604
      %v606 = vsel %vm532, %v500, 0.0
      %v607 = vadd.f32 %v605, %v606
      %v608 = vsel %vm532, %v503, 0.0
      %v609 = vadd.f32 %v607, %v608
      %v610 = vsel %vm532, %v506, 0.0
      %v611 = vadd.f32 %v609, %v610
      %v612 = vsel %vm532, %v509, 0.0
      %v613 = vadd.f32 %v611, %v612
      %v614 = vsel %vm532, %v512, 0.0
      %v615 = vadd.f32 %v613, %v614
      %v616 = vsel %vm532, %v515, 0.0
      %v617 = vadd.f32 %v615, %v616
      %v618 = vsel %vm532, %v518, 0.0
      %v619 = vadd.f32 %v617, %v618
      %v620 = vsel %vm532, %v521, 0.0
      %v621 = vadd.f32 %v619, %v620
      %v622 = vsel %vm532, %v524, 0.0
      %v623 = vadd.f32 %v621, %v622
      %v624 = vsel %vm532, %v527, 0.0
      %v625 = vadd.f32 %v623, %v624
      %v626 = vsel %vm532, %v530, 0.0
      %v627 = vadd.f32 %v625, %v626
      %v628 = vrot.slane %v627, 4
      %v629 = vadd.f32 %v627, %v628
      %v630 = vrot.slane %v629, 2
      %v631 = vadd.f32 %v629, %v630
      %v632 = vrot.slane %v631, 1
      %v633 = vadd.f32 %v631, %v632
      %v634 = vmul.f32 %v437, %v437
      %v635 = vmul.f32 %v440, %v440
      %v636 = vmul.f32 %v443, %v443
      %v637 = vmul.f32 %v446, %v446
      %v638 = vmul.f32 %v449, %v449
      %v639 = vmul.f32 %v452, %v452
      %v640 = vmul.f32 %v455, %v455
      %v641 = vmul.f32 %v458, %v458
      %v642 = vmul.f32 %v461, %v461
      %v643 = vmul.f32 %v464, %v464
      %v644 = vmul.f32 %v467, %v467
      %v645 = vmul.f32 %v470, %v470
      %v646 = vmul.f32 %v473, %v473
      %v647 = vmul.f32 %v476, %v476
      %v648 = vmul.f32 %v479, %v479
      %v649 = vmul.f32 %v482, %v482
      %v650 = vmul.f32 %v485, %v485
      %v651 = vmul.f32 %v488, %v488
      %v652 = vmul.f32 %v491, %v491
      %v653 = vmul.f32 %v494, %v494
      %v654 = vmul.f32 %v497, %v497
      %v655 = vmul.f32 %v500, %v500
      %v656 = vmul.f32 %v503, %v503
      %v657 = vmul.f32 %v506, %v506
      %v658 = vmul.f32 %v509, %v509
      %v659 = vmul.f32 %v512, %v512
      %v660 = vmul.f32 %v515, %v515
      %v661 = vmul.f32 %v518, %v518
      %v662 = vmul.f32 %v521, %v521
      %v663 = vmul.f32 %v524, %v524
      %v664 = vmul.f32 %v527, %v527
      %v665 = vmul.f32 %v530, %v530
      %v666 = vsel %vm532, %v634, 0.0
      %v667 = vsel %vm532, %v635, 0.0
      %v668 = vadd.f32 %v666, %v667
      %v669 = vsel %vm532, %v636, 0.0
      %v670 = vadd.f32 %v668, %v669
      %v671 = vsel %vm532, %v637, 0.0
      %v672 = vadd.f32 %v670, %v671
      %v673 = vsel %vm532, %v638, 0.0
      %v674 = vadd.f32 %v672, %v673
      %v675 = vsel %vm532, %v639, 0.0
      %v676 = vadd.f32 %v674, %v675
      %v677 = vsel %vm532, %v640, 0.0
      %v678 = vadd.f32 %v676, %v677
      %v679 = vsel %vm532, %v641, 0.0
      %v680 = vadd.f32 %v678, %v679
      %v681 = vsel %vm532, %v642, 0.0
      %v682 = vadd.f32 %v680, %v681
      %v683 = vsel %vm532, %v643, 0.0
      %v684 = vadd.f32 %v682, %v683
      %v685 = vsel %vm532, %v644, 0.0
      %v686 = vadd.f32 %v684, %v685
      %v687 = vsel %vm532, %v645, 0.0
      %v688 = vadd.f32 %v686, %v687
      %v689 = vsel %vm532, %v646, 0.0
      %v690 = vadd.f32 %v688, %v689
      %v691 = vsel %vm532, %v647, 0.0
      %v692 = vadd.f32 %v690, %v691
      %v693 = vsel %vm532, %v648, 0.0
      %v694 = vadd.f32 %v692, %v693
      %v695 = vsel %vm532, %v649, 0.0
      %v696 = vadd.f32 %v694, %v695
      %v697 = vsel %vm532, %v650, 0.0
      %v698 = vadd.f32 %v696, %v697
      %v699 = vsel %vm532, %v651, 0.0
      %v700 = vadd.f32 %v698, %v699
      %v701 = vsel %vm532, %v652, 0.0
      %v702 = vadd.f32 %v700, %v701
      %v703 = vsel %vm532, %v653, 0.0
      %v704 = vadd.f32 %v702, %v703
      %v705 = vsel %vm532, %v654, 0.0
      %v706 = vadd.f32 %v704, %v705
      %v707 = vsel %vm532, %v655, 0.0
      %v708 = vadd.f32 %v706, %v707
      %v709 = vsel %vm532, %v656, 0.0
      %v710 = vadd.f32 %v708, %v709
      %v711 = vsel %vm532, %v657, 0.0
      %v712 = vadd.f32 %v710, %v711
      %v713 = vsel %vm532, %v658, 0.0
      %v714 = vadd.f32 %v712, %v713
      %v715 = vsel %vm532, %v659, 0.0
      %v716 = vadd.f32 %v714, %v715
      %v717 = vsel %vm532, %v660, 0.0
      %v718 = vadd.f32 %v716, %v717
      %v719 = vsel %vm532, %v661, 0.0
      %v720 = vadd.f32 %v718, %v719
      %v721 = vsel %vm532, %v662, 0.0
      %v722 = vadd.f32 %v720, %v721
      %v723 = vsel %vm532, %v663, 0.0
      %v724 = vadd.f32 %v722, %v723
      %v725 = vsel %vm532, %v664, 0.0
      %v726 = vadd.f32 %v724, %v725
      %v727 = vsel %vm532, %v665, 0.0
      %v728 = vadd.f32 %v726, %v727
      %v729 = vrot.slane %v728, 4
      %v730 = vadd.f32 %v728, %v729
      %v731 = vrot.slane %v730, 2
      %v732 = vadd.f32 %v730, %v731
      %v733 = vrot.slane %v732, 1
      %v734 = vadd.f32 %v732, %v733
      %vm735 = vcmask 1040384
      %v736 = vsel %vm735, %v633, %v734
      %vm737 = vcmask 25600
      %738 = vst.msk [vmem:[%s278] sm:$0x3] %vm737, %v736
      %v739 = vld [vmem:[%s2] sm:$0xff]
      %740 = vmatpush.msra.mxu0 0.0
      %741 = vmatpush.msra.mxu0 0.0
      %742 = vmatpush.msra.mxu0 0.0
      %743 = vmatpush.msra.mxu0 0.0
      %744 = vmatpush.msra.mxu0 0.0
      %745 = vmatpush.msra.mxu0 0.0
      %746 = vmatpush.msra.mxu0 0.0
      %747 = vmatpush.msra.mxu0 0.0
      %748 = vmatpush.msra.mxu0 0.0
      %749 = vmatpush.msra.mxu0 0.0
      %750 = vmatpush.msra.mxu0 0.0
      %751 = vmatpush.msra.mxu0 0.0
      %752 = vmatpush.msra.mxu0 0.0
      %753 = vmatpush.msra.mxu0 0.0
      %754 = vmatpush.msra.mxu0 0.0
      %755 = vmatpush.msra.mxu0 %v739
      %756 = vmatmul.f32.gmra.mxu0 %v324
      %v757 = vpop.f32.mrf.mxu0
      %v758 = vadd.f32 0.0, %v757
      %759 = vmatmul.f32.gmra.mxu0 %v327
      %v760 = vpop.f32.mrf.mxu0
      %v761 = vadd.f32 0.0, %v760
      %762 = vmatmul.f32.gmra.mxu0 %v330
      %v763 = vpop.f32.mrf.mxu0
      %v764 = vadd.f32 0.0, %v763
      %765 = vmatmul.f32.gmra.mxu0 %v333
      %v766 = vpop.f32.mrf.mxu0
      %v767 = vadd.f32 0.0, %v766
      %768 = vmatmul.f32.gmra.mxu0 %v336
      %v769 = vpop.f32.mrf.mxu0
      %v770 = vadd.f32 0.0, %v769
      %771 = vmatmul.f32.gmra.mxu0 %v339
      %v772 = vpop.f32.mrf.mxu0
      %v773 = vadd.f32 0.0, %v772
      %774 = vmatmul.f32.gmra.mxu0 %v342
      %v775 = vpop.f32.mrf.mxu0
      %v776 = vadd.f32 0.0, %v775
      %777 = vmatmul.f32.gmra.mxu0 %v345
      %v778 = vpop.f32.mrf.mxu0
      %v779 = vadd.f32 0.0, %v778
      %780 = vmatmul.f32.gmra.mxu0 %v348
      %v781 = vpop.f32.mrf.mxu0
      %v782 = vadd.f32 0.0, %v781
      %783 = vmatmul.f32.gmra.mxu0 %v351
      %v784 = vpop.f32.mrf.mxu0
      %v785 = vadd.f32 0.0, %v784
      %786 = vmatmul.f32.gmra.mxu0 %v354
      %v787 = vpop.f32.mrf.mxu0
      %v788 = vadd.f32 0.0, %v787
      %789 = vmatmul.f32.gmra.mxu0 %v357
      %v790 = vpop.f32.mrf.mxu0
      %v791 = vadd.f32 0.0, %v790
      %792 = vmatmul.f32.gmra.mxu0 %v360
      %v793 = vpop.f32.mrf.mxu0
      %v794 = vadd.f32 0.0, %v793
      %795 = vmatmul.f32.gmra.mxu0 %v363
      %v796 = vpop.f32.mrf.mxu0
      %v797 = vadd.f32 0.0, %v796
      %798 = vmatmul.f32.gmra.mxu0 %v366
      %v799 = vpop.f32.mrf.mxu0
      %v800 = vadd.f32 0.0, %v799
      %801 = vmatmul.f32.gmra.mxu0 %v369
      %v802 = vpop.f32.mrf.mxu0
      %v803 = vadd.f32 0.0, %v802
      %804 = vmatmul.f32.gmra.mxu0 %v372
      %v805 = vpop.f32.mrf.mxu0
      %v806 = vadd.f32 0.0, %v805
      %807 = vmatmul.f32.gmra.mxu0 %v375
      %v808 = vpop.f32.mrf.mxu0
      %v809 = vadd.f32 0.0, %v808
      %810 = vmatmul.f32.gmra.mxu0 %v378
      %v811 = vpop.f32.mrf.mxu0
      %v812 = vadd.f32 0.0, %v811
      %813 = vmatmul.f32.gmra.mxu0 %v381
      %v814 = vpop.f32.mrf.mxu0
      %v815 = vadd.f32 0.0, %v814
      %816 = vmatmul.f32.gmra.mxu0 %v384
      %v817 = vpop.f32.mrf.mxu0
      %v818 = vadd.f32 0.0, %v817
      %819 = vmatmul.f32.gmra.mxu0 %v387
      %v820 = vpop.f32.mrf.mxu0
      %v821 = vadd.f32 0.0, %v820
      %822 = vmatmul.f32.gmra.mxu0 %v390
      %v823 = vpop.f32.mrf.mxu0
      %v824 = vadd.f32 0.0, %v823
      %825 = vmatmul.f32.gmra.mxu0 %v393
      %v826 = vpop.f32.mrf.mxu0
      %v827 = vadd.f32 0.0, %v826
      %828 = vmatmul.f32.gmra.mxu0 %v396
      %v829 = vpop.f32.mrf.mxu0
      %v830 = vadd.f32 0.0, %v829
      %831 = vmatmul.f32.gmra.mxu0 %v399
      %v832 = vpop.f32.mrf.mxu0
      %v833 = vadd.f32 0.0, %v832
      %834 = vmatmul.f32.gmra.mxu0 %v402
      %v835 = vpop.f32.mrf.mxu0
      %v836 = vadd.f32 0.0, %v835
      %837 = vmatmul.f32.gmra.mxu0 %v405
      %v838 = vpop.f32.mrf.mxu0
      %v839 = vadd.f32 0.0, %v838
      %840 = vmatmul.f32.gmra.mxu0 %v408
      %v841 = vpop.f32.mrf.mxu0
      %v842 = vadd.f32 0.0, %v841
      %843 = vmatmul.f32.gmra.mxu0 %v411
      %v844 = vpop.f32.mrf.mxu0
      %v845 = vadd.f32 0.0, %v844
      %846 = vmatmul.f32.gmra.mxu0 %v414
      %v847 = vpop.f32.mrf.mxu0
      %v848 = vadd.f32 0.0, %v847
      %849 = vmatmul.f32.gmra.mxu0 %v417
      %v850 = vpop.f32.mrf.mxu0
      %v851 = vadd.f32 0.0, %v850
      %852 = vdwg.mxu0
      %vm853 = vcmask 130048
      %854 = vst.msk [vmem:[%s283] sm:$0xff] %vm853, %v758
      %855 = vst.msk [vmem:[%s283 + $0x8] sm:$0xff] %vm853, %v761
      %856 = vst.msk [vmem:[%s283 + $0x10] sm:$0xff] %vm853, %v764
      %857 = vst.msk [vmem:[%s283 + $0x18] sm:$0xff] %vm853, %v767
      %858 = vst.msk [vmem:[%s283 + $0x20] sm:$0xff] %vm853, %v770
      %859 = vst.msk [vmem:[%s283 + $0x28] sm:$0xff] %vm853, %v773
      %860 = vst.msk [vmem:[%s283 + $0x30] sm:$0xff] %vm853, %v776
      %861 = vst.msk [vmem:[%s283 + $0x38] sm:$0xff] %vm853, %v779
      %862 = vst.msk [vmem:[%s283 + $0x40] sm:$0xff] %vm853, %v782
      %863 = vst.msk [vmem:[%s283 + $0x48] sm:$0xff] %vm853, %v785
      %864 = vst.msk [vmem:[%s283 + $0x50] sm:$0xff] %vm853, %v788
      %865 = vst.msk [vmem:[%s283 + $0x58] sm:$0xff] %vm853, %v791
      %866 = vst.msk [vmem:[%s283 + $0x60] sm:$0xff] %vm853, %v794
      %867 = vst.msk [vmem:[%s283 + $0x68] sm:$0xff] %vm853, %v797
      %868 = vst.msk [vmem:[%s283 + $0x70] sm:$0xff] %vm853, %v800
      %869 = vst.msk [vmem:[%s283 + $0x78] sm:$0xff] %vm853, %v803
      %870 = vst.msk [vmem:[%s283 + $0x80] sm:$0xff] %vm853, %v806
      %871 = vst.msk [vmem:[%s283 + $0x88] sm:$0xff] %vm853, %v809
      %872 = vst.msk [vmem:[%s283 + $0x90] sm:$0xff] %vm853, %v812
      %873 = vst.msk [vmem:[%s283 + $0x98] sm:$0xff] %vm853, %v815
      %874 = vst.msk [vmem:[%s283 + $0xa0] sm:$0xff] %vm853, %v818
      %875 = vst.msk [vmem:[%s283 + $0xa8] sm:$0xff] %vm853, %v821
      %876 = vst.msk [vmem:[%s283 + $0xb0] sm:$0xff] %vm853, %v824
      %877 = vst.msk [vmem:[%s283 + $0xb8] sm:$0xff] %vm853, %v827
      %878 = vst.msk [vmem:[%s283 + $0xc0] sm:$0xff] %vm853, %v830
      %879 = vst.msk [vmem:[%s283 + $0xc8] sm:$0xff] %vm853, %v833
      %880 = vst.msk [vmem:[%s283 + $0xd0] sm:$0xff] %vm853, %v836
      %881 = vst.msk [vmem:[%s283 + $0xd8] sm:$0xff] %vm853, %v839
      %882 = vst.msk [vmem:[%s283 + $0xe0] sm:$0xff] %vm853, %v842
      %883 = vst.msk [vmem:[%s283 + $0xe8] sm:$0xff] %vm853, %v845
      %884 = vst.msk [vmem:[%s283 + $0xf0] sm:$0xff] %vm853, %v848
      %885 = vst.msk [vmem:[%s283 + $0xf8] sm:$0xff] %vm853, %v851
      %v886 = vsel %vm853, %v758, 0.0
      %v887 = vsel %vm853, %v761, 0.0
      %v888 = vadd.f32 %v886, %v887
      %v889 = vsel %vm853, %v764, 0.0
      %v890 = vadd.f32 %v888, %v889
      %v891 = vsel %vm853, %v767, 0.0
      %v892 = vadd.f32 %v890, %v891
      %v893 = vsel %vm853, %v770, 0.0
      %v894 = vadd.f32 %v892, %v893
      %v895 = vsel %vm853, %v773, 0.0
      %v896 = vadd.f32 %v894, %v895
      %v897 = vsel %vm853, %v776, 0.0
      %v898 = vadd.f32 %v896, %v897
      %v899 = vsel %vm853, %v779, 0.0
      %v900 = vadd.f32 %v898, %v899
      %v901 = vsel %vm853, %v782, 0.0
      %v902 = vadd.f32 %v900, %v901
      %v903 = vsel %vm853, %v785, 0.0
      %v904 = vadd.f32 %v902, %v903
      %v905 = vsel %vm853, %v788, 0.0
      %v906 = vadd.f32 %v904, %v905
      %v907 = vsel %vm853, %v791, 0.0
      %v908 = vadd.f32 %v906, %v907
      %v909 = vsel %vm853, %v794, 0.0
      %v910 = vadd.f32 %v908, %v909
      %v911 = vsel %vm853, %v797, 0.0
      %v912 = vadd.f32 %v910, %v911
      %v913 = vsel %vm853, %v800, 0.0
      %v914 = vadd.f32 %v912, %v913
      %v915 = vsel %vm853, %v803, 0.0
      %v916 = vadd.f32 %v914, %v915
      %v917 = vsel %vm853, %v806, 0.0
      %v918 = vadd.f32 %v916, %v917
      %v919 = vsel %vm853, %v809, 0.0
      %v920 = vadd.f32 %v918, %v919
      %v921 = vsel %vm853, %v812, 0.0
      %v922 = vadd.f32 %v920, %v921
      %v923 = vsel %vm853, %v815, 0.0
      %v924 = vadd.f32 %v922, %v923
      %v925 = vsel %vm853, %v818, 0.0
      %v926 = vadd.f32 %v924, %v925
      %v927 = vsel %vm853, %v821, 0.0
      %v928 = vadd.f32 %v926, %v927
      %v929 = vsel %vm853, %v824, 0.0
      %v930 = vadd.f32 %v928, %v929
      %v931 = vsel %vm853, %v827, 0.0
      %v932 = vadd.f32 %v930, %v931
      %v933 = vsel %vm853, %v830, 0.0
      %v934 = vadd.f32 %v932, %v933
      %v935 = vsel %vm853, %v833, 0.0
      %v936 = vadd.f32 %v934, %v935
      %v937 = vsel %vm853, %v836, 0.0
      %v938 = vadd.f32 %v936, %v937
      %v939 = vsel %vm853, %v839, 0.0
      %v940 = vadd.f32 %v938, %v939
      %v941 = vsel %vm853, %v842, 0.0
      %v942 = vadd.f32 %v940, %v941
      %v943 = vsel %vm853, %v845, 0.0
      %v944 = vadd.f32 %v942, %v943
      %v945 = vsel %vm853, %v848, 0.0
      %v946 = vadd.f32 %v944, %v945
      %v947 = vsel %vm853, %v851, 0.0
      %v948 = vadd.f32 %v946, %v947
      %v949 = vrot.slane %v948, 4
      %v950 = vadd.f32 %v948, %v949
      %v951 = vrot.slane %v950, 2
      %v952 = vadd.f32 %v950, %v951
      %v953 = vrot.slane %v952, 1
      %v954 = vadd.f32 %v952, %v953
      %v955 = vmul.f32 %v758, %v758
      %v956 = vmul.f32 %v761, %v761
      %v957 = vmul.f32 %v764, %v764
      %v958 = vmul.f32 %v767, %v767
      %v959 = vmul.f32 %v770, %v770
      %v960 = vmul.f32 %v773, %v773
      %v961 = vmul.f32 %v776, %v776
      %v962 = vmul.f32 %v779, %v779
      %v963 = vmul.f32 %v782, %v782
      %v964 = vmul.f32 %v785, %v785
      %v965 = vmul.f32 %v788, %v788
      %v966 = vmul.f32 %v791, %v791
      %v967 = vmul.f32 %v794, %v794
      %v968 = vmul.f32 %v797, %v797
      %v969 = vmul.f32 %v800, %v800
      %v970 = vmul.f32 %v803, %v803
      %v971 = vmul.f32 %v806, %v806
      %v972 = vmul.f32 %v809, %v809
      %v973 = vmul.f32 %v812, %v812
      %v974 = vmul.f32 %v815, %v815
      %v975 = vmul.f32 %v818, %v818
      %v976 = vmul.f32 %v821, %v821
      %v977 = vmul.f32 %v824, %v824
      %v978 = vmul.f32 %v827, %v827
      %v979 = vmul.f32 %v830, %v830
      %v980 = vmul.f32 %v833, %v833
      %v981 = vmul.f32 %v836, %v836
      %v982 = vmul.f32 %v839, %v839
      %v983 = vmul.f32 %v842, %v842
      %v984 = vmul.f32 %v845, %v845
      %v985 = vmul.f32 %v848, %v848
      %v986 = vmul.f32 %v851, %v851
      %v987 = vsel %vm853, %v955, 0.0
      %v988 = vsel %vm853, %v956, 0.0
      %v989 = vadd.f32 %v987, %v988
      %v990 = vsel %vm853, %v957, 0.0
      %v991 = vadd.f32 %v989, %v990
      %v992 = vsel %vm853, %v958, 0.0
      %v993 = vadd.f32 %v991, %v992
      %v994 = vsel %vm853, %v959, 0.0
      %v995 = vadd.f32 %v993, %v994
      %v996 = vsel %vm853, %v960, 0.0
      %v997 = vadd.f32 %v995, %v996
      %v998 = vsel %vm853, %v961, 0.0
      %v999 = vadd.f32 %v997, %v998
      %v1000 = vsel %vm853, %v962, 0.0
      %v1001 = vadd.f32 %v999, %v1000
      %v1002 = vsel %vm853, %v963, 0.0
      %v1003 = vadd.f32 %v1001, %v1002
      %v1004 = vsel %vm853, %v964, 0.0
      %v1005 = vadd.f32 %v1003, %v1004
      %v1006 = vsel %vm853, %v965, 0.0
      %v1007 = vadd.f32 %v1005, %v1006
      %v1008 = vsel %vm853, %v966, 0.0
      %v1009 = vadd.f32 %v1007, %v1008
      %v1010 = vsel %vm853, %v967, 0.0
      %v1011 = vadd.f32 %v1009, %v1010
      %v1012 = vsel %vm853, %v968, 0.0
      %v1013 = vadd.f32 %v1011, %v1012
      %v1014 = vsel %vm853, %v969, 0.0
      %v1015 = vadd.f32 %v1013, %v1014
      %v1016 = vsel %vm853, %v970, 0.0
      %v1017 = vadd.f32 %v1015, %v1016
      %v1018 = vsel %vm853, %v971, 0.0
      %v1019 = vadd.f32 %v1017, %v1018
      %v1020 = vsel %vm853, %v972, 0.0
      %v1021 = vadd.f32 %v1019, %v1020
      %v1022 = vsel %vm853, %v973, 0.0
      %v1023 = vadd.f32 %v1021, %v1022
      %v1024 = vsel %vm853, %v974, 0.0
      %v1025 = vadd.f32 %v1023, %v1024
      %v1026 = vsel %vm853, %v975, 0.0
      %v1027 = vadd.f32 %v1025, %v1026
      %v1028 = vsel %vm853, %v976, 0.0
      %v1029 = vadd.f32 %v1027, %v1028
      %v1030 = vsel %vm853, %v977, 0.0
      %v1031 = vadd.f32 %v1029, %v1030
      %v1032 = vsel %vm853, %v978, 0.0
      %v1033 = vadd.f32 %v1031, %v1032
      %v1034 = vsel %vm853, %v979, 0.0
      %v1035 = vadd.f32 %v1033, %v1034
      %v1036 = vsel %vm853, %v980, 0.0
      %v1037 = vadd.f32 %v1035, %v1036
      %v1038 = vsel %vm853, %v981, 0.0
      %v1039 = vadd.f32 %v1037, %v1038
      %v1040 = vsel %vm853, %v982, 0.0
      %v1041 = vadd.f32 %v1039, %v1040
      %v1042 = vsel %vm853, %v983, 0.0
      %v1043 = vadd.f32 %v1041, %v1042
      %v1044 = vsel %vm853, %v984, 0.0
      %v1045 = vadd.f32 %v1043, %v1044
      %v1046 = vsel %vm853, %v985, 0.0
      %v1047 = vadd.f32 %v1045, %v1046
      %v1048 = vsel %vm853, %v986, 0.0
      %v1049 = vadd.f32 %v1047, %v1048
      %v1050 = vrot.slane %v1049, 4
      %v1051 = vadd.f32 %v1049, %v1050
      %v1052 = vrot.slane %v1051, 2
      %v1053 = vadd.f32 %v1051, %v1052
      %v1054 = vrot.slane %v1053, 1
      %v1055 = vadd.f32 %v1053, %v1054
      %v1056 = vsel %vm735, %v954, %v1055
      %vm1057 = vcmask 123904
      %1058 = vst.msk [vmem:[%s288] sm:$0x3] %vm1057, %v1056
      %s1059 = smul.u32 32, %s18
      %p1060 = scmp.lt.s32.totalorder %s1059, 63
      %s1061 = scalar_select %p1060, %s1059, 63
      %s1062 = smul.addr %s1061, 8
      %s1063 = scalar_lea.vmem %s3, %s1062
      %p1064 = scmp.lt.s32.totalorder %s18, 1
      %s1065 = scalar_select %p1064, %s18, 1
      %s1066 = smul.addr %s1065, 2
      %s1067 = scalar_lea.vmem %s4, %s1066
      %s1068 = smul.u32 32, %s18
      %p1069 = scmp.lt.s32.totalorder %s1068, 63
      %s1070 = scalar_select %p1069, %s1068, 63
      %s1071 = smul.addr %s1070, 8
      %s1072 = scalar_lea.vmem %s5, %s1071
      %p1073 = scmp.lt.s32.totalorder %s18, 1
      %s1074 = scalar_select %p1073, %s18, 1
      %s1075 = smul.addr %s1074, 2
      %s1076 = scalar_lea.vmem %s6, %s1075
      // Predicated region
      $region33: #{bottleneck_forward.4} parent=31 // pred_check
        %p1077 = pneg %p104
      $region34: #{bottleneck_forward.4} parent=31 // pred_check_branch
        %1079 = sbr.rel (%p1077) target = $region36
      $region35: #{bottleneck_forward.4} parent=31 // pred_region
        %s1080 = smul.u32 32, %s18
      $region36: #{bottleneck_forward.4} parent=31 // pred_fallthru
        _
      // Predicated region
      $region37: #{bottleneck_forward.4} parent=31 // pred_check
        %p1081 = pneg %p130
      $region38: #{bottleneck_forward.4} parent=31 // pred_check_branch
        %1083 = sbr.rel (%p1081) target = $region40
      $region39: #{bottleneck_forward.4} parent=31 // pred_region
        _
      $region40: #{bottleneck_forward.4} parent=31 // pred_fallthru
        _
      // Predicated region
      $region41: #{bottleneck_forward.4} parent=31 // pred_check
        %p1084 = pneg %p156
      $region42: #{bottleneck_forward.4} parent=31 // pred_check_branch
        %1086 = sbr.rel (%p1084) target = $region44
      $region43: #{bottleneck_forward.4} parent=31 // pred_region
        %s1087 = smul.u32 32, %s18
      $region44: #{bottleneck_forward.4} parent=31 // pred_fallthru
        _
      // Predicated region
      $region45: #{bottleneck_forward.4} parent=31 // pred_check
        %p1088 = pneg %p182
      $region46: #{bottleneck_forward.4} parent=31 // pred_check_branch
        %1090 = sbr.rel (%p1088) target = $region48
      $region47: #{bottleneck_forward.4} parent=31 // pred_region
        _
      $region48: #{bottleneck_forward.4} parent=31 // pred_fallthru
        _
    $region32: #{bottleneck_forward.4} parent=5 // pred_fallthru
      _
    %p1091 = scmp.le.s32.totalorder 2, %s13
    // Predicated region
    $region49: #{bottleneck_forward.4} parent=5 // pred_check
      %p1092 = pneg %p1091
    $region50: #{bottleneck_forward.4} parent=5 // pred_check_branch
      %1094 = sbr.rel (%p1092) target = $region52
    $region51: #{bottleneck_forward.4} parent=5 // pred_region
      %s1095 = ssub.s32 %s13, 2
      // Predicated region
      $region53: #{bottleneck_forward.4} parent=51 // pred_check
        %p1096 = pneg %p110
      $region54: #{bottleneck_forward.4} parent=51 // pred_check_branch
        %1098 = sbr.rel (%p1096) target = $region56
      $region55: #{bottleneck_forward.4} parent=51 // pred_region
        %s1099 = smul.u32 32, %s19
        %p1100 = scmp.lt.s32.totalorder %s1099, 63
        %s1101 = scalar_select %p1100, %s1099, 63
        %s1102 = smul.addr %s1101, 8
        %s1103 = scalar_lea.vmem %s3, %s1102
      $region56: #{bottleneck_forward.4} parent=51 // pred_fallthru
        _
      // Predicated region
      $region57: #{bottleneck_forward.4} parent=51 // pred_check
        %p1104 = pneg %p136
      $region58: #{bottleneck_forward.4} parent=51 // pred_check_branch
        %1106 = sbr.rel (%p1104) target = $region60
      $region59: #{bottleneck_forward.4} parent=51 // pred_region
        %p1107 = scmp.lt.s32.totalorder %s19, 1
        %s1108 = scalar_select %p1107, %s19, 1
        %s1109 = smul.addr %s1108, 2
        %s1110 = scalar_lea.vmem %s4, %s1109
      $region60: #{bottleneck_forward.4} parent=51 // pred_fallthru
        _
      // Predicated region
      $region61: #{bottleneck_forward.4} parent=51 // pred_check
        %p1111 = pneg %p162
      $region62: #{bottleneck_forward.4} parent=51 // pred_check_branch
        %1113 = sbr.rel (%p1111) target = $region64
      $region63: #{bottleneck_forward.4} parent=51 // pred_region
        %s1114 = smul.u32 32, %s19
        %p1115 = scmp.lt.s32.totalorder %s1114, 63
        %s1116 = scalar_select %p1115, %s1114, 63
        %s1117 = smul.addr %s1116, 8
        %s1118 = scalar_lea.vmem %s5, %s1117
      $region64: #{bottleneck_forward.4} parent=51 // pred_fallthru
        _
      // Predicated region
      $region65: #{bottleneck_forward.4} parent=51 // pred_check
        %p1119 = pneg %p188
      $region66: #{bottleneck_forward.4} parent=51 // pred_check_branch
        %1121 = sbr.rel (%p1119) target = $region68
      $region67: #{bottleneck_forward.4} parent=51 // pred_region
        %p1122 = scmp.lt.s32.totalorder %s19, 1
        %s1123 = scalar_select %p1122, %s19, 1
        %s1124 = smul.addr %s1123, 2
        %s1125 = scalar_lea.vmem %s6, %s1124
      $region68: #{bottleneck_forward.4} parent=51 // pred_fallthru
        _
    $region52: #{bottleneck_forward.4} parent=5 // pred_fallthru
      _
  $region6: #{bottleneck_forward.4} parent=0 // loop_footer
    %s17 = sadd.s32 1, %s13
  $region7: #{bottleneck_forward.4} parent=0 // loop_footer_branch
    %12 = sbr.rel target = $region3
  $region8: #{bottleneck_forward.4} parent=0 // loop_exit
    _

// kernel: bottleneck_forward.7
$region0: #{bottleneck_forward.7}
  #allocation0 [shape = 'u32[]', space=smem, size = 0x4, offset = 0x4, fixed_abs, tag = 'smem constant byte address 0x4 - core index']
  #allocation1 [shape = 'u32[72,128]{1,0:T(1,128)}', space=vmem, size = 0x9000, scoped, tag = 'internal scratch']
  %s0 = inlined_call_operand.vmem [shape: f32[512,4], index: 0, kind: input, shape index: {}]
  %s1 = inlined_call_operand.vmem [shape: f32[1,4], index: 1, kind: input, shape index: {}]
  %s2 = inlined_call_operand.vmem [shape: f32[1,4], index: 2, kind: input, shape index: {}]
  %s3 = inlined_call_operand.vmem [shape: f32[4,16], index: 3, kind: input, shape index: {}]
  %s4 = inlined_call_operand.vmem [shape: f32[1,16], index: 4, kind: input, shape index: {}]
  %s5 = inlined_call_operand.vmem [shape: f32[512,16], index: 5, kind: input, shape index: {}]
  %s6 = inlined_call_operand.vmem [shape: f32[1,16], index: 6, kind: input, shape index: {}]
  %s7 = inlined_call_operand.vmem [shape: f32[1,16], index: 7, kind: input, shape index: {}]
  %s8 = inlined_call_operand.vmem [shape: f32[512,16], index: 8, kind: output, shape index: {}]
  %s9 = sld [smem:[#allocation0]]
  $region65: #{bottleneck_forward.7} parent=0
    _
  %s11 = ssub.s32 1, %s9
  %s12 = scalar_select 0, %s11, %s9
  loop: start=0, step=1, limit=4
  $region2: #{bottleneck_forward.7} parent=0 // loop_pre_header
    _
  $region3: #{bottleneck_forward.7} parent=0 // loop_header
    %s14 = sphi 0, %s18
    %p15 = scmp.ge.s32.totalorder %s14, 4
    %s24 = sphi 0, %s26
    %s27 = sphi 0, %s24
    %s28 = sphi 0, %s27
    %s44 = sphi 0, %s28
    %s48 = sphi 0, %s48
    %s50 = sphi 0, %s48
    %s51 = sphi 0, %s50
    %s65 = sphi 0, %s51
    %s69 = sphi 0, %s69
    %s71 = sphi 0, %s69
    %s72 = sphi 0, %s71
    %s86 = sphi 0, %s72
    %s90 = sphi 0, %s90
    %s92 = sphi 0, %s90
    %s93 = sphi 0, %s92
    %s107 = sphi 0, %s93
    %s111 = sphi 0, %s111
    %s113 = sphi 0, %s111
    %s114 = sphi 0, %s113
    %s128 = sphi 0, %s114
    %s134 = sphi 0, %s136
    %s137 = sphi 0, %s134
    %s138 = sphi 0, %s137
    %s154 = sphi 0, %s138
    %s158 = sphi 0, %s158
    %s160 = sphi 0, %s158
    %s161 = sphi 0, %s160
    %s175 = sphi 0, %s161
    %s179 = sphi 0, %s179
    %s181 = sphi 0, %s179
    %s182 = sphi 0, %s181
    %s196 = sphi 0, %s182
    %s202 = sphi 0, %s204
    %s205 = sphi 0, %s202
    %s206 = sphi 0, %s205
    %s222 = sphi 0, %s206
  $region4: #{bottleneck_forward.7} parent=0 // loop_header_branch
    %17 = sbr.rel (%p15) target = $region8
  $region5: #{bottleneck_forward.7} parent=0 // loop_body
    %s19 = ssub.s32 %s14, 1
    %s20 = ssub.s32 %s14, 2
    %s21 = sadd.s32 %s14, 1
    %s22 = ssub.s32 %s14, %s21
    %p23 = scmp.eq.s32.totalorder %s22, 0
    %s25 = sadd.s32 %s24, 1
    %s26 = scalar_select %p23, %s24, %s25
    %p29 = pneg %p23
    %p30 = scmp.eq.s32.totalorder %s14, 1
    %p31 = por %p29, %p30
    %p32 = scmp.ne.s32.totalorder %s24, %s27
    %p33 = scmp.eq.s32.totalorder %s14, 0
    %p34 = por %p32, %p33
    %p35 = scmp.ne.s32.totalorder %s24, %s27
    %p36 = scmp.eq.s32.totalorder %s19, 1
    %p37 = por %p35, %p36
    %p38 = scmp.ne.s32.totalorder %s27, %s28
    %p39 = scmp.eq.s32.totalorder %s19, 0
    %p40 = por %p38, %p39
    %p41 = scmp.ne.s32.totalorder %s27, %s28
    %p42 = scmp.eq.s32.totalorder %s20, 1
    %p43 = por %p41, %p42
    %p45 = scmp.ne.s32.totalorder %s28, %s44
    %p46 = scmp.eq.s32.totalorder %s20, 0
    %p47 = por %p45, %p46
    %s49 = sadd.s32 %s48, 1
    %p52 = scmp.eq.s32.totalorder %s14, 1
    %p53 = scmp.ne.s32.totalorder %s48, %s50
    %p54 = scmp.eq.s32.totalorder %s14, 0
    %p55 = por %p53, %p54
    %p56 = scmp.ne.s32.totalorder %s48, %s50
    %p57 = scmp.eq.s32.totalorder %s19, 1
    %p58 = por %p56, %p57
    %p59 = scmp.ne.s32.totalorder %s50, %s51
    %p60 = scmp.eq.s32.totalorder %s19, 0
    %p61 = por %p59, %p60
    %p62 = scmp.ne.s32.totalorder %s50, %s51
    %p63 = scmp.eq.s32.totalorder %s20, 1
    %p64 = por %p62, %p63
    %p66 = scmp.ne.s32.totalorder %s51, %s65
    %p67 = scmp.eq.s32.totalorder %s20, 0
    %p68 = por %p66, %p67
    %s70 = sadd.s32 %s69, 1
    %p73 = scmp.eq.s32.totalorder %s14, 1
    %p74 = scmp.ne.s32.totalorder %s69, %s71
    %p75 = scmp.eq.s32.totalorder %s14, 0
    %p76 = por %p74, %p75
    %p77 = scmp.ne.s32.totalorder %s69, %s71
    %p78 = scmp.eq.s32.totalorder %s19, 1
    %p79 = por %p77, %p78
    %p80 = scmp.ne.s32.totalorder %s71, %s72
    %p81 = scmp.eq.s32.totalorder %s19, 0
    %p82 = por %p80, %p81
    %p83 = scmp.ne.s32.totalorder %s71, %s72
    %p84 = scmp.eq.s32.totalorder %s20, 1
    %p85 = por %p83, %p84
    %p87 = scmp.ne.s32.totalorder %s72, %s86
    %p88 = scmp.eq.s32.totalorder %s20, 0
    %p89 = por %p87, %p88
    %s91 = sadd.s32 %s90, 1
    %p94 = scmp.eq.s32.totalorder %s14, 1
    %p95 = scmp.ne.s32.totalorder %s90, %s92
    %p96 = scmp.eq.s32.totalorder %s14, 0
    %p97 = por %p95, %p96
    %p98 = scmp.ne.s32.totalorder %s90, %s92
    %p99 = scmp.eq.s32.totalorder %s19, 1
    %p100 = por %p98, %p99
    %p101 = scmp.ne.s32.totalorder %s92, %s93
    %p102 = scmp.eq.s32.totalorder %s19, 0
    %p103 = por %p101, %p102
    %p104 = scmp.ne.s32.totalorder %s92, %s93
    %p105 = scmp.eq.s32.totalorder %s20, 1
    %p106 = por %p104, %p105
    %p108 = scmp.ne.s32.totalorder %s93, %s107
    %p109 = scmp.eq.s32.totalorder %s20, 0
    %p110 = por %p108, %p109
    %s112 = sadd.s32 %s111, 1
    %p115 = scmp.eq.s32.totalorder %s14, 1
    %p116 = scmp.ne.s32.totalorder %s111, %s113
    %p117 = scmp.eq.s32.totalorder %s14, 0
    %p118 = por %p116, %p117
    %p119 = scmp.ne.s32.totalorder %s111, %s113
    %p120 = scmp.eq.s32.totalorder %s19, 1
    %p121 = por %p119, %p120
    %p122 = scmp.ne.s32.totalorder %s113, %s114
    %p123 = scmp.eq.s32.totalorder %s19, 0
    %p124 = por %p122, %p123
    %p125 = scmp.ne.s32.totalorder %s113, %s114
    %p126 = scmp.eq.s32.totalorder %s20, 1
    %p127 = por %p125, %p126
    %p129 = scmp.ne.s32.totalorder %s114, %s128
    %p130 = scmp.eq.s32.totalorder %s20, 0
    %p131 = por %p129, %p130
    %s132 = ssub.s32 %s14, %s21
    %p133 = scmp.eq.s32.totalorder %s132, 0
    %s135 = sadd.s32 %s134, 1
    %s136 = scalar_select %p133, %s134, %s135
    %p139 = pneg %p133
    %p140 = scmp.eq.s32.totalorder %s14, 1
    %p141 = por %p139, %p140
    %p142 = scmp.ne.s32.totalorder %s134, %s137
    %p143 = scmp.eq.s32.totalorder %s14, 0
    %p144 = por %p142, %p143
    %p145 = scmp.ne.s32.totalorder %s134, %s137
    %p146 = scmp.eq.s32.totalorder %s19, 1
    %p147 = por %p145, %p146
    %p148 = scmp.ne.s32.totalorder %s137, %s138
    %p149 = scmp.eq.s32.totalorder %s19, 0
    %p150 = por %p148, %p149
    %p151 = scmp.ne.s32.totalorder %s137, %s138
    %p152 = scmp.eq.s32.totalorder %s20, 1
    %p153 = por %p151, %p152
    %p155 = scmp.ne.s32.totalorder %s138, %s154
    %p156 = scmp.eq.s32.totalorder %s20, 0
    %p157 = por %p155, %p156
    %s159 = sadd.s32 %s158, 1
    %p162 = scmp.eq.s32.totalorder %s14, 1
    %p163 = scmp.ne.s32.totalorder %s158, %s160
    %p164 = scmp.eq.s32.totalorder %s14, 0
    %p165 = por %p163, %p164
    %p166 = scmp.ne.s32.totalorder %s158, %s160
    %p167 = scmp.eq.s32.totalorder %s19, 1
    %p168 = por %p166, %p167
    %p169 = scmp.ne.s32.totalorder %s160, %s161
    %p170 = scmp.eq.s32.totalorder %s19, 0
    %p171 = por %p169, %p170
    %p172 = scmp.ne.s32.totalorder %s160, %s161
    %p173 = scmp.eq.s32.totalorder %s20, 1
    %p174 = por %p172, %p173
    %p176 = scmp.ne.s32.totalorder %s161, %s175
    %p177 = scmp.eq.s32.totalorder %s20, 0
    %p178 = por %p176, %p177
    %s180 = sadd.s32 %s179, 1
    %p183 = scmp.eq.s32.totalorder %s14, 1
    %p184 = scmp.ne.s32.totalorder %s179, %s181
    %p185 = scmp.eq.s32.totalorder %s14, 0
    %p186 = por %p184, %p185
    %p187 = scmp.ne.s32.totalorder %s179, %s181
    %p188 = scmp.eq.s32.totalorder %s19, 1
    %p189 = por %p187, %p188
    %p190 = scmp.ne.s32.totalorder %s181, %s182
    %p191 = scmp.eq.s32.totalorder %s19, 0
    %p192 = por %p190, %p191
    %p193 = scmp.ne.s32.totalorder %s181, %s182
    %p194 = scmp.eq.s32.totalorder %s20, 1
    %p195 = por %p193, %p194
    %p197 = scmp.ne.s32.totalorder %s182, %s196
    %p198 = scmp.eq.s32.totalorder %s20, 0
    %p199 = por %p197, %p198
    %s200 = ssub.s32 %s14, %s21
    %p201 = scmp.eq.s32.totalorder %s200, 0
    %s203 = sadd.s32 %s202, 1
    %s204 = scalar_select %p201, %s202, %s203
    %p207 = pneg %p201
    %p208 = scmp.eq.s32.totalorder %s14, 1
    %p209 = por %p207, %p208
    %p210 = scmp.ne.s32.totalorder %s202, %s205
    %p211 = scmp.eq.s32.totalorder %s14, 0
    %p212 = por %p210, %p211
    %p213 = scmp.ne.s32.totalorder %s202, %s205
    %p214 = scmp.eq.s32.totalorder %s19, 1
    %p215 = por %p213, %p214
    %p216 = scmp.ne.s32.totalorder %s205, %s206
    %p217 = scmp.eq.s32.totalorder %s19, 0
    %p218 = por %p216, %p217
    %p219 = scmp.ne.s32.totalorder %s205, %s206
    %p220 = scmp.eq.s32.totalorder %s20, 1
    %p221 = por %p219, %p220
    %p223 = scmp.ne.s32.totalorder %s206, %s222
    %p224 = scmp.eq.s32.totalorder %s20, 0
    %p225 = por %p223, %p224
    %p226 = scmp.le.s32.totalorder 1, %s14
    %p227 = scmp.lt.s32.totalorder %s14, 3
    %p228 = pnand %p226, %p227
    %p229 = pneg %p228
    // Predicated region
    $region9: #{bottleneck_forward.7} parent=5 // pred_check
      _
    $region10: #{bottleneck_forward.7} parent=5 // pred_check_branch
      %231 = sbr.rel (%p228) target = $region12
    $region11: #{bottleneck_forward.7} parent=5 // pred_region
      %s232 = ssub.s32 %s14, 1
      // Predicated region
      $region13: #{bottleneck_forward.7} parent=11 // pred_check
        %p233 = pneg %p61
      $region14: #{bottleneck_forward.7} parent=11 // pred_check_branch
        %235 = sbr.rel (%p233) target = $region16
      $region15: #{bottleneck_forward.7} parent=11 // pred_region
        _
      $region16: #{bottleneck_forward.7} parent=11 // pred_fallthru
        _
      // Predicated region
      $region17: #{bottleneck_forward.7} parent=11 // pred_check
        %p236 = pneg %p82
      $region18: #{bottleneck_forward.7} parent=11 // pred_check_branch
        %238 = sbr.rel (%p236) target = $region20
      $region19: #{bottleneck_forward.7} parent=11 // pred_region
        _
      $region20: #{bottleneck_forward.7} parent=11 // pred_fallthru
        _
      // Predicated region
      $region21: #{bottleneck_forward.7} parent=11 // pred_check
        %p239 = pneg %p103
      $region22: #{bottleneck_forward.7} parent=11 // pred_check_branch
        %241 = sbr.rel (%p239) target = $region24
      $region23: #{bottleneck_forward.7} parent=11 // pred_region
        _
      $region24: #{bottleneck_forward.7} parent=11 // pred_fallthru
        _
      // Predicated region
      $region25: #{bottleneck_forward.7} parent=11 // pred_check
        %p242 = pneg %p124
      $region26: #{bottleneck_forward.7} parent=11 // pred_check_branch
        %244 = sbr.rel (%p242) target = $region28
      $region27: #{bottleneck_forward.7} parent=11 // pred_region
        _
      $region28: #{bottleneck_forward.7} parent=11 // pred_fallthru
        _
      // Predicated region
      $region29: #{bottleneck_forward.7} parent=11 // pred_check
        %p245 = pneg %p171
      $region30: #{bottleneck_forward.7} parent=11 // pred_check_branch
        %247 = sbr.rel (%p245) target = $region32
      $region31: #{bottleneck_forward.7} parent=11 // pred_region
        _
      $region32: #{bottleneck_forward.7} parent=11 // pred_fallthru
        _
      // Predicated region
      $region33: #{bottleneck_forward.7} parent=11 // pred_check
        %p248 = pneg %p192
      $region34: #{bottleneck_forward.7} parent=11 // pred_check_branch
        %250 = sbr.rel (%p248) target = $region36
      $region35: #{bottleneck_forward.7} parent=11 // pred_region
        _
      $region36: #{bottleneck_forward.7} parent=11 // pred_fallthru
        _
    $region12: #{bottleneck_forward.7} parent=5 // pred_fallthru
      _
    %p251 = scmp.lt.s32.totalorder %s14, 2
    // Predicated region
    $region37: #{bottleneck_forward.7} parent=5 // pred_check
      %p252 = pneg %p251
    $region38: #{bottleneck_forward.7} parent=5 // pred_check_branch
      %254 = sbr.rel (%p252) target = $region40
    $region39: #{bottleneck_forward.7} parent=5 // pred_region
      // Predicated region
      $region41: #{bottleneck_forward.7} parent=39 // pred_check
        %p255 = pneg %p34
      $region42: #{bottleneck_forward.7} parent=39 // pred_check_branch
        %257 = sbr.rel (%p255) target = $region44
      $region43: #{bottleneck_forward.7} parent=39 // pred_region
        %s258 = smul.u32 32, %s14
        %p259 = scmp.lt.s32.totalorder %s258, 63
        %s260 = scalar_select %p259, %s258, 63
        %s261 = smul.addr %s260, 8
        %s262 = scalar_lea.vmem %s0, %s261
        %s263 = smul.u32 32, %s14
      $region44: #{bottleneck_forward.7} parent=39 // pred_fallthru
        _
      // Predicated region
      $region45: #{bottleneck_forward.7} parent=39 // pred_check
        %p264 = pneg %p144
      $region46: #{bottleneck_forward.7} parent=39 // pred_check_branch
        %266 = sbr.rel (%p264) target = $region48
      $region47: #{bottleneck_forward.7} parent=39 // pred_region
        %s267 = smul.u32 32, %s14
        %p268 = scmp.lt.s32.totalorder %s267, 63
        %s269 = scalar_select %p268, %s267, 63
        %s270 = smul.addr %s269, 8
        %s271 = scalar_lea.vmem %s5, %s270
        %s272 = smul.u32 32, %s14
      $region48: #{bottleneck_forward.7} parent=39 // pred_fallthru
        _
    $region40: #{bottleneck_forward.7} parent=5 // pred_fallthru
      _
    %p273 = scmp.le.s32.totalorder 1, %s14
    %p274 = scmp.lt.s32.totalorder %s14, 3
    %p275 = pnand %p273, %p274
    %p276 = pneg %p275
    // Predicated region
    $region49: #{bottleneck_forward.7} parent=5 // pred_check
      _
    $region50: #{bottleneck_forward.7} parent=5 // pred_check_branch
      %278 = sbr.rel (%p275) target = $region52
    $region51: #{bottleneck_forward.7} parent=5 // pred_region
      %s279 = ssub.s32 %s14, 1
      %s280 = smul.u32 32, %s19
      %p281 = scmp.lt.s32.totalorder %s280, 63
      %s282 = scalar_select %p281, %s280, 63
      %s283 = smul.addr %s282, 8
      %s284 = scalar_lea.vmem %s0, %s283
      %p285 = pneg %p40
      %p286 = pneg %p37
      %p287 = pneg %p61
      %p288 = pneg %p58
      %p289 = pneg %p82
      %p290 = pneg %p79
      %p291 = pneg %p103
      %p292 = pneg %p100
      %p293 = pneg %p124
      %p294 = pneg %p121
      %s295 = smul.u32 32, %s19
      %p296 = scmp.lt.s32.totalorder %s295, 63
      %s297 = scalar_select %p296, %s295, 63
      %s298 = smul.addr %s297, 8
      %s299 = scalar_lea.vmem %s5, %s298
      %p300 = pneg %p150
      %p301 = pneg %p147
      %p302 = pneg %p171
      %p303 = pneg %p168
      %p304 = pneg %p192
      %p305 = pneg %p189
      %p306 = pneg %p218
      %p307 = pneg %p215
      %s308 = smul.u32 32, %s19
      %p309 = scmp.lt.s32.totalorder %s308, 63
      %s310 = scalar_select %p309, %s308, 63
      %s311 = smul.addr %s310, 8
      %s312 = scalar_lea.vmem %s8, %s311
      %s313 = smul.u32 32, %s19
      %p314 = scmp.lt.s32.totalorder %s313, 63
      %s315 = scalar_select %p314, %s313, 63
      %s316 = smul.addr %s315, 8
      %s317 = scalar_lea.vmem %s0, %s316
      %s318 = smul.u32 32, %s19
      %s319 = smul.u32 32, %s19
      %p320 = scmp.lt.s32.totalorder %s319, 63
      %s321 = scalar_select %p320, %s319, 63
      %s322 = smul.addr %s321, 8
      %s323 = scalar_lea.vmem %s5, %s322
      %s324 = smul.u32 32, %s19
      %s325 = smul.u32 32, %s19
      %p326 = scmp.lt.s32.totalorder %s325, 63
      %s327 = scalar_select %p326, %s325, 63
      %s328 = smul.addr %s327, 8
      %s329 = scalar_lea.vmem %s8, %s328
      %s330 = smul.u32 32, %s19
      %v331 = vld [vmem:[%s317] sm:$0xff]
      %v332 = vld [vmem:[%s317 + $0x8] sm:$0xff]
      %v333 = vld [vmem:[%s317 + $0x10] sm:$0xff]
      %v334 = vld [vmem:[%s317 + $0x18] sm:$0xff]
      %v335 = vld [vmem:[%s317 + $0x20] sm:$0xff]
      %v336 = vld [vmem:[%s317 + $0x28] sm:$0xff]
      %v337 = vld [vmem:[%s317 + $0x30] sm:$0xff]
      %v338 = vld [vmem:[%s317 + $0x38] sm:$0xff]
      %v339 = vld [vmem:[%s317 + $0x40] sm:$0xff]
      %v340 = vld [vmem:[%s317 + $0x48] sm:$0xff]
      %v341 = vld [vmem:[%s317 + $0x50] sm:$0xff]
      %v342 = vld [vmem:[%s317 + $0x58] sm:$0xff]
      %v343 = vld [vmem:[%s317 + $0x60] sm:$0xff]
      %v344 = vld [vmem:[%s317 + $0x68] sm:$0xff]
      %v345 = vld [vmem:[%s317 + $0x70] sm:$0xff]
      %v346 = vld [vmem:[%s317 + $0x78] sm:$0xff]
      %v347 = vld [vmem:[%s317 + $0x80] sm:$0xff]
      %v348 = vld [vmem:[%s317 + $0x88] sm:$0xff]
      %v349 = vld [vmem:[%s317 + $0x90] sm:$0xff]
      %v350 = vld [vmem:[%s317 + $0x98] sm:$0xff]
      %v351 = vld [vmem:[%s317 + $0xa0] sm:$0xff]
      %v352 = vld [vmem:[%s317 + $0xa8] sm:$0xff]
      %v353 = vld [vmem:[%s317 + $0xb0] sm:$0xff]
      %v354 = vld [vmem:[%s317 + $0xb8] sm:$0xff]
      %v355 = vld [vmem:[%s317 + $0xc0] sm:$0xff]
      %v356 = vld [vmem:[%s317 + $0xc8] sm:$0xff]
      %v357 = vld [vmem:[%s317 + $0xd0] sm:$0xff]
      %v358 = vld [vmem:[%s317 + $0xd8] sm:$0xff]
      %v359 = vld [vmem:[%s317 + $0xe0] sm:$0xff]
      %v360 = vld [vmem:[%s317 + $0xe8] sm:$0xff]
      %v361 = vld [vmem:[%s317 + $0xf0] sm:$0xff]
      %v362 = vld [vmem:[%s317 + $0xf8] sm:$0xff]
      %v363 = vld [vmem:[%s1] sm:$0x1]
      %v365 = vperm.slane %v363, 0
      %v367 = vmul.f32 %v331, %v365
      %v368 = vmul.f32 %v332, %v365
      %v369 = vmul.f32 %v333, %v365
      %v370 = vmul.f32 %v334, %v365
      %v371 = vmul.f32 %v335, %v365
      %v372 = vmul.f32 %v336, %v365
      %v373 = vmul.f32 %v337, %v365
      %v374 = vmul.f32 %v338, %v365
      %v375 = vmul.f32 %v339, %v365
      %v376 = vmul.f32 %v340, %v365
      %v377 = vmul.f32 %v341, %v365
      %v378 = vmul.f32 %v342, %v365
      %v379 = vmul.f32 %v343, %v365
      %v380 = vmul.f32 %v344, %v365
      %v381 = vmul.f32 %v345, %v365
      %v382 = vmul.f32 %v346, %v365
      %v383 = vmul.f32 %v347, %v365
      %v384 = vmul.f32 %v348, %v365
      %v385 = vmul.f32 %v349, %v365
      %v386 = vmul.f32 %v350, %v365
      %v387 = vmul.f32 %v351, %v365
      %v388 = vmul.f32 %v352, %v365
      %v389 = vmul.f32 %v353, %v365
      %v390 = vmul.f32 %v354, %v365
      %v391 = vmul.f32 %v355, %v365
      %v392 = vmul.f32 %v356, %v365
      %v393 = vmul.f32 %v357, %v365
      %v394 = vmul.f32 %v358, %v365
      %v395 = vmul.f32 %v359, %v365
      %v396 = vmul.f32 %v360, %v365
      %v397 = vmul.f32 %v361, %v365
      %v398 = vmul.f32 %v362, %v365
      %v399 = vld [vmem:[%s2] sm:$0x1]
      %v401 = vperm.slane %v399, 0
      %v403 = vadd.f32 %v367, %v401
      %v404 = vadd.f32 %v368, %v401
      %v405 = vadd.f32 %v369, %v401
      %v406 = vadd.f32 %v370, %v401
      %v407 = vadd.f32 %v371, %v401
      %v408 = vadd.f32 %v372, %v401
      %v409 = vadd.f32 %v373, %v401
      %v410 = vadd.f32 %v374, %v401
      %v411 = vadd.f32 %v375, %v401
      %v412 = vadd.f32 %v376, %v401
      %v413 = vadd.f32 %v377, %v401
      %v414 = vadd.f32 %v378, %v401
      %v415 = vadd.f32 %v379, %v401
      %v416 = vadd.f32 %v380, %v401
      %v417 = vadd.f32 %v381, %v401
      %v418 = vadd.f32 %v382, %v401
      %v419 = vadd.f32 %v383, %v401
      %v420 = vadd.f32 %v384, %v401
      %v421 = vadd.f32 %v385, %v401
      %v422 = vadd.f32 %v386, %v401
      %v423 = vadd.f32 %v387, %v401
      %v424 = vadd.f32 %v388, %v401
      %v425 = vadd.f32 %v389, %v401
      %v426 = vadd.f32 %v390, %v401
      %v427 = vadd.f32 %v391, %v401
      %v428 = vadd.f32 %v392, %v401
      %v429 = vadd.f32 %v393, %v401
      %v430 = vadd.f32 %v394, %v401
      %v431 = vadd.f32 %v395, %v401
      %v432 = vadd.f32 %v396, %v401
      %v433 = vadd.f32 %v397, %v401
      %v434 = vadd.f32 %v398, %v401
      %v435 = vmax.f32 %v403, 0.0
      %v436 = vmax.f32 %v404, 0.0
      %v437 = vmax.f32 %v405, 0.0
      %v438 = vmax.f32 %v406, 0.0
      %v439 = vmax.f32 %v407, 0.0
      %v440 = vmax.f32 %v408, 0.0
      %v441 = vmax.f32 %v409, 0.0
      %v442 = vmax.f32 %v410, 0.0
      %v443 = vmax.f32 %v411, 0.0
      %v444 = vmax.f32 %v412, 0.0
      %v445 = vmax.f32 %v413, 0.0
      %v446 = vmax.f32 %v414, 0.0
      %v447 = vmax.f32 %v415, 0.0
      %v448 = vmax.f32 %v416, 0.0
      %v449 = vmax.f32 %v417, 0.0
      %v450 = vmax.f32 %v418, 0.0
      %v451 = vmax.f32 %v419, 0.0
      %v452 = vmax.f32 %v420, 0.0
      %v453 = vmax.f32 %v421, 0.0
      %v454 = vmax.f32 %v422, 0.0
      %v455 = vmax.f32 %v423, 0.0
      %v456 = vmax.f32 %v424, 0.0
      %v457 = vmax.f32 %v425, 0.0
      %v458 = vmax.f32 %v426, 0.0
      %v459 = vmax.f32 %v427, 0.0
      %v460 = vmax.f32 %v428, 0.0
      %v461 = vmax.f32 %v429, 0.0
      %v462 = vmax.f32 %v430, 0.0
      %v463 = vmax.f32 %v431, 0.0
      %v464 = vmax.f32 %v432, 0.0
      %v465 = vmax.f32 %v433, 0.0
      %v466 = vmax.f32 %v434, 0.0
      %v467 = vld [vmem:[%s3] sm:$0xf]
      %v468 = vld [vmem:[%s4] sm:$0x1]
      %v470 = vperm.slane %v468, 0
      %vm472 = vcmask 31744
      %v474 = vsel %vm472, %v435, 0
      %v477 = vsel %vm472, %v436, 0
      %v480 = vsel %vm472, %v437, 0
      %v483 = vsel %vm472, %v438, 0
      %v486 = vsel %vm472, %v439, 0
      %v489 = vsel %vm472, %v440, 0
      %v492 = vsel %vm472, %v441, 0
      %v495 = vsel %vm472, %v442, 0
      %v498 = vsel %vm472, %v443, 0
      %v501 = vsel %vm472, %v444, 0
      %v504 = vsel %vm472, %v445, 0
      %v507 = vsel %vm472, %v446, 0
      %v510 = vsel %vm472, %v447, 0
      %v513 = vsel %vm472, %v448, 0
      %v516 = vsel %vm472, %v449, 0
      %v519 = vsel %vm472, %v450, 0
      %v522 = vsel %vm472, %v451, 0
      %v525 = vsel %vm472, %v452, 0
      %v528 = vsel %vm472, %v453, 0
      %v531 = vsel %vm472, %v454, 0
      %v534 = vsel %vm472, %v455, 0
      %v537 = vsel %vm472, %v456, 0
      %v540 = vsel %vm472, %v457, 0
      %v543 = vsel %vm472, %v458, 0
      %v546 = vsel %vm472, %v459, 0
      %v549 = vsel %vm472, %v460, 0
      %v552 = vsel %vm472, %v461, 0
      %v555 = vsel %vm472, %v462, 0
      %v558 = vsel %vm472, %v463, 0
      %v561 = vsel %vm472, %v464, 0
      %v564 = vsel %vm472, %v465, 0
      %v567 = vsel %vm472, %v466, 0
      %vm569 = vcmask 1043456
      %v571 = vsel %vm569, %v467, 0
      %573 = vmatpush.msra.mxu0 0.0
      %574 = vmatpush.msra.mxu0 0.0
      %575 = vmatpush.msra.mxu0 0.0
      %576 = vmatpush.msra.mxu0 0.0
      %577 = vmatpush.msra.mxu0 0.0
      %578 = vmatpush.msra.mxu0 0.0
      %579 = vmatpush.msra.mxu0 0.0
      %580 = vmatpush.msra.mxu0 0.0
      %581 = vmatpush.msra.mxu0 0.0
      %582 = vmatpush.msra.mxu0 0.0
      %583 = vmatpush.msra.mxu0 0.0
      %584 = vmatpush.msra.mxu0 0.0
      %585 = vmatpush.msra.mxu0 0.0
      %586 = vmatpush.msra.mxu0 0.0
      %587 = vmatpush.msra.mxu0 0.0
      %588 = vmatpush.msra.mxu0 %v571
      %589 = vmatmul.f32.gmra.mxu0 %v474
      %v590 = vpop.f32.mrf.mxu0
      %v591 = vadd.f32 %v470, %v590
      %592 = vmatmul.f32.gmra.mxu0 %v477
      %v593 = vpop.f32.mrf.mxu0
      %v594 = vadd.f32 %v470, %v593
      %595 = vmatmul.f32.gmra.mxu0 %v480
      %v596 = vpop.f32.mrf.mxu0
      %v597 = vadd.f32 %v470, %v596
      %598 = vmatmul.f32.gmra.mxu0 %v483
      %v599 = vpop.f32.mrf.mxu0
      %v600 = vadd.f32 %v470, %v599
      %601 = vmatmul.f32.gmra.mxu0 %v486
      %v602 = vpop.f32.mrf.mxu0
      %v603 = vadd.f32 %v470, %v602
      %604 = vmatmul.f32.gmra.mxu0 %v489
      %v605 = vpop.f32.mrf.mxu0
      %v606 = vadd.f32 %v470, %v605
      %607 = vmatmul.f32.gmra.mxu0 %v492
      %v608 = vpop.f32.mrf.mxu0
      %v609 = vadd.f32 %v470, %v608
      %610 = vmatmul.f32.gmra.mxu0 %v495
      %v611 = vpop.f32.mrf.mxu0
      %v612 = vadd.f32 %v470, %v611
      %613 = vmatmul.f32.gmra.mxu0 %v498
      %v614 = vpop.f32.mrf.mxu0
      %v615 = vadd.f32 %v470, %v614
      %616 = vmatmul.f32.gmra.mxu0 %v501
      %v617 = vpop.f32.mrf.mxu0
      %v618 = vadd.f32 %v470, %v617
      %619 = vmatmul.f32.gmra.mxu0 %v504
      %v620 = vpop.f32.mrf.mxu0
      %v621 = vadd.f32 %v470, %v620
      %622 = vmatmul.f32.gmra.mxu0 %v507
      %v623 = vpop.f32.mrf.mxu0
      %v624 = vadd.f32 %v470, %v623
      %625 = vmatmul.f32.gmra.mxu0 %v510
      %v626 = vpop.f32.mrf.mxu0
      %v627 = vadd.f32 %v470, %v626
      %628 = vmatmul.f32.gmra.mxu0 %v513
      %v629 = vpop.f32.mrf.mxu0
      %v630 = vadd.f32 %v470, %v629
      %631 = vmatmul.f32.gmra.mxu0 %v516
      %v632 = vpop.f32.mrf.mxu0
      %v633 = vadd.f32 %v470, %v632
      %634 = vmatmul.f32.gmra.mxu0 %v519
      %v635 = vpop.f32.mrf.mxu0
      %v636 = vadd.f32 %v470, %v635
      %637 = vmatmul.f32.gmra.mxu0 %v522
      %v638 = vpop.f32.mrf.mxu0
      %v639 = vadd.f32 %v470, %v638
      %640 = vmatmul.f32.gmra.mxu0 %v525
      %v641 = vpop.f32.mrf.mxu0
      %v642 = vadd.f32 %v470, %v641
      %643 = vmatmul.f32.gmra.mxu0 %v528
      %v644 = vpop.f32.mrf.mxu0
      %v645 = vadd.f32 %v470, %v644
      %646 = vmatmul.f32.gmra.mxu0 %v531
      %v647 = vpop.f32.mrf.mxu0
      %v648 = vadd.f32 %v470, %v647
      %649 = vmatmul.f32.gmra.mxu0 %v534
      %v650 = vpop.f32.mrf.mxu0
      %v651 = vadd.f32 %v470, %v650
      %652 = vmatmul.f32.gmra.mxu0 %v537
      %v653 = vpop.f32.mrf.mxu0
      %v654 = vadd.f32 %v470, %v653
      %655 = vmatmul.f32.gmra.mxu0 %v540
      %v656 = vpop.f32.mrf.mxu0
      %v657 = vadd.f32 %v470, %v656
      %658 = vmatmul.f32.gmra.mxu0 %v543
      %v659 = vpop.f32.mrf.mxu0
      %v660 = vadd.f32 %v470, %v659
      %661 = vmatmul.f32.gmra.mxu0 %v546
      %v662 = vpop.f32.mrf.mxu0
      %v663 = vadd.f32 %v470, %v662
      %664 = vmatmul.f32.gmra.mxu0 %v549
      %v665 = vpop.f32.mrf.mxu0
      %v666 = vadd.f32 %v470, %v665
      %667 = vmatmul.f32.gmra.mxu0 %v552
      %v668 = vpop.f32.mrf.mxu0
      %v669 = vadd.f32 %v470, %v668
      %670 = vmatmul.f32.gmra.mxu0 %v555
      %v671 = vpop.f32.mrf.mxu0
      %v672 = vadd.f32 %v470, %v671
      %673 = vmatmul.f32.gmra.mxu0 %v558
      %v674 = vpop.f32.mrf.mxu0
      %v675 = vadd.f32 %v470, %v674
      %676 = vmatmul.f32.gmra.mxu0 %v561
      %v677 = vpop.f32.mrf.mxu0
      %v678 = vadd.f32 %v470, %v677
      %679 = vmatmul.f32.gmra.mxu0 %v564
      %v680 = vpop.f32.mrf.mxu0
      %v681 = vadd.f32 %v470, %v680
      %682 = vmatmul.f32.gmra.mxu0 %v567
      %v683 = vpop.f32.mrf.mxu0
      %v684 = vadd.f32 %v470, %v683
      %685 = vdwg.mxu0
      %v686 = vld [vmem:[%s323] sm:$0xff]
      %v687 = vld [vmem:[%s323 + $0x8] sm:$0xff]
      %v688 = vld [vmem:[%s323 + $0x10] sm:$0xff]
      %v689 = vld [vmem:[%s323 + $0x18] sm:$0xff]
      %v690 = vld [vmem:[%s323 + $0x20] sm:$0xff]
      %v691 = vld [vmem:[%s323 + $0x28] sm:$0xff]
      %v692 = vld [vmem:[%s323 + $0x30] sm:$0xff]
      %v693 = vld [vmem:[%s323 + $0x38] sm:$0xff]
      %v694 = vld [vmem:[%s323 + $0x40] sm:$0xff]
      %v695 = vld [vmem:[%s323 + $0x48] sm:$0xff]
      %v696 = vld [vmem:[%s323 + $0x50] sm:$0xff]
      %v697 = vld [vmem:[%s323 + $0x58] sm:$0xff]
      %v698 = vld [vmem:[%s323 + $0x60] sm:$0xff]
      %v699 = vld [vmem:[%s323 + $0x68] sm:$0xff]
      %v700 = vld [vmem:[%s323 + $0x70] sm:$0xff]
      %v701 = vld [vmem:[%s323 + $0x78] sm:$0xff]
      %v702 = vld [vmem:[%s323 + $0x80] sm:$0xff]
      %v703 = vld [vmem:[%s323 + $0x88] sm:$0xff]
      %v704 = vld [vmem:[%s323 + $0x90] sm:$0xff]
      %v705 = vld [vmem:[%s323 + $0x98] sm:$0xff]
      %v706 = vld [vmem:[%s323 + $0xa0] sm:$0xff]
      %v707 = vld [vmem:[%s323 + $0xa8] sm:$0xff]
      %v708 = vld [vmem:[%s323 + $0xb0] sm:$0xff]
      %v709 = vld [vmem:[%s323 + $0xb8] sm:$0xff]
      %v710 = vld [vmem:[%s323 + $0xc0] sm:$0xff]
      %v711 = vld [vmem:[%s323 + $0xc8] sm:$0xff]
      %v712 = vld [vmem:[%s323 + $0xd0] sm:$0xff]
      %v713 = vld [vmem:[%s323 + $0xd8] sm:$0xff]
      %v714 = vld [vmem:[%s323 + $0xe0] sm:$0xff]
      %v715 = vld [vmem:[%s323 + $0xe8] sm:$0xff]
      %v716 = vld [vmem:[%s323 + $0xf0] sm:$0xff]
      %v717 = vld [vmem:[%s323 + $0xf8] sm:$0xff]
      %v718 = vld [vmem:[%s6] sm:$0x1]
      %v720 = vperm.slane %v718, 0
      %v722 = vmul.f32 %v686, %v720
      %v723 = vmul.f32 %v687, %v720
      %v724 = vmul.f32 %v688, %v720
      %v725 = vmul.f32 %v689, %v720
      %v726 = vmul.f32 %v690, %v720
      %v727 = vmul.f32 %v691, %v720
      %v728 = vmul.f32 %v692, %v720
      %v729 = vmul.f32 %v693, %v720
      %v730 = vmul.f32 %v694, %v720
      %v731 = vmul.f32 %v695, %v720
      %v732 = vmul.f32 %v696, %v720
      %v733 = vmul.f32 %v697, %v720
      %v734 = vmul.f32 %v698, %v720
      %v735 = vmul.f32 %v699, %v720
      %v736 = vmul.f32 %v700, %v720
      %v737 = vmul.f32 %v701, %v720
      %v738 = vmul.f32 %v702, %v720
      %v739 = vmul.f32 %v703, %v720
      %v740 = vmul.f32 %v704, %v720
      %v741 = vmul.f32 %v705, %v720
      %v742 = vmul.f32 %v706, %v720
      %v743 = vmul.f32 %v707, %v720
      %v744 = vmul.f32 %v708, %v720
      %v745 = vmul.f32 %v709, %v720
      %v746 = vmul.f32 %v710, %v720
      %v747 = vmul.f32 %v711, %v720
      %v748 = vmul.f32 %v712, %v720
      %v749 = vmul.f32 %v713, %v720
      %v750 = vmul.f32 %v714, %v720
      %v751 = vmul.f32 %v715, %v720
      %v752 = vmul.f32 %v716, %v720
      %v753 = vmul.f32 %v717, %v720
      %v754 = vld [vmem:[%s7] sm:$0x1]
      %v756 = vperm.slane %v754, 0
      %v758 = vadd.f32 %v722, %v756
      %v759 = vadd.f32 %v723, %v756
      %v760 = vadd.f32 %v724, %v756
      %v761 = vadd.f32 %v725, %v756
      %v762 = vadd.f32 %v726, %v756
      %v763 = vadd.f32 %v727, %v756
      %v764 = vadd.f32 %v728, %v756
      %v765 = vadd.f32 %v729, %v756
      %v766 = vadd.f32 %v730, %v756
      %v767 = vadd.f32 %v731, %v756
      %v768 = vadd.f32 %v732, %v756
      %v769 = vadd.f32 %v733, %v756
      %v770 = vadd.f32 %v734, %v756
      %v771 = vadd.f32 %v735, %v756
      %v772 = vadd.f32 %v736, %v756
      %v773 = vadd.f32 %v737, %v756
      %v774 = vadd.f32 %v738, %v756
      %v775 = vadd.f32 %v739, %v756
      %v776 = vadd.f32 %v740, %v756
      %v777 = vadd.f32 %v741, %v756
      %v778 = vadd.f32 %v742, %v756
      %v779 = vadd.f32 %v743, %v756
      %v780 = vadd.f32 %v744, %v756
      %v781 = vadd.f32 %v745, %v756
      %v782 = vadd.f32 %v746, %v756
      %v783 = vadd.f32 %v747, %v756
      %v784 = vadd.f32 %v748, %v756
      %v785 = vadd.f32 %v749, %v756
      %v786 = vadd.f32 %v750, %v756
      %v787 = vadd.f32 %v751, %v756
      %v788 = vadd.f32 %v752, %v756
      %v789 = vadd.f32 %v753, %v756
      %v790 = vadd.f32 %v591, %v758
      %v791 = vadd.f32 %v594, %v759
      %v792 = vadd.f32 %v597, %v760
      %v793 = vadd.f32 %v600, %v761
      %v794 = vadd.f32 %v603, %v762
      %v795 = vadd.f32 %v606, %v763
      %v796 = vadd.f32 %v609, %v764
      %v797 = vadd.f32 %v612, %v765
      %v798 = vadd.f32 %v615, %v766
      %v799 = vadd.f32 %v618, %v767
      %v800 = vadd.f32 %v621, %v768
      %v801 = vadd.f32 %v624, %v769
      %v802 = vadd.f32 %v627, %v770
      %v803 = vadd.f32 %v630, %v771
      %v804 = vadd.f32 %v633, %v772
      %v805 = vadd.f32 %v636, %v773
      %v806 = vadd.f32 %v639, %v774
      %v807 = vadd.f32 %v642, %v775
      %v808 = vadd.f32 %v645, %v776
      %v809 = vadd.f32 %v648, %v777
      %v810 = vadd.f32 %v651, %v778
      %v811 = vadd.f32 %v654, %v779
      %v812 = vadd.f32 %v657, %v780
      %v813 = vadd.f32 %v660, %v781
      %v814 = vadd.f32 %v663, %v782
      %v815 = vadd.f32 %v666, %v783
      %v816 = vadd.f32 %v669, %v784
      %v817 = vadd.f32 %v672, %v785
      %v818 = vadd.f32 %v675, %v786
      %v819 = vadd.f32 %v678, %v787
      %v820 = vadd.f32 %v681, %v788
      %v821 = vadd.f32 %v684, %v789
      %v822 = vmax.f32 %v790, 0.0
      %v823 = vmax.f32 %v791, 0.0
      %v824 = vmax.f32 %v792, 0.0
      %v825 = vmax.f32 %v793, 0.0
      %v826 = vmax.f32 %v794, 0.0
      %v827 = vmax.f32 %v795, 0.0
      %v828 = vmax.f32 %v796, 0.0
      %v829 = vmax.f32 %v797, 0.0
      %v830 = vmax.f32 %v798, 0.0
      %v831 = vmax.f32 %v799, 0.0
      %v832 = vmax.f32 %v800, 0.0
      %v833 = vmax.f32 %v801, 0.0
      %v834 = vmax.f32 %v802, 0.0
      %v835 = vmax.f32 %v803, 0.0
      %v836 = vmax.f32 %v804, 0.0
      %v837 = vmax.f32 %v805, 0.0
      %v838 = vmax.f32 %v806, 0.0
      %v839 = vmax.f32 %v807, 0.0
      %v840 = vmax.f32 %v808, 0.0
      %v841 = vmax.f32 %v809, 0.0
      %v842 = vmax.f32 %v810, 0.0
      %v843 = vmax.f32 %v811, 0.0
      %v844 = vmax.f32 %v812, 0.0
      %v845 = vmax.f32 %v813, 0.0
      %v846 = vmax.f32 %v814, 0.0
      %v847 = vmax.f32 %v815, 0.0
      %v848 = vmax.f32 %v816, 0.0
      %v849 = vmax.f32 %v817, 0.0
      %v850 = vmax.f32 %v818, 0.0
      %v851 = vmax.f32 %v819, 0.0
      %v852 = vmax.f32 %v820, 0.0
      %v853 = vmax.f32 %v821, 0.0
      %vm854 = vcmask 130048
      %855 = vst.msk [vmem:[%s329] sm:$0xff] %vm854, %v822
      %856 = vst.msk [vmem:[%s329 + $0x8] sm:$0xff] %vm854, %v823
      %857 = vst.msk [vmem:[%s329 + $0x10] sm:$0xff] %vm854, %v824
      %858 = vst.msk [vmem:[%s329 + $0x18] sm:$0xff] %vm854, %v825
      %859 = vst.msk [vmem:[%s329 + $0x20] sm:$0xff] %vm854, %v826
      %860 = vst.msk [vmem:[%s329 + $0x28] sm:$0xff] %vm854, %v827
      %861 = vst.msk [vmem:[%s329 + $0x30] sm:$0xff] %vm854, %v828
      %862 = vst.msk [vmem:[%s329 + $0x38] sm:$0xff] %vm854, %v829
      %863 = vst.msk [vmem:[%s329 + $0x40] sm:$0xff] %vm854, %v830
      %864 = vst.msk [vmem:[%s329 + $0x48] sm:$0xff] %vm854, %v831
      %865 = vst.msk [vmem:[%s329 + $0x50] sm:$0xff] %vm854, %v832
      %866 = vst.msk [vmem:[%s329 + $0x58] sm:$0xff] %vm854, %v833
      %867 = vst.msk [vmem:[%s329 + $0x60] sm:$0xff] %vm854, %v834
      %868 = vst.msk [vmem:[%s329 + $0x68] sm:$0xff] %vm854, %v835
      %869 = vst.msk [vmem:[%s329 + $0x70] sm:$0xff] %vm854, %v836
      %870 = vst.msk [vmem:[%s329 + $0x78] sm:$0xff] %vm854, %v837
      %871 = vst.msk [vmem:[%s329 + $0x80] sm:$0xff] %vm854, %v838
      %872 = vst.msk [vmem:[%s329 + $0x88] sm:$0xff] %vm854, %v839
      %873 = vst.msk [vmem:[%s329 + $0x90] sm:$0xff] %vm854, %v840
      %874 = vst.msk [vmem:[%s329 + $0x98] sm:$0xff] %vm854, %v841
      %875 = vst.msk [vmem:[%s329 + $0xa0] sm:$0xff] %vm854, %v842
      %876 = vst.msk [vmem:[%s329 + $0xa8] sm:$0xff] %vm854, %v843
      %877 = vst.msk [vmem:[%s329 + $0xb0] sm:$0xff] %vm854, %v844
      %878 = vst.msk [vmem:[%s329 + $0xb8] sm:$0xff] %vm854, %v845
      %879 = vst.msk [vmem:[%s329 + $0xc0] sm:$0xff] %vm854, %v846
      %880 = vst.msk [vmem:[%s329 + $0xc8] sm:$0xff] %vm854, %v847
      %881 = vst.msk [vmem:[%s329 + $0xd0] sm:$0xff] %vm854, %v848
      %882 = vst.msk [vmem:[%s329 + $0xd8] sm:$0xff] %vm854, %v849
      %883 = vst.msk [vmem:[%s329 + $0xe0] sm:$0xff] %vm854, %v850
      %884 = vst.msk [vmem:[%s329 + $0xe8] sm:$0xff] %vm854, %v851
      %885 = vst.msk [vmem:[%s329 + $0xf0] sm:$0xff] %vm854, %v852
      %886 = vst.msk [vmem:[%s329 + $0xf8] sm:$0xff] %vm854, %v853
      %s887 = smul.u32 32, %s19
      %p888 = scmp.lt.s32.totalorder %s887, 63
      %s889 = scalar_select %p888, %s887, 63
      %s890 = smul.addr %s889, 8
      %s891 = scalar_lea.vmem %s8, %s890
      // Predicated region
      $region53: #{bottleneck_forward.7} parent=51 // pred_check
        %p892 = pneg %p215
      $region54: #{bottleneck_forward.7} parent=51 // pred_check_branch
        %894 = sbr.rel (%p892) target = $region56
      $region55: #{bottleneck_forward.7} parent=51 // pred_region
        %s895 = smul.u32 32, %s19
      $region56: #{bottleneck_forward.7} parent=51 // pred_fallthru
        _
    $region52: #{bottleneck_forward.7} parent=5 // pred_fallthru
      _
    %p896 = scmp.le.s32.totalorder 2, %s14
    // Predicated region
    $region57: #{bottleneck_forward.7} parent=5 // pred_check
      %p897 = pneg %p896
    $region58: #{bottleneck_forward.7} parent=5 // pred_check_branch
      %899 = sbr.rel (%p897) target = $region60
    $region59: #{bottleneck_forward.7} parent=5 // pred_region
      %s900 = ssub.s32 %s14, 2
      // Predicated region
      $region61: #{bottleneck_forward.7} parent=59 // pred_check
        %p901 = pneg %p221
      $region62: #{bottleneck_forward.7} parent=59 // pred_check_branch
        %903 = sbr.rel (%p901) target = $region64
      $region63: #{bottleneck_forward.7} parent=59 // pred_region
        %s904 = smul.u32 32, %s20
        %p905 = scmp.lt.s32.totalorder %s904, 63
        %s906 = scalar_select %p905, %s904, 63
        %s907 = smul.addr %s906, 8
        %s908 = scalar_lea.vmem %s8, %s907
      $region64: #{bottleneck_forward.7} parent=59 // pred_fallthru
        _
    $region60: #{bottleneck_forward.7} parent=5 // pred_fallthru
      _
  $region6: #{bottleneck_forward.7} parent=0 // loop_footer
    %s18 = sadd.s32 1, %s14
  $region7: #{bottleneck_forward.7} parent=0 // loop_footer_branch
    %13 = sbr.rel target = $region3
  $region8: #{bottleneck_forward.7} parent=0 // loop_exit
    _

// kernel: bottleneck_forward.5
$region0: #{bottleneck_forward.5}
  #allocation0 [shape = 'u32[]', space=smem, size = 0x4, offset = 0x4, fixed_abs, tag = 'smem constant byte address 0x4 - core index']
  #allocation1 [shape = 'u32[72,128]{1,0:T(1,128)}', space=vmem, size = 0x9000, scoped, tag = 'internal scratch']
  %s0 = inlined_call_operand.vmem [shape: f32[2,16,16,4], index: 0, kind: input, shape index: {}]
  %s1 = inlined_call_operand.vmem [shape: f32[1,4], index: 1, kind: input, shape index: {}]
  %s2 = inlined_call_operand.vmem [shape: f32[1,4], index: 2, kind: input, shape index: {}]
  %s3 = inlined_call_operand.vmem [shape: f32[3,12,4], index: 3, kind: input, shape index: {}]
  %s4 = inlined_call_operand.vmem [shape: f32[2,16,16,4], index: 4, kind: output, shape index: {0}]
  %s5 = inlined_call_operand.vmem [shape: f32[2,2,4], index: 5, kind: output, shape index: {1}]
  %6 = xla_tuple %s4, %s5
  %s7 = sld [smem:[#allocation0]]
  $region57: #{bottleneck_forward.5} parent=0
    _
  %s9 = ssub.s32 1, %s7
  %s10 = scalar_select 0, %s9, %s7
  loop: start=0, step=1, limit=4
  $region2: #{bottleneck_forward.5} parent=0 // loop_pre_header
    _
  $region3: #{bottleneck_forward.5} parent=0 // loop_header
    %s12 = sphi 0, %s16
    %p13 = scmp.ge.s32.totalorder %s12, 4
    %s22 = sphi 0, %s24
    %s25 = sphi 0, %s22
    %s26 = sphi 0, %s25
    %s42 = sphi 0, %s26
    %s46 = sphi 0, %s46
    %s48 = sphi 0, %s46
    %s49 = sphi 0, %s48
    %s63 = sphi 0, %s49
    %s67 = sphi 0, %s67
    %s69 = sphi 0, %s67
    %s70 = sphi 0, %s69
    %s84 = sphi 0, %s70
    %s88 = sphi 0, %s88
    %s90 = sphi 0, %s88
    %s91 = sphi 0, %s90
    %s105 = sphi 0, %s91
    %s111 = sphi 0, %s113
    %s114 = sphi 0, %s111
    %s115 = sphi 0, %s114
    %s131 = sphi 0, %s115
    %s137 = sphi 0, %s139
    %s140 = sphi 0, %s137
    %s141 = sphi 0, %s140
    %s157 = sphi 0, %s141
  $region4: #{bottleneck_forward.5} parent=0 // loop_header_branch
    %15 = sbr.rel (%p13) target = $region8
  $region5: #{bottleneck_forward.5} parent=0 // loop_body
    %s17 = ssub.s32 %s12, 1
    %s18 = ssub.s32 %s12, 2
    %s19 = sadd.s32 %s12, 1
    %s20 = ssub.s32 %s12, %s19
    %p21 = scmp.eq.s32.totalorder %s20, 0
    %s23 = sadd.s32 %s22, 1
    %s24 = scalar_select %p21, %s22, %s23
    %p27 = pneg %p21
    %p28 = scmp.eq.s32.totalorder %s12, 1
    %p29 = por %p27, %p28
    %p30 = scmp.ne.s32.totalorder %s22, %s25
    %p31 = scmp.eq.s32.totalorder %s12, 0
    %p32 = por %p30, %p31
    %p33 = scmp.ne.s32.totalorder %s22, %s25
    %p34 = scmp.eq.s32.totalorder %s17, 1
    %p35 = por %p33, %p34
    %p36 = scmp.ne.s32.totalorder %s25, %s26
    %p37 = scmp.eq.s32.totalorder %s17, 0
    %p38 = por %p36, %p37
    %p39 = scmp.ne.s32.totalorder %s25, %s26
    %p40 = scmp.eq.s32.totalorder %s18, 1
    %p41 = por %p39, %p40
    %p43 = scmp.ne.s32.totalorder %s26, %s42
    %p44 = scmp.eq.s32.totalorder %s18, 0
    %p45 = por %p43, %p44
    %s47 = sadd.s32 %s46, 1
    %p50 = scmp.eq.s32.totalorder %s12, 1
    %p51 = scmp.ne.s32.totalorder %s46, %s48
    %p52 = scmp.eq.s32.totalorder %s12, 0
    %p53 = por %p51, %p52
    %p54 = scmp.ne.s32.totalorder %s46, %s48
    %p55 = scmp.eq.s32.totalorder %s17, 1
    %p56 = por %p54, %p55
    %p57 = scmp.ne.s32.totalorder %s48, %s49
    %p58 = scmp.eq.s32.totalorder %s17, 0
    %p59 = por %p57, %p58
    %p60 = scmp.ne.s32.totalorder %s48, %s49
    %p61 = scmp.eq.s32.totalorder %s18, 1
    %p62 = por %p60, %p61
    %p64 = scmp.ne.s32.totalorder %s49, %s63
    %p65 = scmp.eq.s32.totalorder %s18, 0
    %p66 = por %p64, %p65
    %s68 = sadd.s32 %s67, 1
    %p71 = scmp.eq.s32.totalorder %s12, 1
    %p72 = scmp.ne.s32.totalorder %s67, %s69
    %p73 = scmp.eq.s32.totalorder %s12, 0
    %p74 = por %p72, %p73
    %p75 = scmp.ne.s32.totalorder %s67, %s69
    %p76 = scmp.eq.s32.totalorder %s17, 1
    %p77 = por %p75, %p76
    %p78 = scmp.ne.s32.totalorder %s69, %s70
    %p79 = scmp.eq.s32.totalorder %s17, 0
    %p80 = por %p78, %p79
    %p81 = scmp.ne.s32.totalorder %s69, %s70
    %p82 = scmp.eq.s32.totalorder %s18, 1
    %p83 = por %p81, %p82
    %p85 = scmp.ne.s32.totalorder %s70, %s84
    %p86 = scmp.eq.s32.totalorder %s18, 0
    %p87 = por %p85, %p86
    %s89 = sadd.s32 %s88, 1
    %p92 = scmp.eq.s32.totalorder %s12, 1
    %p93 = scmp.ne.s32.totalorder %s88, %s90
    %p94 = scmp.eq.s32.totalorder %s12, 0
    %p95 = por %p93, %p94
    %p96 = scmp.ne.s32.totalorder %s88, %s90
    %p97 = scmp.eq.s32.totalorder %s17, 1
    %p98 = por %p96, %p97
    %p99 = scmp.ne.s32.totalorder %s90, %s91
    %p100 = scmp.eq.s32.totalorder %s17, 0
    %p101 = por %p99, %p100
    %p102 = scmp.ne.s32.totalorder %s90, %s91
    %p103 = scmp.eq.s32.totalorder %s18, 1
    %p104 = por %p102, %p103
    %p106 = scmp.ne.s32.totalorder %s91, %s105
    %p107 = scmp.eq.s32.totalorder %s18, 0
    %p108 = por %p106, %p107
    %s109 = ssub.s32 %s12, %s19
    %p110 = scmp.eq.s32.totalorder %s109, 0
    %s112 = sadd.s32 %s111, 1
    %s113 = scalar_select %p110, %s111, %s112
    %p116 = pneg %p110
    %p117 = scmp.eq.s32.totalorder %s12, 1
    %p118 = por %p116, %p117
    %p119 = scmp.ne.s32.totalorder %s111, %s114
    %p120 = scmp.eq.s32.totalorder %s12, 0
    %p121 = por %p119, %p120
    %p122 = scmp.ne.s32.totalorder %s111, %s114
    %p123 = scmp.eq.s32.totalorder %s17, 1
    %p124 = por %p122, %p123
    %p125 = scmp.ne.s32.totalorder %s114, %s115
    %p126 = scmp.eq.s32.totalorder %s17, 0
    %p127 = por %p125, %p126
    %p128 = scmp.ne.s32.totalorder %s114, %s115
    %p129 = scmp.eq.s32.totalorder %s18, 1
    %p130 = por %p128, %p129
    %p132 = scmp.ne.s32.totalorder %s115, %s131
    %p133 = scmp.eq.s32.totalorder %s18, 0
    %p134 = por %p132, %p133
    %s135 = ssub.s32 %s12, %s19
    %p136 = scmp.eq.s32.totalorder %s135, 0
    %s138 = sadd.s32 %s137, 1
    %s139 = scalar_select %p136, %s137, %s138
    %p142 = pneg %p136
    %p143 = scmp.eq.s32.totalorder %s12, 1
    %p144 = por %p142, %p143
    %p145 = scmp.ne.s32.totalorder %s137, %s140
    %p146 = scmp.eq.s32.totalorder %s12, 0
    %p147 = por %p145, %p146
    %p148 = scmp.ne.s32.totalorder %s137, %s140
    %p149 = scmp.eq.s32.totalorder %s17, 1
    %p150 = por %p148, %p149
    %p151 = scmp.ne.s32.totalorder %s140, %s141
    %p152 = scmp.eq.s32.totalorder %s17, 0
    %p153 = por %p151, %p152
    %p154 = scmp.ne.s32.totalorder %s140, %s141
    %p155 = scmp.eq.s32.totalorder %s18, 1
    %p156 = por %p154, %p155
    %p158 = scmp.ne.s32.totalorder %s141, %s157
    %p159 = scmp.eq.s32.totalorder %s18, 0
    %p160 = por %p158, %p159
    %p161 = scmp.le.s32.totalorder 1, %s12
    %p162 = scmp.lt.s32.totalorder %s12, 3
    %p163 = pnand %p161, %p162
    %p164 = pneg %p163
    // Predicated region
    $region9: #{bottleneck_forward.5} parent=5 // pred_check
      _
    $region10: #{bottleneck_forward.5} parent=5 // pred_check_branch
      %166 = sbr.rel (%p163) target = $region12
    $region11: #{bottleneck_forward.5} parent=5 // pred_region
      %s167 = ssub.s32 %s12, 1
      // Predicated region
      $region13: #{bottleneck_forward.5} parent=11 // pred_check
        %p168 = pneg %p59
      $region14: #{bottleneck_forward.5} parent=11 // pred_check_branch
        %170 = sbr.rel (%p168) target = $region16
      $region15: #{bottleneck_forward.5} parent=11 // pred_region
        _
      $region16: #{bottleneck_forward.5} parent=11 // pred_fallthru
        _
      // Predicated region
      $region17: #{bottleneck_forward.5} parent=11 // pred_check
        %p171 = pneg %p80
      $region18: #{bottleneck_forward.5} parent=11 // pred_check_branch
        %173 = sbr.rel (%p171) target = $region20
      $region19: #{bottleneck_forward.5} parent=11 // pred_region
        _
      $region20: #{bottleneck_forward.5} parent=11 // pred_fallthru
        _
      // Predicated region
      $region21: #{bottleneck_forward.5} parent=11 // pred_check
        %p174 = pneg %p101
      $region22: #{bottleneck_forward.5} parent=11 // pred_check_branch
        %176 = sbr.rel (%p174) target = $region24
      $region23: #{bottleneck_forward.5} parent=11 // pred_region
        _
      $region24: #{bottleneck_forward.5} parent=11 // pred_fallthru
        _
    $region12: #{bottleneck_forward.5} parent=5 // pred_fallthru
      _
    %p177 = scmp.lt.s32.totalorder %s12, 2
    // Predicated region
    $region25: #{bottleneck_forward.5} parent=5 // pred_check
      %p178 = pneg %p177
    $region26: #{bottleneck_forward.5} parent=5 // pred_check_branch
      %180 = sbr.rel (%p178) target = $region28
    $region27: #{bottleneck_forward.5} parent=5 // pred_region
      // Predicated region
      $region29: #{bottleneck_forward.5} parent=27 // pred_check
        %p181 = pneg %p32
      $region30: #{bottleneck_forward.5} parent=27 // pred_check_branch
        %183 = sbr.rel (%p181) target = $region32
      $region31: #{bottleneck_forward.5} parent=27 // pred_region
        %p184 = scmp.lt.s32.totalorder %s12, 1
        %s185 = scalar_select %p184, %s12, 1
        %s186 = smul.addr %s185, 32
        %s187 = smul.addr %s186, 8
        %s188 = scalar_lea.vmem %s0, %s187
      $region32: #{bottleneck_forward.5} parent=27 // pred_fallthru
        _
    $region28: #{bottleneck_forward.5} parent=5 // pred_fallthru
      _
    %p189 = scmp.le.s32.totalorder 1, %s12
    %p190 = scmp.lt.s32.totalorder %s12, 3
    %p191 = pnand %p189, %p190
    %p192 = pneg %p191
    // Predicated region
    $region33: #{bottleneck_forward.5} parent=5 // pred_check
      _
    $region34: #{bottleneck_forward.5} parent=5 // pred_check_branch
      %194 = sbr.rel (%p191) target = $region36
    $region35: #{bottleneck_forward.5} parent=5 // pred_region
      %s195 = ssub.s32 %s12, 1
      %p196 = scmp.lt.s32.totalorder %s17, 1
      %s197 = scalar_select %p196, %s17, 1
      %s198 = smul.addr %s197, 32
      %s199 = smul.addr %s198, 8
      %s200 = scalar_lea.vmem %s0, %s199
      %p201 = pneg %p38
      %p202 = pneg %p35
      %p203 = pneg %p59
      %p204 = pneg %p56
      %p205 = pneg %p80
      %p206 = pneg %p77
      %p207 = pneg %p101
      %p208 = pneg %p98
      %p209 = pneg %p127
      %p210 = pneg %p124
      %p211 = scmp.lt.s32.totalorder %s17, 1
      %s212 = scalar_select %p211, %s17, 1
      %s213 = smul.addr %s212, 32
      %s214 = smul.addr %s213, 8
      %s215 = scalar_lea.vmem %s4, %s214
      %p216 = pneg %p153
      %p217 = pneg %p150
      %p218 = scmp.lt.s32.totalorder %s17, 1
      %s219 = scalar_select %p218, %s17, 1
      %s220 = smul.addr %s219, 2
      %s221 = scalar_lea.vmem %s5, %s220
      %p222 = scmp.lt.s32.totalorder %s17, 1
      %s223 = scalar_select %p222, %s17, 1
      %s224 = smul.addr %s223, 32
      %s225 = smul.addr %s224, 8
      %s226 = scalar_lea.vmem %s0, %s225
      %p227 = scmp.lt.s32.totalorder %s17, 1
      %s228 = scalar_select %p227, %s17, 1
      %s229 = smul.addr %s228, 32
      %s230 = smul.addr %s229, 8
      %s231 = scalar_lea.vmem %s4, %s230
      %p232 = scmp.lt.s32.totalorder %s17, 1
      %s233 = scalar_select %p232, %s17, 1
      %s234 = smul.addr %s233, 2
      %s235 = scalar_lea.vmem %s5, %s234
      %v236 = vld [vmem:[%s226] sm:$0xff]
      %v237 = vld [vmem:[%s226 + $0x8] sm:$0xff]
      %v238 = vld [vmem:[%s226 + $0x10] sm:$0xff]
      %v239 = vld [vmem:[%s226 + $0x18] sm:$0xff]
      %v240 = vld [vmem:[%s226 + $0x20] sm:$0xff]
      %v241 = vld [vmem:[%s226 + $0x28] sm:$0xff]
      %v242 = vld [vmem:[%s226 + $0x30] sm:$0xff]
      %v243 = vld [vmem:[%s226 + $0x38] sm:$0xff]
      %v244 = vld [vmem:[%s226 + $0x40] sm:$0xff]
      %v245 = vld [vmem:[%s226 + $0x48] sm:$0xff]
      %v246 = vld [vmem:[%s226 + $0x50] sm:$0xff]
      %v247 = vld [vmem:[%s226 + $0x58] sm:$0xff]
      %v248 = vld [vmem:[%s226 + $0x60] sm:$0xff]
      %v249 = vld [vmem:[%s226 + $0x68] sm:$0xff]
      %v250 = vld [vmem:[%s226 + $0x70] sm:$0xff]
      %v251 = vld [vmem:[%s226 + $0x78] sm:$0xff]
      %v252 = vld [vmem:[%s226 + $0x80] sm:$0xff]
      %v253 = vld [vmem:[%s226 + $0x88] sm:$0xff]
      %v254 = vld [vmem:[%s226 + $0x90] sm:$0xff]
      %v255 = vld [vmem:[%s226 + $0x98] sm:$0xff]
      %v256 = vld [vmem:[%s226 + $0xa0] sm:$0xff]
      %v257 = vld [vmem:[%s226 + $0xa8] sm:$0xff]
      %v258 = vld [vmem:[%s226 + $0xb0] sm:$0xff]
      %v259 = vld [vmem:[%s226 + $0xb8] sm:$0xff]
      %v260 = vld [vmem:[%s226 + $0xc0] sm:$0xff]
      %v261 = vld [vmem:[%s226 + $0xc8] sm:$0xff]
      %v262 = vld [vmem:[%s226 + $0xd0] sm:$0xff]
      %v263 = vld [vmem:[%s226 + $0xd8] sm:$0xff]
      %v264 = vld [vmem:[%s226 + $0xe0] sm:$0xff]
      %v265 = vld [vmem:[%s226 + $0xe8] sm:$0xff]
      %v266 = vld [vmem:[%s226 + $0xf0] sm:$0xff]
      %v267 = vld [vmem:[%s226 + $0xf8] sm:$0xff]
      %v268 = vld [vmem:[%s1] sm:$0x1]
      %v270 = vperm.slane %v268, 0
      %v272 = vmul.f32 %v236, %v270
      %v273 = vmul.f32 %v237, %v270
      %v274 = vmul.f32 %v238, %v270
      %v275 = vmul.f32 %v239, %v270
      %v276 = vmul.f32 %v240, %v270
      %v277 = vmul.f32 %v241, %v270
      %v278 = vmul.f32 %v242, %v270
      %v279 = vmul.f32 %v243, %v270
      %v280 = vmul.f32 %v244, %v270
      %v281 = vmul.f32 %v245, %v270
      %v282 = vmul.f32 %v246, %v270
      %v283 = vmul.f32 %v247, %v270
      %v284 = vmul.f32 %v248, %v270
      %v285 = vmul.f32 %v249, %v270
      %v286 = vmul.f32 %v250, %v270
      %v287 = vmul.f32 %v251, %v270
      %v288 = vmul.f32 %v252, %v270
      %v289 = vmul.f32 %v253, %v270
      %v290 = vmul.f32 %v254, %v270
      %v291 = vmul.f32 %v255, %v270
      %v292 = vmul.f32 %v256, %v270
      %v293 = vmul.f32 %v257, %v270
      %v294 = vmul.f32 %v258, %v270
      %v295 = vmul.f32 %v259, %v270
      %v296 = vmul.f32 %v260, %v270
      %v297 = vmul.f32 %v261, %v270
      %v298 = vmul.f32 %v262, %v270
      %v299 = vmul.f32 %v263, %v270
      %v300 = vmul.f32 %v264, %v270
      %v301 = vmul.f32 %v265, %v270
      %v302 = vmul.f32 %v266, %v270
      %v303 = vmul.f32 %v267, %v270
      %v304 = vld [vmem:[%s2] sm:$0x1]
      %v306 = vperm.slane %v304, 0
      %v308 = vadd.f32 %v272, %v306
      %v309 = vadd.f32 %v273, %v306
      %v310 = vadd.f32 %v274, %v306
      %v311 = vadd.f32 %v275, %v306
      %v312 = vadd.f32 %v276, %v306
      %v313 = vadd.f32 %v277, %v306
      %v314 = vadd.f32 %v278, %v306
      %v315 = vadd.f32 %v279, %v306
      %v316 = vadd.f32 %v280, %v306
      %v317 = vadd.f32 %v281, %v306
      %v318 = vadd.f32 %v282, %v306
      %v319 = vadd.f32 %v283, %v306
      %v320 = vadd.f32 %v284, %v306
      %v321 = vadd.f32 %v285, %v306
      %v322 = vadd.f32 %v286, %v306
      %v323 = vadd.f32 %v287, %v306
      %v324 = vadd.f32 %v288, %v306
      %v325 = vadd.f32 %v289, %v306
      %v326 = vadd.f32 %v290, %v306
      %v327 = vadd.f32 %v291, %v306
      %v328 = vadd.f32 %v292, %v306
      %v329 = vadd.f32 %v293, %v306
      %v330 = vadd.f32 %v294, %v306
      %v331 = vadd.f32 %v295, %v306
      %v332 = vadd.f32 %v296, %v306
      %v333 = vadd.f32 %v297, %v306
      %v334 = vadd.f32 %v298, %v306
      %v335 = vadd.f32 %v299, %v306
      %v336 = vadd.f32 %v300, %v306
      %v337 = vadd.f32 %v301, %v306
      %v338 = vadd.f32 %v302, %v306
      %v339 = vadd.f32 %v303, %v306
      %v340 = vmax.f32 %v308, 0.0
      %v341 = vmax.f32 %v309, 0.0
      %v342 = vmax.f32 %v310, 0.0
      %v343 = vmax.f32 %v311, 0.0
      %v344 = vmax.f32 %v312, 0.0
      %v345 = vmax.f32 %v313, 0.0
      %v346 = vmax.f32 %v314, 0.0
      %v347 = vmax.f32 %v315, 0.0
      %v348 = vmax.f32 %v316, 0.0
      %v349 = vmax.f32 %v317, 0.0
      %v350 = vmax.f32 %v318, 0.0
      %v351 = vmax.f32 %v319, 0.0
      %v352 = vmax.f32 %v320, 0.0
      %v353 = vmax.f32 %v321, 0.0
      %v354 = vmax.f32 %v322, 0.0
      %v355 = vmax.f32 %v323, 0.0
      %v356 = vmax.f32 %v324, 0.0
      %v357 = vmax.f32 %v325, 0.0
      %v358 = vmax.f32 %v326, 0.0
      %v359 = vmax.f32 %v327, 0.0
      %v360 = vmax.f32 %v328, 0.0
      %v361 = vmax.f32 %v329, 0.0
      %v362 = vmax.f32 %v330, 0.0
      %v363 = vmax.f32 %v331, 0.0
      %v364 = vmax.f32 %v332, 0.0
      %v365 = vmax.f32 %v333, 0.0
      %v366 = vmax.f32 %v334, 0.0
      %v367 = vmax.f32 %v335, 0.0
      %v368 = vmax.f32 %v336, 0.0
      %v369 = vmax.f32 %v337, 0.0
      %v370 = vmax.f32 %v338, 0.0
      %v371 = vmax.f32 %v339, 0.0
      %v372 = vlaneseq
      %v373 = vshrl.u32 %v372, 7
      %v374 = vadd.s32 %v373, 8
      %vm375 = vcmp.ge.s32.totalorder %v373, 1
      %vm376 = vcmp.ge.s32.totalorder %v374, 1
      %v377 = vrot.slane %v340, 7
      %v378 = vrot.slane %v342, 7
      %v379 = vrot.slane %v344, 7
      %v380 = vrot.slane %v346, 7
      %v381 = vrot.slane %v348, 7
      %v382 = vrot.slane %v350, 7
      %v383 = vrot.slane %v352, 7
      %v384 = vrot.slane %v354, 7
      %v385 = vrot.slane %v356, 7
      %v386 = vrot.slane %v358, 7
      %v387 = vrot.slane %v360, 7
      %v388 = vrot.slane %v362, 7
      %v389 = vrot.slane %v364, 7
      %v390 = vrot.slane %v366, 7
      %v391 = vrot.slane %v368, 7
      %v392 = vrot.slane %v370, 7
      %v393 = vrot.slane %v341, 7
      %v394 = vrot.slane %v343, 7
      %v395 = vrot.slane %v345, 7
      %v396 = vrot.slane %v347, 7
      %v397 = vrot.slane %v349, 7
      %v398 = vrot.slane %v351, 7
      %v399 = vrot.slane %v353, 7
      %v400 = vrot.slane %v355, 7
      %v401 = vrot.slane %v357, 7
      %v402 = vrot.slane %v359, 7
      %v403 = vrot.slane %v361, 7
      %v404 = vrot.slane %v363, 7
      %v405 = vrot.slane %v365, 7
      %v406 = vrot.slane %v367, 7
      %v407 = vrot.slane %v369, 7
      %v408 = vrot.slane %v371, 7
      %vm409 = vcmp.lt.s32.totalorder %v373, 1
      %v410 = vsel %vm409, %v377, %v393
      %v411 = vsel %vm409, %v378, %v394
      %v412 = vsel %vm409, %v379, %v395
      %v413 = vsel %vm409, %v380, %v396
      %v414 = vsel %vm409, %v381, %v397
      %v415 = vsel %vm409, %v382, %v398
      %v416 = vsel %vm409, %v383, %v399
      %v417 = vsel %vm409, %v384, %v400
      %v418 = vsel %vm409, %v385, %v401
      %v419 = vsel %vm409, %v386, %v402
      %v420 = vsel %vm409, %v387, %v403
      %v421 = vsel %vm409, %v388, %v404
      %v422 = vsel %vm409, %v389, %v405
      %v423 = vsel %vm409, %v390, %v406
      %v424 = vsel %vm409, %v391, %v407
      %v425 = vsel %vm409, %v392, %v408
      %v426 = vsel %vm409, %v393, %v377
      %v427 = vsel %vm409, %v394, %v378
      %v428 = vsel %vm409, %v395, %v379
      %v429 = vsel %vm409, %v396, %v380
      %v430 = vsel %vm409, %v397, %v381
      %v431 = vsel %vm409, %v398, %v382
      %v432 = vsel %vm409, %v399, %v383
      %v433 = vsel %vm409, %v400, %v384
      %v434 = vsel %vm409, %v401, %v385
      %v435 = vsel %vm409, %v402, %v386
      %v436 = vsel %vm409, %v403, %v387
      %v437 = vsel %vm409, %v404, %v388
      %v438 = vsel %vm409, %v405, %v389
      %v439 = vsel %vm409, %v406, %v390
      %v440 = vsel %vm409, %v407, %v391
      %v441 = vsel %vm409, %v408, %v392
      %v442 = vsel %vm375, 0.0, 0.0
      %v443 = vsel %vm376, 0.0, 0.0
      %v444 = vsel %vm375, %v426, 0.0
      %v445 = vsel %vm376, %v410, 0.0
      %v446 = vsel %vm375, %v427, 0.0
      %v447 = vsel %vm376, %v411, 0.0
      %v448 = vsel %vm375, %v428, 0.0
      %v449 = vsel %vm376, %v412, 0.0
      %v450 = vsel %vm375, %v429, 0.0
      %v451 = vsel %vm376, %v413, 0.0
      %v452 = vsel %vm375, %v430, 0.0
      %v453 = vsel %vm376, %v414, 0.0
      %v454 = vsel %vm375, %v431, 0.0
      %v455 = vsel %vm376, %v415, 0.0
      %v456 = vsel %vm375, %v432, 0.0
      %v457 = vsel %vm376, %v416, 0.0
      %v458 = vsel %vm375, %v433, 0.0
      %v459 = vsel %vm376, %v417, 0.0
      %v460 = vsel %vm375, %v434, 0.0
      %v461 = vsel %vm376, %v418, 0.0
      %v462 = vsel %vm375, %v435, 0.0
      %v463 = vsel %vm376, %v419, 0.0
      %v464 = vsel %vm375, %v436, 0.0
      %v465 = vsel %vm376, %v420, 0.0
      %v466 = vsel %vm375, %v437, 0.0
      %v467 = vsel %vm376, %v421, 0.0
      %v468 = vsel %vm375, %v438, 0.0
      %v469 = vsel %vm376, %v422, 0.0
      %v470 = vsel %vm375, %v439, 0.0
      %v471 = vsel %vm376, %v423, 0.0
      %v472 = vsel %vm375, %v440, 0.0
      %v473 = vsel %vm376, %v424, 0.0
      %v474 = vsel %vm375, %v441, 0.0
      %v475 = vsel %vm376, %v425, 0.0
      %vm476 = vcmp.le.s32.totalorder %v373, 14
      %vm477 = vcmp.le.s32.totalorder %v374, 14
      %v478 = vrot.slane %v340, 1
      %v479 = vrot.slane %v342, 1
      %v480 = vrot.slane %v344, 1
      %v481 = vrot.slane %v346, 1
      %v482 = vrot.slane %v348, 1
      %v483 = vrot.slane %v350, 1
      %v484 = vrot.slane %v352, 1
      %v485 = vrot.slane %v354, 1
      %v486 = vrot.slane %v356, 1
      %v487 = vrot.slane %v358, 1
      %v488 = vrot.slane %v360, 1
      %v489 = vrot.slane %v362, 1
      %v490 = vrot.slane %v364, 1
      %v491 = vrot.slane %v366, 1
      %v492 = vrot.slane %v368, 1
      %v493 = vrot.slane %v370, 1
      %v494 = vrot.slane %v341, 1
      %v495 = vrot.slane %v343, 1
      %v496 = vrot.slane %v345, 1
      %v497 = vrot.slane %v347, 1
      %v498 = vrot.slane %v349, 1
      %v499 = vrot.slane %v351, 1
      %v500 = vrot.slane %v353, 1
      %v501 = vrot.slane %v355, 1
      %v502 = vrot.slane %v357, 1
      %v503 = vrot.slane %v359, 1
      %v504 = vrot.slane %v361, 1
      %v505 = vrot.slane %v363, 1
      %v506 = vrot.slane %v365, 1
      %v507 = vrot.slane %v367, 1
      %v508 = vrot.slane %v369, 1
      %v509 = vrot.slane %v371, 1
      %vm510 = vcmp.lt.s32.totalorder %v373, 7
      %v511 = vsel %vm510, %v478, %v494
      %v512 = vsel %vm510, %v479, %v495
      %v513 = vsel %vm510, %v480, %v496
      %v514 = vsel %vm510, %v481, %v497
      %v515 = vsel %vm510, %v482, %v498
      %v516 = vsel %vm510, %v483, %v499
      %v517 = vsel %vm510, %v484, %v500
      %v518 = vsel %vm510, %v485, %v501
      %v519 = vsel %vm510, %v486, %v502
      %v520 = vsel %vm510, %v487, %v503
      %v521 = vsel %vm510, %v488, %v504
      %v522 = vsel %vm510, %v489, %v505
      %v523 = vsel %vm510, %v490, %v506
      %v524 = vsel %vm510, %v491, %v507
      %v525 = vsel %vm510, %v492, %v508
      %v526 = vsel %vm510, %v493, %v509
      %v527 = vsel %vm510, %v494, %v478
      %v528 = vsel %vm510, %v495, %v479
      %v529 = vsel %vm510, %v496, %v480
      %v530 = vsel %vm510, %v497, %v481
      %v531 = vsel %vm510, %v498, %v482
      %v532 = vsel %vm510, %v499, %v483
      %v533 = vsel %vm510, %v500, %v484
      %v534 = vsel %vm510, %v501, %v485
      %v535 = vsel %vm510, %v502, %v486
      %v536 = vsel %vm510, %v503, %v487
      %v537 = vsel %vm510, %v504, %v488
      %v538 = vsel %vm510, %v505, %v489
      %v539 = vsel %vm510, %v506, %v490
      %v540 = vsel %vm510, %v507, %v491
      %v541 = vsel %vm510, %v508, %v492
      %v542 = vsel %vm510, %v509, %v493
      %v543 = vsel %vm476, 0.0, 0.0
      %v544 = vsel %vm477, 0.0, 0.0
      %v545 = vsel %vm476, %v511, 0.0
      %v546 = vsel %vm477, %v527, 0.0
      %v547 = vsel %vm476, %v512, 0.0
      %v548 = vsel %vm477, %v528, 0.0
      %v549 = vsel %vm476, %v513, 0.0
      %v550 = vsel %vm477, %v529, 0.0
      %v551 = vsel %vm476, %v514, 0.0
      %v552 = vsel %vm477, %v530, 0.0
      %v553 = vsel %vm476, %v515, 0.0
      %v554 = vsel %vm477, %v531, 0.0
      %v555 = vsel %vm476, %v516, 0.0
      %v556 = vsel %vm477, %v532, 0.0
      %v557 = vsel %vm476, %v517, 0.0
      %v558 = vsel %vm477, %v533, 0.0
      %v559 = vsel %vm476, %v518, 0.0
      %v560 = vsel %vm477, %v534, 0.0
      %v561 = vsel %vm476, %v519, 0.0
      %v562 = vsel %vm477, %v535, 0.0
      %v563 = vsel %vm476, %v520, 0.0
      %v564 = vsel %vm477, %v536, 0.0
      %v565 = vsel %vm476, %v521, 0.0
      %v566 = vsel %vm477, %v537, 0.0
      %v567 = vsel %vm476, %v522, 0.0
      %v568 = vsel %vm477, %v538, 0.0
      %v569 = vsel %vm476, %v523, 0.0
      %v570 = vsel %vm477, %v539, 0.0
      %v571 = vsel %vm476, %v524, 0.0
      %v572 = vsel %vm477, %v540, 0.0
      %v573 = vsel %vm476, %v525, 0.0
      %v574 = vsel %vm477, %v541, 0.0
      %v575 = vsel %vm476, %v526, 0.0
      %v576 = vsel %vm477, %v542, 0.0
      %610 = vrot.lane.b32.xlu0 0.0, 4
      %v611 = vpop.permute.xlu0 %610
      %612 = vrot.lane.b32.xlu0 %v340, 4
      %v613 = vpop.permute.xlu0 %612
      %614 = vrot.lane.b32.xlu0 %v341, 4
      %v615 = vpop.permute.xlu0 %614
      %616 = vrot.lane.b32.xlu0 %v342, 4
      %v617 = vpop.permute.xlu0 %616
      %618 = vrot.lane.b32.xlu0 %v343, 4
      %v619 = vpop.permute.xlu0 %618
      %620 = vrot.lane.b32.xlu0 %v344, 4
      %v621 = vpop.permute.xlu0 %620
      %622 = vrot.lane.b32.xlu0 %v345, 4
      %v623 = vpop.permute.xlu0 %622
      %624 = vrot.lane.b32.xlu0 %v346, 4
      %v625 = vpop.permute.xlu0 %624
      %626 = vrot.lane.b32.xlu0 %v347, 4
      %v627 = vpop.permute.xlu0 %626
      %628 = vrot.lane.b32.xlu0 %v348, 4
      %v629 = vpop.permute.xlu0 %628
      %630 = vrot.lane.b32.xlu0 %v349, 4
      %v631 = vpop.permute.xlu0 %630
      %632 = vrot.lane.b32.xlu0 %v350, 4
      %v633 = vpop.permute.xlu0 %632
      %634 = vrot.lane.b32.xlu0 %v351, 4
      %v635 = vpop.permute.xlu0 %634
      %636 = vrot.lane.b32.xlu0 %v352, 4
      %v637 = vpop.permute.xlu0 %636
      %638 = vrot.lane.b32.xlu0 %v353, 4
      %v639 = vpop.permute.xlu0 %638
      %640 = vrot.lane.b32.xlu0 %v354, 4
      %v641 = vpop.permute.xlu0 %640
      %642 = vrot.lane.b32.xlu0 %v355, 4
      %v643 = vpop.permute.xlu0 %642
      %644 = vrot.lane.b32.xlu0 %v356, 4
      %v645 = vpop.permute.xlu0 %644
      %646 = vrot.lane.b32.xlu0 %v357, 4
      %v647 = vpop.permute.xlu0 %646
      %648 = vrot.lane.b32.xlu0 %v358, 4
      %v649 = vpop.permute.xlu0 %648
      %650 = vrot.lane.b32.xlu0 %v359, 4
      %v651 = vpop.permute.xlu0 %650
      %652 = vrot.lane.b32.xlu0 %v360, 4
      %v653 = vpop.permute.xlu0 %652
      %654 = vrot.lane.b32.xlu0 %v361, 4
      %v655 = vpop.permute.xlu0 %654
      %656 = vrot.lane.b32.xlu0 %v362, 4
      %v657 = vpop.permute.xlu0 %656
      %658 = vrot.lane.b32.xlu0 %v363, 4
      %v659 = vpop.permute.xlu0 %658
      %660 = vrot.lane.b32.xlu0 %v364, 4
      %v661 = vpop.permute.xlu0 %660
      %662 = vrot.lane.b32.xlu0 %v365, 4
      %v663 = vpop.permute.xlu0 %662
      %664 = vrot.lane.b32.xlu0 %v366, 4
      %v665 = vpop.permute.xlu0 %664
      %666 = vrot.lane.b32.xlu0 %v367, 4
      %v667 = vpop.permute.xlu0 %666
      %668 = vrot.lane.b32.xlu0 %v368, 4
      %v669 = vpop.permute.xlu0 %668
      %670 = vrot.lane.b32.xlu0 %v369, 4
      %v671 = vpop.permute.xlu0 %670
      %672 = vrot.lane.b32.xlu0 %v370, 4
      %v673 = vpop.permute.xlu0 %672
      %674 = vrot.lane.b32.xlu0 %v371, 4
      %v675 = vpop.permute.xlu0 %674
      %743 = vrot.lane.b32.xlu0 %v543, 8
      %v744 = vpop.permute.xlu0 %743
      %745 = vrot.lane.b32.xlu0 %v544, 8
      %v746 = vpop.permute.xlu0 %745
      %747 = vrot.lane.b32.xlu0 %v545, 8
      %v748 = vpop.permute.xlu0 %747
      %749 = vrot.lane.b32.xlu0 %v546, 8
      %v750 = vpop.permute.xlu0 %749
      %751 = vrot.lane.b32.xlu0 %v547, 8
      %v752 = vpop.permute.xlu0 %751
      %753 = vrot.lane.b32.xlu0 %v548, 8
      %v754 = vpop.permute.xlu0 %753
      %755 = vrot.lane.b32.xlu0 %v549, 8
      %v756 = vpop.permute.xlu0 %755
      %757 = vrot.lane.b32.xlu0 %v550, 8
      %v758 = vpop.permute.xlu0 %757
      %759 = vrot.lane.b32.xlu0 %v551, 8
      %v760 = vpop.permute.xlu0 %759
      %761 = vrot.lane.b32.xlu0 %v552, 8
      %v762 = vpop.permute.xlu0 %761
      %763 = vrot.lane.b32.xlu0 %v553, 8
      %v764 = vpop.permute.xlu0 %763
      %765 = vrot.lane.b32.xlu0 %v554, 8
      %v766 = vpop.permute.xlu0 %765
      %767 = vrot.lane.b32.xlu0 %v555, 8
      %v768 = vpop.permute.xlu0 %767
      %769 = vrot.lane.b32.xlu0 %v556, 8
      %v770 = vpop.permute.xlu0 %769
      %771 = vrot.lane.b32.xlu0 %v557, 8
      %v772 = vpop.permute.xlu0 %771
      %773 = vrot.lane.b32.xlu0 %v558, 8
      %v774 = vpop.permute.xlu0 %773
      %775 = vrot.lane.b32.xlu0 %v559, 8
      %v776 = vpop.permute.xlu0 %775
      %777 = vrot.lane.b32.xlu0 %v560, 8
      %v778 = vpop.permute.xlu0 %777
      %779 = vrot.lane.b32.xlu0 %v561, 8
      %v780 = vpop.permute.xlu0 %779
      %781 = vrot.lane.b32.xlu0 %v562, 8
      %v782 = vpop.permute.xlu0 %781
      %783 = vrot.lane.b32.xlu0 %v563, 8
      %v784 = vpop.permute.xlu0 %783
      %785 = vrot.lane.b32.xlu0 %v564, 8
      %v786 = vpop.permute.xlu0 %785
      %787 = vrot.lane.b32.xlu0 %v565, 8
      %v788 = vpop.permute.xlu0 %787
      %789 = vrot.lane.b32.xlu0 %v566, 8
      %v790 = vpop.permute.xlu0 %789
      %791 = vrot.lane.b32.xlu0 %v567, 8
      %v792 = vpop.permute.xlu0 %791
      %793 = vrot.lane.b32.xlu0 %v568, 8
      %v794 = vpop.permute.xlu0 %793
      %795 = vrot.lane.b32.xlu0 %v569, 8
      %v796 = vpop.permute.xlu0 %795
      %797 = vrot.lane.b32.xlu0 %v570, 8
      %v798 = vpop.permute.xlu0 %797
      %799 = vrot.lane.b32.xlu0 %v571, 8
      %v800 = vpop.permute.xlu0 %799
      %801 = vrot.lane.b32.xlu0 %v572, 8
      %v802 = vpop.permute.xlu0 %801
      %803 = vrot.lane.b32.xlu0 %v573, 8
      %v804 = vpop.permute.xlu0 %803
      %805 = vrot.lane.b32.xlu0 %v574, 8
      %v806 = vpop.permute.xlu0 %805
      %807 = vrot.lane.b32.xlu0 %v575, 8
      %v808 = vpop.permute.xlu0 %807
      %809 = vrot.lane.b32.xlu0 %v576, 8
      %v810 = vpop.permute.xlu0 %809
      %vm845 = vcmask 31744
      %v846 = vsel %vm845, %v442, %v611
      %v847 = vsel %vm845, %v443, %v611
      %v848 = vsel %vm845, %v444, %v613
      %v849 = vsel %vm845, %v445, %v615
      %v850 = vsel %vm845, %v446, %v617
      %v851 = vsel %vm845, %v447, %v619
      %v852 = vsel %vm845, %v448, %v621
      %v853 = vsel %vm845, %v449, %v623
      %v854 = vsel %vm845, %v450, %v625
      %v855 = vsel %vm845, %v451, %v627
      %v856 = vsel %vm845, %v452, %v629
      %v857 = vsel %vm845, %v453, %v631
      %v858 = vsel %vm845, %v454, %v633
      %v859 = vsel %vm845, %v455, %v635
      %v860 = vsel %vm845, %v456, %v637
      %v861 = vsel %vm845, %v457, %v639
      %v862 = vsel %vm845, %v458, %v641
      %v863 = vsel %vm845, %v459, %v643
      %v864 = vsel %vm845, %v460, %v645
      %v865 = vsel %vm845, %v461, %v647
      %v866 = vsel %vm845, %v462, %v649
      %v867 = vsel %vm845, %v463, %v651
      %v868 = vsel %vm845, %v464, %v653
      %v869 = vsel %vm845, %v465, %v655
      %v870 = vsel %vm845, %v466, %v657
      %v871 = vsel %vm845, %v467, %v659
      %v872 = vsel %vm845, %v468, %v661
      %v873 = vsel %vm845, %v469, %v663
      %v874 = vsel %vm845, %v470, %v665
      %v875 = vsel %vm845, %v471, %v667
      %v876 = vsel %vm845, %v472, %v669
      %v877 = vsel %vm845, %v473, %v671
      %v878 = vsel %vm845, %v474, %v673
      %v879 = vsel %vm845, %v475, %v675
      %vm880 = vcmask 64512
      %v881 = vsel %vm880, %v846, %v744
      %v882 = vsel %vm880, %v847, %v746
      %v883 = vsel %vm880, %v848, %v748
      %v884 = vsel %vm880, %v849, %v750
      %v885 = vsel %vm880, %v850, %v752
      %v886 = vsel %vm880, %v851, %v754
      %v887 = vsel %vm880, %v852, %v756
      %v888 = vsel %vm880, %v853, %v758
      %v889 = vsel %vm880, %v854, %v760
      %v890 = vsel %vm880, %v855, %v762
      %v891 = vsel %vm880, %v856, %v764
      %v892 = vsel %vm880, %v857, %v766
      %v893 = vsel %vm880, %v858, %v768
      %v894 = vsel %vm880, %v859, %v770
      %v895 = vsel %vm880, %v860, %v772
      %v896 = vsel %vm880, %v861, %v774
      %v897 = vsel %vm880, %v862, %v776
      %v898 = vsel %vm880, %v863, %v778
      %v899 = vsel %vm880, %v864, %v780
      %v900 = vsel %vm880, %v865, %v782
      %v901 = vsel %vm880, %v866, %v784
      %v902 = vsel %vm880, %v867, %v786
      %v903 = vsel %vm880, %v868, %v788
      %v904 = vsel %vm880, %v869, %v790
      %v905 = vsel %vm880, %v870, %v792
      %v906 = vsel %vm880, %v871, %v794
      %v907 = vsel %vm880, %v872, %v796
      %v908 = vsel %vm880, %v873, %v798
      %v909 = vsel %vm880, %v874, %v800
      %v910 = vsel %vm880, %v875, %v802
      %v911 = vsel %vm880, %v876, %v804
      %v912 = vsel %vm880, %v877, %v806
      %v913 = vsel %vm880, %v878, %v808
      %v914 = vsel %vm880, %v879, %v810
      %v915 = vld [vmem:[%s3] sm:$0xff]
      %v916 = vld [vmem:[%s3 + $0x8] sm:$0xf]
      %s917 = scalar_lea.vmem %s3, 16
      %v918 = vld [vmem:[%s917] sm:$0xff]
      %v919 = vld [vmem:[%s917 + $0x8] sm:$0xf]
      %vm920 = vcmask 97280
      %v922 = vsel %vm920, %v883, 0
      %v925 = vsel %vm920, %v884, 0
      %v928 = vsel %vm920, %v885, 0
      %v931 = vsel %vm920, %v886, 0
      %v934 = vsel %vm920, %v887, 0
      %v937 = vsel %vm920, %v888, 0
      %v940 = vsel %vm920, %v889, 0
      %v943 = vsel %vm920, %v890, 0
      %v946 = vsel %vm920, %v891, 0
      %v949 = vsel %vm920, %v892, 0
      %v952 = vsel %vm920, %v893, 0
      %v955 = vsel %vm920, %v894, 0
      %v958 = vsel %vm920, %v895, 0
      %v961 = vsel %vm920, %v896, 0
      %v964 = vsel %vm920, %v897, 0
      %v967 = vsel %vm920, %v898, 0
      %v970 = vsel %vm920, %v899, 0
      %v973 = vsel %vm920, %v900, 0
      %v976 = vsel %vm920, %v901, 0
      %v979 = vsel %vm920, %v902, 0
      %v982 = vsel %vm920, %v903, 0
      %v985 = vsel %vm920, %v904, 0
      %v988 = vsel %vm920, %v905, 0
      %v991 = vsel %vm920, %v906, 0
      %v994 = vsel %vm920, %v907, 0
      %v997 = vsel %vm920, %v908, 0
      %v1000 = vsel %vm920, %v909, 0
      %v1003 = vsel %vm920, %v910, 0
      %v1006 = vsel %vm920, %v911, 0
      %v1009 = vsel %vm920, %v912, 0
      %v1012 = vsel %vm920, %v913, 0
      %v1015 = vsel %vm920, %v914, 0
      %vm1017 = vcmask 1043456
      %v1019 = vsel %vm1017, %v919, 0
      %1021 = vmatpush.msra.mxu0 0.0
      %1022 = vmatpush.msra.mxu0 0.0
      %1023 = vmatpush.msra.mxu0 0.0
      %1024 = vmatpush.msra.mxu0 0.0
      %1025 = vmatpush.msra.mxu0 0.0
      %1026 = vmatpush.msra.mxu0 0.0
      %1027 = vmatpush.msra.mxu0 0.0
      %1028 = vmatpush.msra.mxu0 0.0
      %1029 = vmatpush.msra.mxu0 0.0
      %1030 = vmatpush.msra.mxu0 0.0
      %1031 = vmatpush.msra.mxu0 0.0
      %1032 = vmatpush.msra.mxu0 0.0
      %1033 = vmatpush.msra.mxu0 0.0
      %1034 = vmatpush.msra.mxu0 0.0
      %1035 = vmatpush.msra.mxu0 %v1019
      %1036 = vmatpush.msra.mxu0 %v918
      %1037 = vmatmul.f32.gmra.mxu0 %v922
      %v1038 = vpop.f32.mrf.mxu0
      %v1039 = vadd.f32 0.0, %v1038
      %1040 = vmatmul.f32.gmra.mxu0 %v925
      %v1041 = vpop.f32.mrf.mxu0
      %v1042 = vadd.f32 0.0, %v1041
      %1043 = vmatmul.f32.gmra.mxu0 %v928
      %v1044 = vpop.f32.mrf.mxu0
      %v1045 = vadd.f32 0.0, %v1044
      %1046 = vmatmul.f32.gmra.mxu0 %v931
      %v1047 = vpop.f32.mrf.mxu0
      %v1048 = vadd.f32 0.0, %v1047
      %1049 = vmatmul.f32.gmra.mxu0 %v934
      %v1050 = vpop.f32.mrf.mxu0
      %v1051 = vadd.f32 0.0, %v1050
      %1052 = vmatmul.f32.gmra.mxu0 %v937
      %v1053 = vpop.f32.mrf.mxu0
      %v1054 = vadd.f32 0.0, %v1053
      %1055 = vmatmul.f32.gmra.mxu0 %v940
      %v1056 = vpop.f32.mrf.mxu0
      %v1057 = vadd.f32 0.0, %v1056
      %1058 = vmatmul.f32.gmra.mxu0 %v943
      %v1059 = vpop.f32.mrf.mxu0
      %v1060 = vadd.f32 0.0, %v1059
      %1061 = vmatmul.f32.gmra.mxu0 %v946
      %v1062 = vpop.f32.mrf.mxu0
      %v1063 = vadd.f32 0.0, %v1062
      %1064 = vmatmul.f32.gmra.mxu0 %v949
      %v1065 = vpop.f32.mrf.mxu0
      %v1066 = vadd.f32 0.0, %v1065
      %1067 = vmatmul.f32.gmra.mxu0 %v952
      %v1068 = vpop.f32.mrf.mxu0
      %v1069 = vadd.f32 0.0, %v1068
      %1070 = vmatmul.f32.gmra.mxu0 %v955
      %v1071 = vpop.f32.mrf.mxu0
      %v1072 = vadd.f32 0.0, %v1071
      %1073 = vmatmul.f32.gmra.mxu0 %v958
      %v1074 = vpop.f32.mrf.mxu0
      %v1075 = vadd.f32 0.0, %v1074
      %1076 = vmatmul.f32.gmra.mxu0 %v961
      %v1077 = vpop.f32.mrf.mxu0
      %v1078 = vadd.f32 0.0, %v1077
      %1079 = vmatmul.f32.gmra.mxu0 %v964
      %v1080 = vpop.f32.mrf.mxu0
      %v1081 = vadd.f32 0.0, %v1080
      %1082 = vmatmul.f32.gmra.mxu0 %v967
      %v1083 = vpop.f32.mrf.mxu0
      %v1084 = vadd.f32 0.0, %v1083
      %1085 = vmatmul.f32.gmra.mxu0 %v970
      %v1086 = vpop.f32.mrf.mxu0
      %v1087 = vadd.f32 0.0, %v1086
      %1088 = vmatmul.f32.gmra.mxu0 %v973
      %v1089 = vpop.f32.mrf.mxu0
      %v1090 = vadd.f32 0.0, %v1089
      %1091 = vmatmul.f32.gmra.mxu0 %v976
      %v1092 = vpop.f32.mrf.mxu0
      %v1093 = vadd.f32 0.0, %v1092
      %1094 = vmatmul.f32.gmra.mxu0 %v979
      %v1095 = vpop.f32.mrf.mxu0
      %v1096 = vadd.f32 0.0, %v1095
      %1097 = vmatmul.f32.gmra.mxu0 %v982
      %v1098 = vpop.f32.mrf.mxu0
      %v1099 = vadd.f32 0.0, %v1098
      %1100 = vmatmul.f32.gmra.mxu0 %v985
      %v1101 = vpop.f32.mrf.mxu0
      %v1102 = vadd.f32 0.0, %v1101
      %1103 = vmatmul.f32.gmra.mxu0 %v988
      %v1104 = vpop.f32.mrf.mxu0
      %v1105 = vadd.f32 0.0, %v1104
      %1106 = vmatmul.f32.gmra.mxu0 %v991
      %v1107 = vpop.f32.mrf.mxu0
      %v1108 = vadd.f32 0.0, %v1107
      %1109 = vmatmul.f32.gmra.mxu0 %v994
      %v1110 = vpop.f32.mrf.mxu0
      %v1111 = vadd.f32 0.0, %v1110
      %1112 = vmatmul.f32.gmra.mxu0 %v997
      %v1113 = vpop.f32.mrf.mxu0
      %v1114 = vadd.f32 0.0, %v1113
      %1115 = vmatmul.f32.gmra.mxu0 %v1000
      %v1116 = vpop.f32.mrf.mxu0
      %v1117 = vadd.f32 0.0, %v1116
      %1118 = vmatmul.f32.gmra.mxu0 %v1003
      %v1119 = vpop.f32.mrf.mxu0
      %v1120 = vadd.f32 0.0, %v1119
      %1121 = vmatmul.f32.gmra.mxu0 %v1006
      %v1122 = vpop.f32.mrf.mxu0
      %v1123 = vadd.f32 0.0, %v1122
      %1124 = vmatmul.f32.gmra.mxu0 %v1009
      %v1125 = vpop.f32.mrf.mxu0
      %v1126 = vadd.f32 0.0, %v1125
      %1127 = vmatmul.f32.gmra.mxu0 %v1012
      %v1128 = vpop.f32.mrf.mxu0
      %v1129 = vadd.f32 0.0, %v1128
      %1130 = vmatmul.f32.gmra.mxu0 %v1015
      %v1131 = vpop.f32.mrf.mxu0
      %v1132 = vadd.f32 0.0, %v1131
      %1133 = vdwg.mxu0
      %v1135 = vsel %vm920, %v881, 0
      %v1138 = vsel %vm920, %v882, 0
      %v1141 = vsel %vm1017, %v916, 0
      %1143 = vmatpush.msra.mxu0 0.0
      %1144 = vmatpush.msra.mxu0 0.0
      %1145 = vmatpush.msra.mxu0 0.0
      %1146 = vmatpush.msra.mxu0 0.0
      %1147 = vmatpush.msra.mxu0 0.0
      %1148 = vmatpush.msra.mxu0 0.0
      %1149 = vmatpush.msra.mxu0 0.0
      %1150 = vmatpush.msra.mxu0 0.0
      %1151 = vmatpush.msra.mxu0 0.0
      %1152 = vmatpush.msra.mxu0 0.0
      %1153 = vmatpush.msra.mxu0 0.0
      %1154 = vmatpush.msra.mxu0 0.0
      %1155 = vmatpush.msra.mxu0 0.0
      %1156 = vmatpush.msra.mxu0 0.0
      %1157 = vmatpush.msra.mxu0 %v1141
      %1158 = vmatpush.msra.mxu0 %v915
      %1159 = vmatmul.f32.gmra.mxu0 %v1135
      %v1160 = vpop.f32.mrf.mxu0
      %v1161 = vadd.f32 %v1039, %v1160
      %1162 = vmatmul.f32.gmra.mxu0 %v1138
      %v1163 = vpop.f32.mrf.mxu0
      %v1164 = vadd.f32 %v1042, %v1163
      %1165 = vmatmul.f32.gmra.mxu0 %v922
      %v1166 = vpop.f32.mrf.mxu0
      %v1167 = vadd.f32 %v1045, %v1166
      %1168 = vmatmul.f32.gmra.mxu0 %v925
      %v1169 = vpop.f32.mrf.mxu0
      %v1170 = vadd.f32 %v1048, %v1169
      %1171 = vmatmul.f32.gmra.mxu0 %v928
      %v1172 = vpop.f32.mrf.mxu0
      %v1173 = vadd.f32 %v1051, %v1172
      %1174 = vmatmul.f32.gmra.mxu0 %v931
      %v1175 = vpop.f32.mrf.mxu0
      %v1176 = vadd.f32 %v1054, %v1175
      %1177 = vmatmul.f32.gmra.mxu0 %v934
      %v1178 = vpop.f32.mrf.mxu0
      %v1179 = vadd.f32 %v1057, %v1178
      %1180 = vmatmul.f32.gmra.mxu0 %v937
      %v1181 = vpop.f32.mrf.mxu0
      %v1182 = vadd.f32 %v1060, %v1181
      %1183 = vmatmul.f32.gmra.mxu0 %v940
      %v1184 = vpop.f32.mrf.mxu0
      %v1185 = vadd.f32 %v1063, %v1184
      %1186 = vmatmul.f32.gmra.mxu0 %v943
      %v1187 = vpop.f32.mrf.mxu0
      %v1188 = vadd.f32 %v1066, %v1187
      %1189 = vmatmul.f32.gmra.mxu0 %v946
      %v1190 = vpop.f32.mrf.mxu0
      %v1191 = vadd.f32 %v1069, %v1190
      %1192 = vmatmul.f32.gmra.mxu0 %v949
      %v1193 = vpop.f32.mrf.mxu0
      %v1194 = vadd.f32 %v1072, %v1193
      %1195 = vmatmul.f32.gmra.mxu0 %v952
      %v1196 = vpop.f32.mrf.mxu0
      %v1197 = vadd.f32 %v1075, %v1196
      %1198 = vmatmul.f32.gmra.mxu0 %v955
      %v1199 = vpop.f32.mrf.mxu0
      %v1200 = vadd.f32 %v1078, %v1199
      %1201 = vmatmul.f32.gmra.mxu0 %v958
      %v1202 = vpop.f32.mrf.mxu0
      %v1203 = vadd.f32 %v1081, %v1202
      %1204 = vmatmul.f32.gmra.mxu0 %v961
      %v1205 = vpop.f32.mrf.mxu0
      %v1206 = vadd.f32 %v1084, %v1205
      %1207 = vmatmul.f32.gmra.mxu0 %v964
      %v1208 = vpop.f32.mrf.mxu0
      %v1209 = vadd.f32 %v1087, %v1208
      %1210 = vmatmul.f32.gmra.mxu0 %v967
      %v1211 = vpop.f32.mrf.mxu0
      %v1212 = vadd.f32 %v1090, %v1211
      %1213 = vmatmul.f32.gmra.mxu0 %v970
      %v1214 = vpop.f32.mrf.mxu0
      %v1215 = vadd.f32 %v1093, %v1214
      %1216 = vmatmul.f32.gmra.mxu0 %v973
      %v1217 = vpop.f32.mrf.mxu0
      %v1218 = vadd.f32 %v1096, %v1217
      %1219 = vmatmul.f32.gmra.mxu0 %v976
      %v1220 = vpop.f32.mrf.mxu0
      %v1221 = vadd.f32 %v1099, %v1220
      %1222 = vmatmul.f32.gmra.mxu0 %v979
      %v1223 = vpop.f32.mrf.mxu0
      %v1224 = vadd.f32 %v1102, %v1223
      %1225 = vmatmul.f32.gmra.mxu0 %v982
      %v1226 = vpop.f32.mrf.mxu0
      %v1227 = vadd.f32 %v1105, %v1226
      %1228 = vmatmul.f32.gmra.mxu0 %v985
      %v1229 = vpop.f32.mrf.mxu0
      %v1230 = vadd.f32 %v1108, %v1229
      %1231 = vmatmul.f32.gmra.mxu0 %v988
      %v1232 = vpop.f32.mrf.mxu0
      %v1233 = vadd.f32 %v1111, %v1232
      %1234 = vmatmul.f32.gmra.mxu0 %v991
      %v1235 = vpop.f32.mrf.mxu0
      %v1236 = vadd.f32 %v1114, %v1235
      %1237 = vmatmul.f32.gmra.mxu0 %v994
      %v1238 = vpop.f32.mrf.mxu0
      %v1239 = vadd.f32 %v1117, %v1238
      %1240 = vmatmul.f32.gmra.mxu0 %v997
      %v1241 = vpop.f32.mrf.mxu0
      %v1242 = vadd.f32 %v1120, %v1241
      %1243 = vmatmul.f32.gmra.mxu0 %v1000
      %v1244 = vpop.f32.mrf.mxu0
      %v1245 = vadd.f32 %v1123, %v1244
      %1246 = vmatmul.f32.gmra.mxu0 %v1003
      %v1247 = vpop.f32.mrf.mxu0
      %v1248 = vadd.f32 %v1126, %v1247
      %1249 = vmatmul.f32.gmra.mxu0 %v1006
      %v1250 = vpop.f32.mrf.mxu0
      %v1251 = vadd.f32 %v1129, %v1250
      %1252 = vmatmul.f32.gmra.mxu0 %v1009
      %v1253 = vpop.f32.mrf.mxu0
      %v1254 = vadd.f32 %v1132, %v1253
      %1255 = vdwg.mxu0
      %s1256 = scalar_lea.vmem %s3, 32
      %v1257 = vld [vmem:[%s1256] sm:$0xff]
      %v1258 = vld [vmem:[%s1256 + $0x8] sm:$0xf]
      %v1260 = vsel %vm1017, %v1258, 0
      %1262 = vmatpush.msra.mxu0 0.0
      %1263 = vmatpush.msra.mxu0 0.0
      %1264 = vmatpush.msra.mxu0 0.0
      %1265 = vmatpush.msra.mxu0 0.0
      %1266 = vmatpush.msra.mxu0 0.0
      %1267 = vmatpush.msra.mxu0 0.0
      %1268 = vmatpush.msra.mxu0 0.0
      %1269 = vmatpush.msra.mxu0 0.0
      %1270 = vmatpush.msra.mxu0 0.0
      %1271 = vmatpush.msra.mxu0 0.0
      %1272 = vmatpush.msra.mxu0 0.0
      %1273 = vmatpush.msra.mxu0 0.0
      %1274 = vmatpush.msra.mxu0 0.0
      %1275 = vmatpush.msra.mxu0 0.0
      %1276 = vmatpush.msra.mxu0 %v1260
      %1277 = vmatpush.msra.mxu0 %v1257
      %1278 = vmatmul.f32.gmra.mxu0 %v928
      %v1279 = vpop.f32.mrf.mxu0
      %v1280 = vadd.f32 0.0, %v1279
      %1281 = vmatmul.f32.gmra.mxu0 %v931
      %v1282 = vpop.f32.mrf.mxu0
      %v1283 = vadd.f32 0.0, %v1282
      %1284 = vmatmul.f32.gmra.mxu0 %v934
      %v1285 = vpop.f32.mrf.mxu0
      %v1286 = vadd.f32 0.0, %v1285
      %1287 = vmatmul.f32.gmra.mxu0 %v937
      %v1288 = vpop.f32.mrf.mxu0
      %v1289 = vadd.f32 0.0, %v1288
      %1290 = vmatmul.f32.gmra.mxu0 %v940
      %v1291 = vpop.f32.mrf.mxu0
      %v1292 = vadd.f32 0.0, %v1291
      %1293 = vmatmul.f32.gmra.mxu0 %v943
      %v1294 = vpop.f32.mrf.mxu0
      %v1295 = vadd.f32 0.0, %v1294
      %1296 = vmatmul.f32.gmra.mxu0 %v946
      %v1297 = vpop.f32.mrf.mxu0
      %v1298 = vadd.f32 0.0, %v1297
      %1299 = vmatmul.f32.gmra.mxu0 %v949
      %v1300 = vpop.f32.mrf.mxu0
      %v1301 = vadd.f32 0.0, %v1300
      %1302 = vmatmul.f32.gmra.mxu0 %v952
      %v1303 = vpop.f32.mrf.mxu0
      %v1304 = vadd.f32 0.0, %v1303
      %1305 = vmatmul.f32.gmra.mxu0 %v955
      %v1306 = vpop.f32.mrf.mxu0
      %v1307 = vadd.f32 0.0, %v1306
      %1308 = vmatmul.f32.gmra.mxu0 %v958
      %v1309 = vpop.f32.mrf.mxu0
      %v1310 = vadd.f32 0.0, %v1309
      %1311 = vmatmul.f32.gmra.mxu0 %v961
      %v1312 = vpop.f32.mrf.mxu0
      %v1313 = vadd.f32 0.0, %v1312
      %1314 = vmatmul.f32.gmra.mxu0 %v964
      %v1315 = vpop.f32.mrf.mxu0
      %v1316 = vadd.f32 0.0, %v1315
      %1317 = vmatmul.f32.gmra.mxu0 %v967
      %v1318 = vpop.f32.mrf.mxu0
      %v1319 = vadd.f32 0.0, %v1318
      %1320 = vmatmul.f32.gmra.mxu0 %v970
      %v1321 = vpop.f32.mrf.mxu0
      %v1322 = vadd.f32 0.0, %v1321
      %1323 = vmatmul.f32.gmra.mxu0 %v973
      %v1324 = vpop.f32.mrf.mxu0
      %v1325 = vadd.f32 0.0, %v1324
      %1326 = vmatmul.f32.gmra.mxu0 %v976
      %v1327 = vpop.f32.mrf.mxu0
      %v1328 = vadd.f32 0.0, %v1327
      %1329 = vmatmul.f32.gmra.mxu0 %v979
      %v1330 = vpop.f32.mrf.mxu0
      %v1331 = vadd.f32 0.0, %v1330
      %1332 = vmatmul.f32.gmra.mxu0 %v982
      %v1333 = vpop.f32.mrf.mxu0
      %v1334 = vadd.f32 0.0, %v1333
      %1335 = vmatmul.f32.gmra.mxu0 %v985
      %v1336 = vpop.f32.mrf.mxu0
      %v1337 = vadd.f32 0.0, %v1336
      %1338 = vmatmul.f32.gmra.mxu0 %v988
      %v1339 = vpop.f32.mrf.mxu0
      %v1340 = vadd.f32 0.0, %v1339
      %1341 = vmatmul.f32.gmra.mxu0 %v991
      %v1342 = vpop.f32.mrf.mxu0
      %v1343 = vadd.f32 0.0, %v1342
      %1344 = vmatmul.f32.gmra.mxu0 %v994
      %v1345 = vpop.f32.mrf.mxu0
      %v1346 = vadd.f32 0.0, %v1345
      %1347 = vmatmul.f32.gmra.mxu0 %v997
      %v1348 = vpop.f32.mrf.mxu0
      %v1349 = vadd.f32 0.0, %v1348
      %1350 = vmatmul.f32.gmra.mxu0 %v1000
      %v1351 = vpop.f32.mrf.mxu0
      %v1352 = vadd.f32 0.0, %v1351
      %1353 = vmatmul.f32.gmra.mxu0 %v1003
      %v1354 = vpop.f32.mrf.mxu0
      %v1355 = vadd.f32 0.0, %v1354
      %1356 = vmatmul.f32.gmra.mxu0 %v1006
      %v1357 = vpop.f32.mrf.mxu0
      %v1358 = vadd.f32 0.0, %v1357
      %1359 = vmatmul.f32.gmra.mxu0 %v1009
      %v1360 = vpop.f32.mrf.mxu0
      %v1361 = vadd.f32 0.0, %v1360
      %1362 = vmatmul.f32.gmra.mxu0 %v1012
      %v1363 = vpop.f32.mrf.mxu0
      %v1364 = vadd.f32 0.0, %v1363
      %1365 = vmatmul.f32.gmra.mxu0 %v1015
      %v1366 = vpop.f32.mrf.mxu0
      %v1367 = vadd.f32 0.0, %v1366
      %1368 = vmatmul.f32.gmra.mxu0 %v1135
      %v1369 = vpop.f32.mrf.mxu0
      %v1370 = vadd.f32 0.0, %v1369
      %1371 = vmatmul.f32.gmra.mxu0 %v1138
      %v1372 = vpop.f32.mrf.mxu0
      %v1373 = vadd.f32 0.0, %v1372
      %1374 = vdwg.mxu0
      %v1375 = vadd.f32 %v1161, %v1280
      %v1376 = vadd.f32 %v1164, %v1283
      %v1377 = vadd.f32 %v1167, %v1286
      %v1378 = vadd.f32 %v1170, %v1289
      %v1379 = vadd.f32 %v1173, %v1292
      %v1380 = vadd.f32 %v1176, %v1295
      %v1381 = vadd.f32 %v1179, %v1298
      %v1382 = vadd.f32 %v1182, %v1301
      %v1383 = vadd.f32 %v1185, %v1304
      %v1384 = vadd.f32 %v1188, %v1307
      %v1385 = vadd.f32 %v1191, %v1310
      %v1386 = vadd.f32 %v1194, %v1313
      %v1387 = vadd.f32 %v1197, %v1316
      %v1388 = vadd.f32 %v1200, %v1319
      %v1389 = vadd.f32 %v1203, %v1322
      %v1390 = vadd.f32 %v1206, %v1325
      %v1391 = vadd.f32 %v1209, %v1328
      %v1392 = vadd.f32 %v1212, %v1331
      %v1393 = vadd.f32 %v1215, %v1334
      %v1394 = vadd.f32 %v1218, %v1337
      %v1395 = vadd.f32 %v1221, %v1340
      %v1396 = vadd.f32 %v1224, %v1343
      %v1397 = vadd.f32 %v1227, %v1346
      %v1398 = vadd.f32 %v1230, %v1349
      %v1399 = vadd.f32 %v1233, %v1352
      %v1400 = vadd.f32 %v1236, %v1355
      %v1401 = vadd.f32 %v1239, %v1358
      %v1402 = vadd.f32 %v1242, %v1361
      %v1403 = vadd.f32 %v1245, %v1364
      %v1404 = vadd.f32 %v1248, %v1367
      %v1405 = vadd.f32 %v1251, %v1370
      %v1406 = vadd.f32 %v1254, %v1373
      %1407 = vst.msk [vmem:[%s231] sm:$0xff] %vm845, %v1375
      %1408 = vst.msk [vmem:[%s231 + $0x8] sm:$0xff] %vm845, %v1376
      %1409 = vst.msk [vmem:[%s231 + $0x10] sm:$0xff] %vm845, %v1377
      %1410 = vst.msk [vmem:[%s231 + $0x18] sm:$0xff] %vm845, %v1378
      %1411 = vst.msk [vmem:[%s231 + $0x20] sm:$0xff] %vm845, %v1379
      %1412 = vst.msk [vmem:[%s231 + $0x28] sm:$0xff] %vm845, %v1380
      %1413 = vst.msk [vmem:[%s231 + $0x30] sm:$0xff] %vm845, %v1381
      %1414 = vst.msk [vmem:[%s231 + $0x38] sm:$0xff] %vm845, %v1382
      %1415 = vst.msk [vmem:[%s231 + $0x40] sm:$0xff] %vm845, %v1383
      %1416 = vst.msk [vmem:[%s231 + $0x48] sm:$0xff] %vm845, %v1384
      %1417 = vst.msk [vmem:[%s231 + $0x50] sm:$0xff] %vm845, %v1385
      %1418 = vst.msk [vmem:[%s231 + $0x58] sm:$0xff] %vm845, %v1386
      %1419 = vst.msk [vmem:[%s231 + $0x60] sm:$0xff] %vm845, %v1387
      %1420 = vst.msk [vmem:[%s231 + $0x68] sm:$0xff] %vm845, %v1388
      %1421 = vst.msk [vmem:[%s231 + $0x70] sm:$0xff] %vm845, %v1389
      %1422 = vst.msk [vmem:[%s231 + $0x78] sm:$0xff] %vm845, %v1390
      %1423 = vst.msk [vmem:[%s231 + $0x80] sm:$0xff] %vm845, %v1391
      %1424 = vst.msk [vmem:[%s231 + $0x88] sm:$0xff] %vm845, %v1392
      %1425 = vst.msk [vmem:[%s231 + $0x90] sm:$0xff] %vm845, %v1393
      %1426 = vst.msk [vmem:[%s231 + $0x98] sm:$0xff] %vm845, %v1394
      %1427 = vst.msk [vmem:[%s231 + $0xa0] sm:$0xff] %vm845, %v1395
      %1428 = vst.msk [vmem:[%s231 + $0xa8] sm:$0xff] %vm845, %v1396
      %1429 = vst.msk [vmem:[%s231 + $0xb0] sm:$0xff] %vm845, %v1397
      %1430 = vst.msk [vmem:[%s231 + $0xb8] sm:$0xff] %vm845, %v1398
      %1431 = vst.msk [vmem:[%s231 + $0xc0] sm:$0xff] %vm845, %v1399
      %1432 = vst.msk [vmem:[%s231 + $0xc8] sm:$0xff] %vm845, %v1400
      %1433 = vst.msk [vmem:[%s231 + $0xd0] sm:$0xff] %vm845, %v1401
      %1434 = vst.msk [vmem:[%s231 + $0xd8] sm:$0xff] %vm845, %v1402
      %1435 = vst.msk [vmem:[%s231 + $0xe0] sm:$0xff] %vm845, %v1403
      %1436 = vst.msk [vmem:[%s231 + $0xe8] sm:$0xff] %vm845, %v1404
      %1437 = vst.msk [vmem:[%s231 + $0xf0] sm:$0xff] %vm845, %v1405
      %1438 = vst.msk [vmem:[%s231 + $0xf8] sm:$0xff] %vm845, %v1406
      %v1439 = vsel %vm845, %v1375, 0.0
      %v1440 = vsel %vm845, %v1376, 0.0
      %v1441 = vadd.f32 %v1439, %v1440
      %v1442 = vsel %vm845, %v1377, 0.0
      %v1443 = vadd.f32 %v1441, %v1442
      %v1444 = vsel %vm845, %v1378, 0.0
      %v1445 = vadd.f32 %v1443, %v1444
      %v1446 = vsel %vm845, %v1379, 0.0
      %v1447 = vadd.f32 %v1445, %v1446
      %v1448 = vsel %vm845, %v1380, 0.0
      %v1449 = vadd.f32 %v1447, %v1448
      %v1450 = vsel %vm845, %v1381, 0.0
      %v1451 = vadd.f32 %v1449, %v1450
      %v1452 = vsel %vm845, %v1382, 0.0
      %v1453 = vadd.f32 %v1451, %v1452
      %v1454 = vsel %vm845, %v1383, 0.0
      %v1455 = vadd.f32 %v1453, %v1454
      %v1456 = vsel %vm845, %v1384, 0.0
      %v1457 = vadd.f32 %v1455, %v1456
      %v1458 = vsel %vm845, %v1385, 0.0
      %v1459 = vadd.f32 %v1457, %v1458
      %v1460 = vsel %vm845, %v1386, 0.0
      %v1461 = vadd.f32 %v1459, %v1460
      %v1462 = vsel %vm845, %v1387, 0.0
      %v1463 = vadd.f32 %v1461, %v1462
      %v1464 = vsel %vm845, %v1388, 0.0
      %v1465 = vadd.f32 %v1463, %v1464
      %v1466 = vsel %vm845, %v1389, 0.0
      %v1467 = vadd.f32 %v1465, %v1466
      %v1468 = vsel %vm845, %v1390, 0.0
      %v1469 = vadd.f32 %v1467, %v1468
      %v1470 = vsel %vm845, %v1391, 0.0
      %v1471 = vadd.f32 %v1469, %v1470
      %v1472 = vsel %vm845, %v1392, 0.0
      %v1473 = vadd.f32 %v1471, %v1472
      %v1474 = vsel %vm845, %v1393, 0.0
      %v1475 = vadd.f32 %v1473, %v1474
      %v1476 = vsel %vm845, %v1394, 0.0
      %v1477 = vadd.f32 %v1475, %v1476
      %v1478 = vsel %vm845, %v1395, 0.0
      %v1479 = vadd.f32 %v1477, %v1478
      %v1480 = vsel %vm845, %v1396, 0.0
      %v1481 = vadd.f32 %v1479, %v1480
      %v1482 = vsel %vm845, %v1397, 0.0
      %v1483 = vadd.f32 %v1481, %v1482
      %v1484 = vsel %vm845, %v1398, 0.0
      %v1485 = vadd.f32 %v1483, %v1484
      %v1486 = vsel %vm845, %v1399, 0.0
      %v1487 = vadd.f32 %v1485, %v1486
      %v1488 = vsel %vm845, %v1400, 0.0
      %v1489 = vadd.f32 %v1487, %v1488
      %v1490 = vsel %vm845, %v1401, 0.0
      %v1491 = vadd.f32 %v1489, %v1490
      %v1492 = vsel %vm845, %v1402, 0.0
      %v1493 = vadd.f32 %v1491, %v1492
      %v1494 = vsel %vm845, %v1403, 0.0
      %v1495 = vadd.f32 %v1493, %v1494
      %v1496 = vsel %vm845, %v1404, 0.0
      %v1497 = vadd.f32 %v1495, %v1496
      %v1498 = vsel %vm845, %v1405, 0.0
      %v1499 = vadd.f32 %v1497, %v1498
      %v1500 = vsel %vm845, %v1406, 0.0
      %v1501 = vadd.f32 %v1499, %v1500
      %v1502 = vrot.slane %v1501, 4
      %v1503 = vadd.f32 %v1501, %v1502
      %v1504 = vrot.slane %v1503, 2
      %v1505 = vadd.f32 %v1503, %v1504
      %v1506 = vrot.slane %v1505, 1
      %v1507 = vadd.f32 %v1505, %v1506
      %v1508 = vmul.f32 %v1375, %v1375
      %v1509 = vmul.f32 %v1376, %v1376
      %v1510 = vmul.f32 %v1377, %v1377
      %v1511 = vmul.f32 %v1378, %v1378
      %v1512 = vmul.f32 %v1379, %v1379
      %v1513 = vmul.f32 %v1380, %v1380
      %v1514 = vmul.f32 %v1381, %v1381
      %v1515 = vmul.f32 %v1382, %v1382
      %v1516 = vmul.f32 %v1383, %v1383
      %v1517 = vmul.f32 %v1384, %v1384
      %v1518 = vmul.f32 %v1385, %v1385
      %v1519 = vmul.f32 %v1386, %v1386
      %v1520 = vmul.f32 %v1387, %v1387
      %v1521 = vmul.f32 %v1388, %v1388
      %v1522 = vmul.f32 %v1389, %v1389
      %v1523 = vmul.f32 %v1390, %v1390
      %v1524 = vmul.f32 %v1391, %v1391
      %v1525 = vmul.f32 %v1392, %v1392
      %v1526 = vmul.f32 %v1393, %v1393
      %v1527 = vmul.f32 %v1394, %v1394
      %v1528 = vmul.f32 %v1395, %v1395
      %v1529 = vmul.f32 %v1396, %v1396
      %v1530 = vmul.f32 %v1397, %v1397
      %v1531 = vmul.f32 %v1398, %v1398
      %v1532 = vmul.f32 %v1399, %v1399
      %v1533 = vmul.f32 %v1400, %v1400
      %v1534 = vmul.f32 %v1401, %v1401
      %v1535 = vmul.f32 %v1402, %v1402
      %v1536 = vmul.f32 %v1403, %v1403
      %v1537 = vmul.f32 %v1404, %v1404
      %v1538 = vmul.f32 %v1405, %v1405
      %v1539 = vmul.f32 %v1406, %v1406
      %v1540 = vsel %vm845, %v1508, 0.0
      %v1541 = vsel %vm845, %v1509, 0.0
      %v1542 = vadd.f32 %v1540, %v1541
      %v1543 = vsel %vm845, %v1510, 0.0
      %v1544 = vadd.f32 %v1542, %v1543
      %v1545 = vsel %vm845, %v1511, 0.0
      %v1546 = vadd.f32 %v1544, %v1545
      %v1547 = vsel %vm845, %v1512, 0.0
      %v1548 = vadd.f32 %v1546, %v1547
      %v1549 = vsel %vm845, %v1513, 0.0
      %v1550 = vadd.f32 %v1548, %v1549
      %v1551 = vsel %vm845, %v1514, 0.0
      %v1552 = vadd.f32 %v1550, %v1551
      %v1553 = vsel %vm845, %v1515, 0.0
      %v1554 = vadd.f32 %v1552, %v1553
      %v1555 = vsel %vm845, %v1516, 0.0
      %v1556 = vadd.f32 %v1554, %v1555
      %v1557 = vsel %vm845, %v1517, 0.0
      %v1558 = vadd.f32 %v1556, %v1557
      %v1559 = vsel %vm845, %v1518, 0.0
      %v1560 = vadd.f32 %v1558, %v1559
      %v1561 = vsel %vm845, %v1519, 0.0
      %v1562 = vadd.f32 %v1560, %v1561
      %v1563 = vsel %vm845, %v1520, 0.0
      %v1564 = vadd.f32 %v1562, %v1563
      %v1565 = vsel %vm845, %v1521, 0.0
      %v1566 = vadd.f32 %v1564, %v1565
      %v1567 = vsel %vm845, %v1522, 0.0
      %v1568 = vadd.f32 %v1566, %v1567
      %v1569 = vsel %vm845, %v1523, 0.0
      %v1570 = vadd.f32 %v1568, %v1569
      %v1571 = vsel %vm845, %v1524, 0.0
      %v1572 = vadd.f32 %v1570, %v1571
      %v1573 = vsel %vm845, %v1525, 0.0
      %v1574 = vadd.f32 %v1572, %v1573
      %v1575 = vsel %vm845, %v1526, 0.0
      %v1576 = vadd.f32 %v1574, %v1575
      %v1577 = vsel %vm845, %v1527, 0.0
      %v1578 = vadd.f32 %v1576, %v1577
      %v1579 = vsel %vm845, %v1528, 0.0
      %v1580 = vadd.f32 %v1578, %v1579
      %v1581 = vsel %vm845, %v1529, 0.0
      %v1582 = vadd.f32 %v1580, %v1581
      %v1583 = vsel %vm845, %v1530, 0.0
      %v1584 = vadd.f32 %v1582, %v1583
      %v1585 = vsel %vm845, %v1531, 0.0
      %v1586 = vadd.f32 %v1584, %v1585
      %v1587 = vsel %vm845, %v1532, 0.0
      %v1588 = vadd.f32 %v1586, %v1587
      %v1589 = vsel %vm845, %v1533, 0.0
      %v1590 = vadd.f32 %v1588, %v1589
      %v1591 = vsel %vm845, %v1534, 0.0
      %v1592 = vadd.f32 %v1590, %v1591
      %v1593 = vsel %vm845, %v1535, 0.0
      %v1594 = vadd.f32 %v1592, %v1593
      %v1595 = vsel %vm845, %v1536, 0.0
      %v1596 = vadd.f32 %v1594, %v1595
      %v1597 = vsel %vm845, %v1537, 0.0
      %v1598 = vadd.f32 %v1596, %v1597
      %v1599 = vsel %vm845, %v1538, 0.0
      %v1600 = vadd.f32 %v1598, %v1599
      %v1601 = vsel %vm845, %v1539, 0.0
      %v1602 = vadd.f32 %v1600, %v1601
      %v1603 = vrot.slane %v1602, 4
      %v1604 = vadd.f32 %v1602, %v1603
      %v1605 = vrot.slane %v1604, 2
      %v1606 = vadd.f32 %v1604, %v1605
      %v1607 = vrot.slane %v1606, 1
      %v1608 = vadd.f32 %v1606, %v1607
      %vm1609 = vcmask 1040384
      %v1610 = vsel %vm1609, %v1507, %v1608
      %vm1611 = vcmask 25600
      %1612 = vst.msk [vmem:[%s235] sm:$0x3] %vm1611, %v1610
      %p1613 = scmp.lt.s32.totalorder %s17, 1
      %s1614 = scalar_select %p1613, %s17, 1
      %s1615 = smul.addr %s1614, 32
      %s1616 = smul.addr %s1615, 8
      %s1617 = scalar_lea.vmem %s4, %s1616
      %p1618 = scmp.lt.s32.totalorder %s17, 1
      %s1619 = scalar_select %p1618, %s17, 1
      %s1620 = smul.addr %s1619, 2
      %s1621 = scalar_lea.vmem %s5, %s1620
      // Predicated region
      $region37: #{bottleneck_forward.5} parent=35 // pred_check
        %p1622 = pneg %p124
      $region38: #{bottleneck_forward.5} parent=35 // pred_check_branch
        %1624 = sbr.rel (%p1622) target = $region40
      $region39: #{bottleneck_forward.5} parent=35 // pred_region
        _
      $region40: #{bottleneck_forward.5} parent=35 // pred_fallthru
        _
      // Predicated region
      $region41: #{bottleneck_forward.5} parent=35 // pred_check
        %p1625 = pneg %p150
      $region42: #{bottleneck_forward.5} parent=35 // pred_check_branch
        %1627 = sbr.rel (%p1625) target = $region44
      $region43: #{bottleneck_forward.5} parent=35 // pred_region
        _
      $region44: #{bottleneck_forward.5} parent=35 // pred_fallthru
        _
    $region36: #{bottleneck_forward.5} parent=5 // pred_fallthru
      _
    %p1628 = scmp.le.s32.totalorder 2, %s12
    // Predicated region
    $region45: #{bottleneck_forward.5} parent=5 // pred_check
      %p1629 = pneg %p1628
    $region46: #{bottleneck_forward.5} parent=5 // pred_check_branch
      %1631 = sbr.rel (%p1629) target = $region48
    $region47: #{bottleneck_forward.5} parent=5 // pred_region
      %s1632 = ssub.s32 %s12, 2
      // Predicated region
      $region49: #{bottleneck_forward.5} parent=47 // pred_check
        %p1633 = pneg %p130
      $region50: #{bottleneck_forward.5} parent=47 // pred_check_branch
        %1635 = sbr.rel (%p1633) target = $region52
      $region51: #{bottleneck_forward.5} parent=47 // pred_region
        %p1636 = scmp.lt.s32.totalorder %s18, 1
        %s1637 = scalar_select %p1636, %s18, 1
        %s1638 = smul.addr %s1637, 32
        %s1639 = smul.addr %s1638, 8
        %s1640 = scalar_lea.vmem %s4, %s1639
      $region52: #{bottleneck_forward.5} parent=47 // pred_fallthru
        _
      // Predicated region
      $region53: #{bottleneck_forward.5} parent=47 // pred_check
        %p1641 = pneg %p156
      $region54: #{bottleneck_forward.5} parent=47 // pred_check_branch
        %1643 = sbr.rel (%p1641) target = $region56
      $region55: #{bottleneck_forward.5} parent=47 // pred_region
        %p1644 = scmp.lt.s32.totalorder %s18, 1
        %s1645 = scalar_select %p1644, %s18, 1
        %s1646 = smul.addr %s1645, 2
        %s1647 = scalar_lea.vmem %s5, %s1646
      $region56: #{bottleneck_forward.5} parent=47 // pred_fallthru
        _
    $region48: #{bottleneck_forward.5} parent=5 // pred_fallthru
      _
  $region6: #{bottleneck_forward.5} parent=0 // loop_footer
    %s16 = sadd.s32 1, %s12
  $region7: #{bottleneck_forward.5} parent=0 // loop_footer_branch
    %11 = sbr.rel target = $region3
  $region8: #{bottleneck_forward.5} parent=0 // loop_exit
    _

</llo_original>
